<compile_context>
chip_gen: v5e
topology: v5e:2x2
jax: 0.10.0
libtpu: 0.0.40
codegen_flags: <defaults>
</compile_context>

<pallas_src>
import jax
import jax.numpy as jnp
import numpy as np
from jax.experimental import pallas as pl
from jax.experimental.pallas import tpu as pltpu


TILE_B = 128  # batch tile: fits any generation's VMEM easily, 2+ tiles -> 2 TCs on v7x


def encoder_kernel(x_ref, w1_ref, b1_ref, wh_ref, bh_ref, out_ref):
    """One batch tile of: out = relu(x @ W1 + b1) @ [Wmu|Wlv] + [bmu|blv]."""
    # In-kernel bf16 cast of the activation tile (free VPU work while MXU runs).
    x_bf = x_ref[...].astype(jnp.bfloat16)
    h = jnp.dot(x_bf, w1_ref[...], preferred_element_type=jnp.float32)
    h = jnp.maximum(h + b1_ref[...], 0.0)                 # f32 bias + ReLU on VPU
    # Fused mu/logvar head: single lane-dense (TILE_B, 2Z=128) product.
    out = jnp.dot(h.astype(jnp.bfloat16), wh_ref[...],
                  preferred_element_type=jnp.float32)
    out_ref[...] = out + bh_ref[...]


def make_encoder_params(key, d_in, hidden, z_dim):
    """Init params; fuse + pre-cast weights ONCE (not on the per-call path).

    Head ordering is [mu | logvar] along the last axis of w_heads / b_heads;
    encoder_forward's output slices depend on this ordering.
    """
    assert hidden % 128 == 0, "pad hidden dim to a 128 multiple at init"
    k1, k2, k3, k4, k5, k6 = jax.random.split(key, 6)
    w1 = jax.random.normal(k1, (d_in, hidden), jnp.float32) * 0.05
    b1 = jax.random.normal(k2, (1, hidden), jnp.float32) * 0.05
    wmu = jax.random.normal(k3, (hidden, z_dim), jnp.float32) * 0.05
    bmu = jax.random.normal(k4, (1, z_dim), jnp.float32) * 0.05
    wlv = jax.random.normal(k5, (hidden, z_dim), jnp.float32) * 0.05
    blv = jax.random.normal(k6, (1, z_dim), jnp.float32) * 0.05
    params = dict(
        w1=w1.astype(jnp.bfloat16),
        b1=b1,
        w_heads=jnp.concatenate([wmu, wlv], axis=1).astype(jnp.bfloat16),
        b_heads=jnp.concatenate([bmu, blv], axis=1),
    )
    refp = dict(w1=w1, b1=b1, wmu=wmu, bmu=bmu, wlv=wlv, blv=blv)
    return params, refp


@jax.jit
def encoder_forward(x, w1, b1, w_heads, b_heads):
    B, D = x.shape
    H = w1.shape[1]
    two_z = w_heads.shape[1]
    z = two_z // 2

    # Pad the batch to a TILE_B multiple so every grid step is a full tile.
    pad = (-B) % TILE_B
    if pad:
        x = jnp.pad(x, ((0, pad), (0, 0)))
    bp = B + pad
    nb = bp // TILE_B

    flops = 2 * bp * (D * H + H * two_z)
    bytes_accessed = (bp * D * 4 + w1.size * 2 + b1.size * 4
                      + w_heads.size * 2 + b_heads.size * 4 + bp * two_z * 4)

    out = pl.pallas_call(
        encoder_kernel,
        out_shape=jax.ShapeDtypeStruct((bp, two_z), jnp.float32),
        grid=(nb,),
        in_specs=[
            pl.BlockSpec((TILE_B, D), lambda i: (i, 0)),  # x: batch-tiled
            pl.BlockSpec((D, H), lambda i: (0, 0)),       # weights: VMEM-resident
            pl.BlockSpec((1, H), lambda i: (0, 0)),
            pl.BlockSpec((H, two_z), lambda i: (0, 0)),
            pl.BlockSpec((1, two_z), lambda i: (0, 0)),
        ],
        out_specs=pl.BlockSpec((TILE_B, two_z), lambda i: (i, 0)),
        compiler_params=pltpu.CompilerParams(
            dimension_semantics=("parallel",)),
        cost_estimate=pl.CostEstimate(
            flops=flops, transcendentals=0, bytes_accessed=bytes_accessed),
    )(x, w1, b1, w_heads, b_heads)

    # Under jit these lane-slices fuse into the consumer (no extra copies).
    mu = out[:B, :z]
    logvar = out[:B, z:]
    return mu, logvar


def encoder_ref(x, w1, b1, wmu, bmu, wlv, blv):
    """Pure-JAX reference following the same bf16-compute / f32-acc path."""
    z = wmu.shape[1]
    h = jnp.dot(x.astype(jnp.bfloat16), w1.astype(jnp.bfloat16),
                preferred_element_type=jnp.float32)
    h = jnp.maximum(h + b1, 0.0).astype(jnp.bfloat16)
    wh = jnp.concatenate([wmu, wlv], axis=1).astype(jnp.bfloat16)
    bh = jnp.concatenate([bmu, blv], axis=1)
    out = jnp.dot(h, wh, preferred_element_type=jnp.float32) + bh
    return out[:, :z], out[:, z:]


if __name__ == "__main__":
    # MNIST-flavored VAE encoder shapes: flattened 28x28 input, 512 hidden
    # (multiple of 128 so h stays lane-dense), Z=64 so the fused head is a
    # lane-dense 2Z=128 output.  B=256 fills the 256-row MXU (v6e/v7x) and
    # yields two batch tiles for v7x's two TensorCores.
    B, D, H, Z = 256, 784, 512, 64

    key = jax.random.PRNGKey(0)
    kx, kp = jax.random.split(key)
    x = jax.random.normal(kx, (B, D), dtype=jnp.float32)
    params, refp = make_encoder_params(kp, D, H, Z)

    mu, logvar = encoder_forward(x, params["w1"], params["b1"],
                                 params["w_heads"], params["b_heads"])
    jax.block_until_ready((mu, logvar))

    mu_ref, lv_ref = encoder_ref(x, refp["w1"], refp["b1"], refp["wmu"],
                                 refp["bmu"], refp["wlv"], refp["blv"])
    assert mu.shape == (B, Z) and logvar.shape == (B, Z)
    np.testing.assert_allclose(np.asarray(mu), np.asarray(mu_ref),
                               rtol=1e-2, atol=1e-2)
    np.testing.assert_allclose(np.asarray(logvar), np.asarray(lv_ref),
                               rtol=1e-2, atol=1e-2)

    print("KERNEL_OK")
</pallas_src>

<mosaic_0001>
module attributes {stable_mosaic.version = 11 : i64} {
  func.func @encoder_kernel(%arg0: i32, %arg1: memref<128x784xf32, #tpu.memory_space<vmem>>, %arg2: memref<784x512xbf16, #tpu.memory_space<vmem>>, %arg3: memref<1x512xf32, #tpu.memory_space<vmem>>, %arg4: memref<512x128xbf16, #tpu.memory_space<vmem>>, %arg5: memref<1x128xf32, #tpu.memory_space<vmem>>, %arg6: memref<128x128xf32, #tpu.memory_space<vmem>>) attributes {dimension_semantics = [#tpu.dimension_semantics<parallel>], iteration_bounds = array<i64: 2>, scalar_prefetch = 0 : i64, scratch_operands = 0 : i64, tpu.core_type = #tpu.core_type<tc>, window_params = [{transform_indices = @transform_0, window_bounds = array<i64: 128, 784>}, {pipeline_mode = #tpu.pipeline_mode<synchronous>, transform_indices = @transform_1, window_bounds = array<i64: 784, 512>}, {pipeline_mode = #tpu.pipeline_mode<synchronous>, transform_indices = @transform_2, window_bounds = array<i64: 1, 512>}, {pipeline_mode = #tpu.pipeline_mode<synchronous>, transform_indices = @transform_3, window_bounds = array<i64: 512, 128>}, {pipeline_mode = #tpu.pipeline_mode<synchronous>, transform_indices = @transform_4, window_bounds = array<i64: 1, 128>}, {transform_indices = @transform_5, window_bounds = array<i64: 128, 128>}]} {
    %c0 = arith.constant 0 : index
    %c0_0 = arith.constant 0 : index
    %0 = vector.load %arg1[%c0, %c0_0] : memref<128x784xf32, #tpu.memory_space<vmem>>, vector<128x784xf32>
    %1 = arith.truncf %0 : vector<128x784xf32> to vector<128x784xbf16>
    %c0_1 = arith.constant 0 : index
    %c0_2 = arith.constant 0 : index
    %2 = vector.load %arg2[%c0_1, %c0_2] : memref<784x512xbf16, #tpu.memory_space<vmem>>, vector<784x512xbf16>
    %cst = arith.constant dense<0.000000e+00> : vector<128x512xf32>
    %3 = tpu.matmul %1, %2, %cst {dimension_numbers = #tpu.dot_dimension_numbers<[1], [0], [0], [1], [0, 0, 1, 1], [], []>} : vector<128x784xbf16>, vector<784x512xbf16>, vector<128x512xf32> -> vector<128x512xf32>
    %c0_3 = arith.constant 0 : index
    %c0_4 = arith.constant 0 : index
    %4 = vector.load %arg3[%c0_3, %c0_4] : memref<1x512xf32, #tpu.memory_space<vmem>>, vector<1x512xf32>
    %5 = vector.broadcast %4 : vector<1x512xf32> to vector<128x512xf32>
    %6 = arith.addf %3, %5 : vector<128x512xf32>
    %cst_5 = arith.constant 0.000000e+00 : f32
    %7 = vector.broadcast %cst_5 : f32 to vector<128x512xf32>
    %8 = arith.maximumf %6, %7 : vector<128x512xf32>
    %9 = arith.truncf %8 : vector<128x512xf32> to vector<128x512xbf16>
    %c0_6 = arith.constant 0 : index
    %c0_7 = arith.constant 0 : index
    %10 = vector.load %arg4[%c0_6, %c0_7] : memref<512x128xbf16, #tpu.memory_space<vmem>>, vector<512x128xbf16>
    %cst_8 = arith.constant dense<0.000000e+00> : vector<128x128xf32>
    %11 = tpu.matmul %9, %10, %cst_8 {dimension_numbers = #tpu.dot_dimension_numbers<[1], [0], [0], [1], [0, 0, 1, 1], [], []>} : vector<128x512xbf16>, vector<512x128xbf16>, vector<128x128xf32> -> vector<128x128xf32>
    %c0_9 = arith.constant 0 : index
    %c0_10 = arith.constant 0 : index
    %12 = vector.load %arg5[%c0_9, %c0_10] : memref<1x128xf32, #tpu.memory_space<vmem>>, vector<1x128xf32>
    %13 = vector.broadcast %12 : vector<1x128xf32> to vector<128x128xf32>
    %14 = arith.addf %11, %13 : vector<128x128xf32>
    %c0_11 = arith.constant 0 : index
    %c0_12 = arith.constant 0 : index
    %15 = vector.load %arg6[%c0_11, %c0_12] : memref<128x128xf32, #tpu.memory_space<vmem>>, vector<128x128xf32>
    tpu.vector_store %arg6[%c0_11, %c0_12], %14 {strides = array<i32>} : memref<128x128xf32, #tpu.memory_space<vmem>>, vector<128x128xf32>,
    return
  }
  func.func @transform_0(%arg0: i32) -> (i32, i32) {
    %c0_i32 = arith.constant 0 : i32
    %c0_i32_0 = arith.constant 0 : i32
    return %arg0, %c0_i32 : i32, i32
  }
  func.func @transform_1(%arg0: i32) -> (i32, i32) {
    %c0_i32 = arith.constant 0 : i32
    %c0_i32_0 = arith.constant 0 : i32
    %c0_i32_1 = arith.constant 0 : i32
    return %c0_i32, %c0_i32_0 : i32, i32
  }
  func.func @transform_2(%arg0: i32) -> (i32, i32) {
    %c0_i32 = arith.constant 0 : i32
    %c0_i32_0 = arith.constant 0 : i32
    %c0_i32_1 = arith.constant 0 : i32
    return %c0_i32, %c0_i32_0 : i32, i32
  }
  func.func @transform_3(%arg0: i32) -> (i32, i32) {
    %c0_i32 = arith.constant 0 : i32
    %c0_i32_0 = arith.constant 0 : i32
    %c0_i32_1 = arith.constant 0 : i32
    return %c0_i32, %c0_i32_0 : i32, i32
  }
  func.func @transform_4(%arg0: i32) -> (i32, i32) {
    %c0_i32 = arith.constant 0 : i32
    %c0_i32_0 = arith.constant 0 : i32
    %c0_i32_1 = arith.constant 0 : i32
    return %c0_i32, %c0_i32_0 : i32, i32
  }
  func.func @transform_5(%arg0: i32) -> (i32, i32) {
    %c0_i32 = arith.constant 0 : i32
    %c0_i32_0 = arith.constant 0 : i32
    return %arg0, %c0_i32 : i32, i32
  }
}

</mosaic_0001>

<llo_original>
// kernel: encoder_forward.1
$region0: #{encoder_forward.1}
  #allocation0 [shape = 'u32[]', space=smem, size = 0x4, offset = 0x4, fixed_abs, tag = 'smem constant byte address 0x4 - core index']
  #allocation1 [shape = 'u32[72,128]{1,0:T(1,128)}', space=vmem, size = 0x9000, scoped, tag = 'internal scratch']
  %s0 = inlined_call_operand.vmem [shape: f32[256,784], index: 0, kind: input, shape index: {}]
  %s1 = inlined_call_operand.vmem [shape: bf16[784,512], index: 1, kind: input, shape index: {}]
  %s2 = inlined_call_operand.vmem [shape: f32[1,512], index: 2, kind: input, shape index: {}]
  %s3 = inlined_call_operand.vmem [shape: bf16[512,128], index: 3, kind: input, shape index: {}]
  %s4 = inlined_call_operand.vmem [shape: f32[1,128], index: 4, kind: input, shape index: {}]
  %s5 = inlined_call_operand.vmem [shape: f32[256,128], index: 5, kind: output, shape index: {}]
  %s6 = sld [smem:[#allocation0]]
  $region53: #{encoder_forward.1} parent=0
    _
  %s8 = ssub.s32 1, %s6
  %s9 = scalar_select 0, %s8, %s6
  loop: start=0, step=1, limit=4
  $region2: #{encoder_forward.1} parent=0 // loop_pre_header
    _
  $region3: #{encoder_forward.1} parent=0 // loop_header
    %s11 = sphi 0, %s15
    %p12 = scmp.ge.s32.totalorder %s11, 4
    %s21 = sphi 0, %s23
    %s24 = sphi 0, %s21
    %s25 = sphi 0, %s24
    %s41 = sphi 0, %s25
    %s45 = sphi 0, %s45
    %s47 = sphi 0, %s45
    %s48 = sphi 0, %s47
    %s62 = sphi 0, %s48
    %s66 = sphi 0, %s66
    %s68 = sphi 0, %s66
    %s69 = sphi 0, %s68
    %s83 = sphi 0, %s69
    %s87 = sphi 0, %s87
    %s89 = sphi 0, %s87
    %s90 = sphi 0, %s89
    %s104 = sphi 0, %s90
    %s108 = sphi 0, %s108
    %s110 = sphi 0, %s108
    %s111 = sphi 0, %s110
    %s125 = sphi 0, %s111
    %s131 = sphi 0, %s133
    %s134 = sphi 0, %s131
    %s135 = sphi 0, %s134
    %s151 = sphi 0, %s135
  $region4: #{encoder_forward.1} parent=0 // loop_header_branch
    %14 = sbr.rel (%p12) target = $region8
  $region5: #{encoder_forward.1} parent=0 // loop_body
    %s16 = ssub.s32 %s11, 1
    %s17 = ssub.s32 %s11, 2
    %s18 = sadd.s32 %s11, 1
    %s19 = ssub.s32 %s11, %s18
    %p20 = scmp.eq.s32.totalorder %s19, 0
    %s22 = sadd.s32 %s21, 1
    %s23 = scalar_select %p20, %s21, %s22
    %p26 = pneg %p20
    %p27 = scmp.eq.s32.totalorder %s11, 1
    %p28 = por %p26, %p27
    %p29 = scmp.ne.s32.totalorder %s21, %s24
    %p30 = scmp.eq.s32.totalorder %s11, 0
    %p31 = por %p29, %p30
    %p32 = scmp.ne.s32.totalorder %s21, %s24
    %p33 = scmp.eq.s32.totalorder %s16, 1
    %p34 = por %p32, %p33
    %p35 = scmp.ne.s32.totalorder %s24, %s25
    %p36 = scmp.eq.s32.totalorder %s16, 0
    %p37 = por %p35, %p36
    %p38 = scmp.ne.s32.totalorder %s24, %s25
    %p39 = scmp.eq.s32.totalorder %s17, 1
    %p40 = por %p38, %p39
    %p42 = scmp.ne.s32.totalorder %s25, %s41
    %p43 = scmp.eq.s32.totalorder %s17, 0
    %p44 = por %p42, %p43
    %s46 = sadd.s32 %s45, 1
    %p49 = scmp.eq.s32.totalorder %s11, 1
    %p50 = scmp.ne.s32.totalorder %s45, %s47
    %p51 = scmp.eq.s32.totalorder %s11, 0
    %p52 = por %p50, %p51
    %p53 = scmp.ne.s32.totalorder %s45, %s47
    %p54 = scmp.eq.s32.totalorder %s16, 1
    %p55 = por %p53, %p54
    %p56 = scmp.ne.s32.totalorder %s47, %s48
    %p57 = scmp.eq.s32.totalorder %s16, 0
    %p58 = por %p56, %p57
    %p59 = scmp.ne.s32.totalorder %s47, %s48
    %p60 = scmp.eq.s32.totalorder %s17, 1
    %p61 = por %p59, %p60
    %p63 = scmp.ne.s32.totalorder %s48, %s62
    %p64 = scmp.eq.s32.totalorder %s17, 0
    %p65 = por %p63, %p64
    %s67 = sadd.s32 %s66, 1
    %p70 = scmp.eq.s32.totalorder %s11, 1
    %p71 = scmp.ne.s32.totalorder %s66, %s68
    %p72 = scmp.eq.s32.totalorder %s11, 0
    %p73 = por %p71, %p72
    %p74 = scmp.ne.s32.totalorder %s66, %s68
    %p75 = scmp.eq.s32.totalorder %s16, 1
    %p76 = por %p74, %p75
    %p77 = scmp.ne.s32.totalorder %s68, %s69
    %p78 = scmp.eq.s32.totalorder %s16, 0
    %p79 = por %p77, %p78
    %p80 = scmp.ne.s32.totalorder %s68, %s69
    %p81 = scmp.eq.s32.totalorder %s17, 1
    %p82 = por %p80, %p81
    %p84 = scmp.ne.s32.totalorder %s69, %s83
    %p85 = scmp.eq.s32.totalorder %s17, 0
    %p86 = por %p84, %p85
    %s88 = sadd.s32 %s87, 1
    %p91 = scmp.eq.s32.totalorder %s11, 1
    %p92 = scmp.ne.s32.totalorder %s87, %s89
    %p93 = scmp.eq.s32.totalorder %s11, 0
    %p94 = por %p92, %p93
    %p95 = scmp.ne.s32.totalorder %s87, %s89
    %p96 = scmp.eq.s32.totalorder %s16, 1
    %p97 = por %p95, %p96
    %p98 = scmp.ne.s32.totalorder %s89, %s90
    %p99 = scmp.eq.s32.totalorder %s16, 0
    %p100 = por %p98, %p99
    %p101 = scmp.ne.s32.totalorder %s89, %s90
    %p102 = scmp.eq.s32.totalorder %s17, 1
    %p103 = por %p101, %p102
    %p105 = scmp.ne.s32.totalorder %s90, %s104
    %p106 = scmp.eq.s32.totalorder %s17, 0
    %p107 = por %p105, %p106
    %s109 = sadd.s32 %s108, 1
    %p112 = scmp.eq.s32.totalorder %s11, 1
    %p113 = scmp.ne.s32.totalorder %s108, %s110
    %p114 = scmp.eq.s32.totalorder %s11, 0
    %p115 = por %p113, %p114
    %p116 = scmp.ne.s32.totalorder %s108, %s110
    %p117 = scmp.eq.s32.totalorder %s16, 1
    %p118 = por %p116, %p117
    %p119 = scmp.ne.s32.totalorder %s110, %s111
    %p120 = scmp.eq.s32.totalorder %s16, 0
    %p121 = por %p119, %p120
    %p122 = scmp.ne.s32.totalorder %s110, %s111
    %p123 = scmp.eq.s32.totalorder %s17, 1
    %p124 = por %p122, %p123
    %p126 = scmp.ne.s32.totalorder %s111, %s125
    %p127 = scmp.eq.s32.totalorder %s17, 0
    %p128 = por %p126, %p127
    %s129 = ssub.s32 %s11, %s18
    %p130 = scmp.eq.s32.totalorder %s129, 0
    %s132 = sadd.s32 %s131, 1
    %s133 = scalar_select %p130, %s131, %s132
    %p136 = pneg %p130
    %p137 = scmp.eq.s32.totalorder %s11, 1
    %p138 = por %p136, %p137
    %p139 = scmp.ne.s32.totalorder %s131, %s134
    %p140 = scmp.eq.s32.totalorder %s11, 0
    %p141 = por %p139, %p140
    %p142 = scmp.ne.s32.totalorder %s131, %s134
    %p143 = scmp.eq.s32.totalorder %s16, 1
    %p144 = por %p142, %p143
    %p145 = scmp.ne.s32.totalorder %s134, %s135
    %p146 = scmp.eq.s32.totalorder %s16, 0
    %p147 = por %p145, %p146
    %p148 = scmp.ne.s32.totalorder %s134, %s135
    %p149 = scmp.eq.s32.totalorder %s17, 1
    %p150 = por %p148, %p149
    %p152 = scmp.ne.s32.totalorder %s135, %s151
    %p153 = scmp.eq.s32.totalorder %s17, 0
    %p154 = por %p152, %p153
    %p155 = scmp.le.s32.totalorder 1, %s11
    %p156 = scmp.lt.s32.totalorder %s11, 3
    %p157 = pnand %p155, %p156
    %p158 = pneg %p157
    // Predicated region
    $region9: #{encoder_forward.1} parent=5 // pred_check
      _
    $region10: #{encoder_forward.1} parent=5 // pred_check_branch
      %160 = sbr.rel (%p157) target = $region12
    $region11: #{encoder_forward.1} parent=5 // pred_region
      %s161 = ssub.s32 %s11, 1
      // Predicated region
      $region13: #{encoder_forward.1} parent=11 // pred_check
        %p162 = pneg %p58
      $region14: #{encoder_forward.1} parent=11 // pred_check_branch
        %164 = sbr.rel (%p162) target = $region16
      $region15: #{encoder_forward.1} parent=11 // pred_region
        _
      $region16: #{encoder_forward.1} parent=11 // pred_fallthru
        _
      // Predicated region
      $region17: #{encoder_forward.1} parent=11 // pred_check
        %p165 = pneg %p79
      $region18: #{encoder_forward.1} parent=11 // pred_check_branch
        %167 = sbr.rel (%p165) target = $region20
      $region19: #{encoder_forward.1} parent=11 // pred_region
        _
      $region20: #{encoder_forward.1} parent=11 // pred_fallthru
        _
      // Predicated region
      $region21: #{encoder_forward.1} parent=11 // pred_check
        %p168 = pneg %p100
      $region22: #{encoder_forward.1} parent=11 // pred_check_branch
        %170 = sbr.rel (%p168) target = $region24
      $region23: #{encoder_forward.1} parent=11 // pred_region
        _
      $region24: #{encoder_forward.1} parent=11 // pred_fallthru
        _
      // Predicated region
      $region25: #{encoder_forward.1} parent=11 // pred_check
        %p171 = pneg %p121
      $region26: #{encoder_forward.1} parent=11 // pred_check_branch
        %173 = sbr.rel (%p171) target = $region28
      $region27: #{encoder_forward.1} parent=11 // pred_region
        _
      $region28: #{encoder_forward.1} parent=11 // pred_fallthru
        _
    $region12: #{encoder_forward.1} parent=5 // pred_fallthru
      _
    %p174 = scmp.lt.s32.totalorder %s11, 2
    // Predicated region
    $region29: #{encoder_forward.1} parent=5 // pred_check
      %p175 = pneg %p174
    $region30: #{encoder_forward.1} parent=5 // pred_check_branch
      %177 = sbr.rel (%p175) target = $region32
    $region31: #{encoder_forward.1} parent=5 // pred_region
      // Predicated region
      $region33: #{encoder_forward.1} parent=31 // pred_check
        %p178 = pneg %p31
      $region34: #{encoder_forward.1} parent=31 // pred_check_branch
        %180 = sbr.rel (%p178) target = $region36
      $region35: #{encoder_forward.1} parent=31 // pred_region
        %s181 = smul.u32 16, %s11
        %p182 = scmp.lt.s32.totalorder %s181, 31
        %s183 = scalar_select %p182, %s181, 31
        %s184 = smul.addr %s183, 7
        %s185 = smul.addr %s184, 8
        %s186 = scalar_lea.vmem %s0, %s185
        %s187 = smul.u32 16, %s11
      $region36: #{encoder_forward.1} parent=31 // pred_fallthru
        _
    $region32: #{encoder_forward.1} parent=5 // pred_fallthru
      _
    %p188 = scmp.le.s32.totalorder 1, %s11
    %p189 = scmp.lt.s32.totalorder %s11, 3
    %p190 = pnand %p188, %p189
    %p191 = pneg %p190
    // Predicated region
    $region37: #{encoder_forward.1} parent=5 // pred_check
      _
    $region38: #{encoder_forward.1} parent=5 // pred_check_branch
      %193 = sbr.rel (%p190) target = $region40
    $region39: #{encoder_forward.1} parent=5 // pred_region
      %s194 = ssub.s32 %s11, 1
      %s195 = smul.u32 16, %s16
      %p196 = scmp.lt.s32.totalorder %s195, 31
      %s197 = scalar_select %p196, %s195, 31
      %s198 = smul.addr %s197, 7
      %s199 = smul.addr %s198, 8
      %s200 = scalar_lea.vmem %s0, %s199
      %p201 = pneg %p37
      %p202 = pneg %p34
      %p203 = pneg %p58
      %p204 = pneg %p55
      %p205 = pneg %p79
      %p206 = pneg %p76
      %p207 = pneg %p100
      %p208 = pneg %p97
      %p209 = pneg %p121
      %p210 = pneg %p118
      %p211 = pneg %p147
      %p212 = pneg %p144
      %s213 = smul.u32 16, %s16
      %p214 = scmp.lt.s32.totalorder %s213, 31
      %s215 = scalar_select %p214, %s213, 31
      %s216 = smul.addr %s215, 8
      %s217 = scalar_lea.vmem %s5, %s216
      %s218 = smul.u32 16, %s16
      %p219 = scmp.lt.s32.totalorder %s218, 31
      %s220 = scalar_select %p219, %s218, 31
      %s221 = smul.addr %s220, 7
      %s222 = smul.addr %s221, 8
      %s223 = scalar_lea.vmem %s0, %s222
      %s224 = smul.u32 16, %s16
      %s225 = smul.u32 16, %s16
      %p226 = scmp.lt.s32.totalorder %s225, 31
      %s227 = scalar_select %p226, %s225, 31
      %s228 = smul.addr %s227, 8
      %s229 = scalar_lea.vmem %s5, %s228
      %s230 = smul.u32 16, %s16
      %v232 = vld [vmem:[%s223] sm:$0xff]
      %v233 = vld [vmem:[%s223 + $0x8] sm:$0xff]
      %v234 = vld [vmem:[%s223 + $0x10] sm:$0xff]
      %v235 = vld [vmem:[%s223 + $0x18] sm:$0xff]
      %v236 = vld [vmem:[%s223 + $0x20] sm:$0xff]
      %v237 = vld [vmem:[%s223 + $0x28] sm:$0xff]
      %v238 = vld [vmem:[%s223 + $0x30] sm:$0xff]
      %v239 = vld [vmem:[%s223 + $0x38] sm:$0xff]
      %v240 = vld [vmem:[%s223 + $0x40] sm:$0xff]
      %v241 = vld [vmem:[%s223 + $0x48] sm:$0xff]
      %v242 = vld [vmem:[%s223 + $0x50] sm:$0xff]
      %v243 = vld [vmem:[%s223 + $0x58] sm:$0xff]
      %v244 = vld [vmem:[%s223 + $0x60] sm:$0xff]
      %v245 = vld [vmem:[%s223 + $0x68] sm:$0xff]
      %v246 = vld [vmem:[%s223 + $0x70] sm:$0xff]
      %v247 = vld [vmem:[%s223 + $0x78] sm:$0xff]
      %v248 = vld [vmem:[%s223 + $0x80] sm:$0xff]
      %v249 = vld [vmem:[%s223 + $0x88] sm:$0xff]
      %v250 = vld [vmem:[%s223 + $0x90] sm:$0xff]
      %v251 = vld [vmem:[%s223 + $0x98] sm:$0xff]
      %v252 = vld [vmem:[%s223 + $0xa0] sm:$0xff]
      %v253 = vld [vmem:[%s223 + $0xa8] sm:$0xff]
      %v254 = vld [vmem:[%s223 + $0xb0] sm:$0xff]
      %v255 = vld [vmem:[%s223 + $0xb8] sm:$0xff]
      %v256 = vld [vmem:[%s223 + $0xc0] sm:$0xff]
      %v257 = vld [vmem:[%s223 + $0xc8] sm:$0xff]
      %v258 = vld [vmem:[%s223 + $0xd0] sm:$0xff]
      %v259 = vld [vmem:[%s223 + $0xd8] sm:$0xff]
      %v260 = vld [vmem:[%s223 + $0xe0] sm:$0xff]
      %v261 = vld [vmem:[%s223 + $0xe8] sm:$0xff]
      %v262 = vld [vmem:[%s223 + $0xf0] sm:$0xff]
      %v263 = vld [vmem:[%s223 + $0xf8] sm:$0xff]
      %v264 = vld [vmem:[%s223 + $0x100] sm:$0xff]
      %v265 = vld [vmem:[%s223 + $0x108] sm:$0xff]
      %v266 = vld [vmem:[%s223 + $0x110] sm:$0xff]
      %v267 = vld [vmem:[%s223 + $0x118] sm:$0xff]
      %v268 = vld [vmem:[%s223 + $0x120] sm:$0xff]
      %v269 = vld [vmem:[%s223 + $0x128] sm:$0xff]
      %v270 = vld [vmem:[%s223 + $0x130] sm:$0xff]
      %v271 = vld [vmem:[%s223 + $0x138] sm:$0xff]
      %v272 = vld [vmem:[%s223 + $0x140] sm:$0xff]
      %v273 = vld [vmem:[%s223 + $0x148] sm:$0xff]
      %v274 = vld [vmem:[%s223 + $0x150] sm:$0xff]
      %v275 = vld [vmem:[%s223 + $0x158] sm:$0xff]
      %v276 = vld [vmem:[%s223 + $0x160] sm:$0xff]
      %v277 = vld [vmem:[%s223 + $0x168] sm:$0xff]
      %v278 = vld [vmem:[%s223 + $0x170] sm:$0xff]
      %v279 = vld [vmem:[%s223 + $0x178] sm:$0xff]
      %v280 = vld [vmem:[%s223 + $0x180] sm:$0xff]
      %v281 = vld [vmem:[%s223 + $0x188] sm:$0xff]
      %v282 = vld [vmem:[%s223 + $0x190] sm:$0xff]
      %v283 = vld [vmem:[%s223 + $0x198] sm:$0xff]
      %v284 = vld [vmem:[%s223 + $0x1a0] sm:$0xff]
      %v285 = vld [vmem:[%s223 + $0x1a8] sm:$0xff]
      %v286 = vld [vmem:[%s223 + $0x1b0] sm:$0xff]
      %v287 = vld [vmem:[%s223 + $0x1b8] sm:$0xff]
      %v288 = vld [vmem:[%s223 + $0x1c0] sm:$0xff]
      %v289 = vld [vmem:[%s223 + $0x1c8] sm:$0xff]
      %v290 = vld [vmem:[%s223 + $0x1d0] sm:$0xff]
      %v291 = vld [vmem:[%s223 + $0x1d8] sm:$0xff]
      %v292 = vld [vmem:[%s223 + $0x1e0] sm:$0xff]
      %v293 = vld [vmem:[%s223 + $0x1e8] sm:$0xff]
      %v294 = vld [vmem:[%s223 + $0x1f0] sm:$0xff]
      %v295 = vld [vmem:[%s223 + $0x1f8] sm:$0xff]
      %v296 = vld [vmem:[%s223 + $0x200] sm:$0xff]
      %v297 = vld [vmem:[%s223 + $0x208] sm:$0xff]
      %v298 = vld [vmem:[%s223 + $0x210] sm:$0xff]
      %v299 = vld [vmem:[%s223 + $0x218] sm:$0xff]
      %v300 = vld [vmem:[%s223 + $0x220] sm:$0xff]
      %v301 = vld [vmem:[%s223 + $0x228] sm:$0xff]
      %v302 = vld [vmem:[%s223 + $0x230] sm:$0xff]
      %v303 = vld [vmem:[%s223 + $0x238] sm:$0xff]
      %v304 = vld [vmem:[%s223 + $0x240] sm:$0xff]
      %v305 = vld [vmem:[%s223 + $0x248] sm:$0xff]
      %v306 = vld [vmem:[%s223 + $0x250] sm:$0xff]
      %v307 = vld [vmem:[%s223 + $0x258] sm:$0xff]
      %v308 = vld [vmem:[%s223 + $0x260] sm:$0xff]
      %v309 = vld [vmem:[%s223 + $0x268] sm:$0xff]
      %v310 = vld [vmem:[%s223 + $0x270] sm:$0xff]
      %v311 = vld [vmem:[%s223 + $0x278] sm:$0xff]
      %v312 = vld [vmem:[%s223 + $0x280] sm:$0xff]
      %v313 = vld [vmem:[%s223 + $0x288] sm:$0xff]
      %v314 = vld [vmem:[%s223 + $0x290] sm:$0xff]
      %v315 = vld [vmem:[%s223 + $0x298] sm:$0xff]
      %v316 = vld [vmem:[%s223 + $0x2a0] sm:$0xff]
      %v317 = vld [vmem:[%s223 + $0x2a8] sm:$0xff]
      %v318 = vld [vmem:[%s223 + $0x2b0] sm:$0xff]
      %v319 = vld [vmem:[%s223 + $0x2b8] sm:$0xff]
      %v320 = vld [vmem:[%s223 + $0x2c0] sm:$0xff]
      %v321 = vld [vmem:[%s223 + $0x2c8] sm:$0xff]
      %v322 = vld [vmem:[%s223 + $0x2d0] sm:$0xff]
      %v323 = vld [vmem:[%s223 + $0x2d8] sm:$0xff]
      %v324 = vld [vmem:[%s223 + $0x2e0] sm:$0xff]
      %v325 = vld [vmem:[%s223 + $0x2e8] sm:$0xff]
      %v326 = vld [vmem:[%s223 + $0x2f0] sm:$0xff]
      %v327 = vld [vmem:[%s223 + $0x2f8] sm:$0xff]
      %v328 = vld [vmem:[%s223 + $0x300] sm:$0xff]
      %v329 = vld [vmem:[%s223 + $0x308] sm:$0xff]
      %v330 = vld [vmem:[%s223 + $0x310] sm:$0xff]
      %v331 = vld [vmem:[%s223 + $0x318] sm:$0xff]
      %v332 = vld [vmem:[%s223 + $0x320] sm:$0xff]
      %v333 = vld [vmem:[%s223 + $0x328] sm:$0xff]
      %v334 = vld [vmem:[%s223 + $0x330] sm:$0xff]
      %v335 = vld [vmem:[%s223 + $0x338] sm:$0xff]
      %v336 = vld [vmem:[%s223 + $0x340] sm:$0xff]
      %v337 = vld [vmem:[%s223 + $0x348] sm:$0xff]
      %v338 = vld [vmem:[%s223 + $0x350] sm:$0xff]
      %v339 = vld [vmem:[%s223 + $0x358] sm:$0xff]
      %v340 = vld [vmem:[%s223 + $0x360] sm:$0xff]
      %v341 = vld [vmem:[%s223 + $0x368] sm:$0xff]
      %v342 = vld [vmem:[%s223 + $0x370] sm:$0xff]
      %v343 = vld [vmem:[%s223 + $0x378] sm:$0xff]
      %v344 = vpack.c.bf16 %v239, %v232
      %v345 = vpack.c.bf16 %v240, %v233
      %v346 = vpack.c.bf16 %v241, %v234
      %v347 = vpack.c.bf16 %v242, %v235
      %v348 = vpack.c.bf16 %v243, %v236
      %v349 = vpack.c.bf16 %v244, %v237
      %v350 = vpack.c.bf16 %v245, %v238
      %v351 = vpack.c.bf16 %v253, %v246
      %v352 = vpack.c.bf16 %v254, %v247
      %v353 = vpack.c.bf16 %v255, %v248
      %v354 = vpack.c.bf16 %v256, %v249
      %v355 = vpack.c.bf16 %v257, %v250
      %v356 = vpack.c.bf16 %v258, %v251
      %v357 = vpack.c.bf16 %v259, %v252
      %v358 = vpack.c.bf16 %v267, %v260
      %v359 = vpack.c.bf16 %v268, %v261
      %v360 = vpack.c.bf16 %v269, %v262
      %v361 = vpack.c.bf16 %v270, %v263
      %v362 = vpack.c.bf16 %v271, %v264
      %v363 = vpack.c.bf16 %v272, %v265
      %v364 = vpack.c.bf16 %v273, %v266
      %v365 = vpack.c.bf16 %v281, %v274
      %v366 = vpack.c.bf16 %v282, %v275
      %v367 = vpack.c.bf16 %v283, %v276
      %v368 = vpack.c.bf16 %v284, %v277
      %v369 = vpack.c.bf16 %v285, %v278
      %v370 = vpack.c.bf16 %v286, %v279
      %v371 = vpack.c.bf16 %v287, %v280
      %v372 = vpack.c.bf16 %v295, %v288
      %v373 = vpack.c.bf16 %v296, %v289
      %v374 = vpack.c.bf16 %v297, %v290
      %v375 = vpack.c.bf16 %v298, %v291
      %v376 = vpack.c.bf16 %v299, %v292
      %v377 = vpack.c.bf16 %v300, %v293
      %v378 = vpack.c.bf16 %v301, %v294
      %v379 = vpack.c.bf16 %v309, %v302
      %v380 = vpack.c.bf16 %v310, %v303
      %v381 = vpack.c.bf16 %v311, %v304
      %v382 = vpack.c.bf16 %v312, %v305
      %v383 = vpack.c.bf16 %v313, %v306
      %v384 = vpack.c.bf16 %v314, %v307
      %v385 = vpack.c.bf16 %v315, %v308
      %v386 = vpack.c.bf16 %v323, %v316
      %v387 = vpack.c.bf16 %v324, %v317
      %v388 = vpack.c.bf16 %v325, %v318
      %v389 = vpack.c.bf16 %v326, %v319
      %v390 = vpack.c.bf16 %v327, %v320
      %v391 = vpack.c.bf16 %v328, %v321
      %v392 = vpack.c.bf16 %v329, %v322
      %v393 = vpack.c.bf16 %v337, %v330
      %v394 = vpack.c.bf16 %v338, %v331
      %v395 = vpack.c.bf16 %v339, %v332
      %v396 = vpack.c.bf16 %v340, %v333
      %v397 = vpack.c.bf16 %v341, %v334
      %v398 = vpack.c.bf16 %v342, %v335
      %v399 = vpack.c.bf16 %v343, %v336
      %v400 = vld [vmem:[%s1] sm:$0xff]
      %v401 = vld [vmem:[%s1 + $0x8] sm:$0xff]
      %v402 = vld [vmem:[%s1 + $0x10] sm:$0xff]
      %v403 = vld [vmem:[%s1 + $0x18] sm:$0xff]
      %v404 = vld [vmem:[%s1 + $0x20] sm:$0xff]
      %v405 = vld [vmem:[%s1 + $0x28] sm:$0xff]
      %v406 = vld [vmem:[%s1 + $0x30] sm:$0xff]
      %v407 = vld [vmem:[%s1 + $0x38] sm:$0xff]
      %v408 = vld [vmem:[%s1 + $0x40] sm:$0xff]
      %v409 = vld [vmem:[%s1 + $0x48] sm:$0xff]
      %v410 = vld [vmem:[%s1 + $0x50] sm:$0xff]
      %v411 = vld [vmem:[%s1 + $0x58] sm:$0xff]
      %v412 = vld [vmem:[%s1 + $0x60] sm:$0xff]
      %v413 = vld [vmem:[%s1 + $0x68] sm:$0xff]
      %v414 = vld [vmem:[%s1 + $0x70] sm:$0xff]
      %v415 = vld [vmem:[%s1 + $0x78] sm:$0xff]
      %v416 = vld [vmem:[%s1 + $0x80] sm:$0xff]
      %v417 = vld [vmem:[%s1 + $0x88] sm:$0xff]
      %v418 = vld [vmem:[%s1 + $0x90] sm:$0xff]
      %v419 = vld [vmem:[%s1 + $0x98] sm:$0xff]
      %v420 = vld [vmem:[%s1 + $0xa0] sm:$0xff]
      %v421 = vld [vmem:[%s1 + $0xa8] sm:$0xff]
      %v422 = vld [vmem:[%s1 + $0xb0] sm:$0xff]
      %v423 = vld [vmem:[%s1 + $0xb8] sm:$0xff]
      %v424 = vld [vmem:[%s1 + $0xc0] sm:$0xff]
      %v425 = vld [vmem:[%s1 + $0xc8] sm:$0xff]
      %v426 = vld [vmem:[%s1 + $0xd0] sm:$0xff]
      %v427 = vld [vmem:[%s1 + $0xd8] sm:$0xff]
      %v428 = vld [vmem:[%s1 + $0xe0] sm:$0xff]
      %v429 = vld [vmem:[%s1 + $0xe8] sm:$0xff]
      %v430 = vld [vmem:[%s1 + $0xf0] sm:$0xff]
      %v431 = vld [vmem:[%s1 + $0xf8] sm:$0xff]
      %v432 = vld [vmem:[%s1 + $0x100] sm:$0xff]
      %v433 = vld [vmem:[%s1 + $0x108] sm:$0xff]
      %v434 = vld [vmem:[%s1 + $0x110] sm:$0xff]
      %v435 = vld [vmem:[%s1 + $0x118] sm:$0xff]
      %v436 = vld [vmem:[%s1 + $0x120] sm:$0xff]
      %v437 = vld [vmem:[%s1 + $0x128] sm:$0xff]
      %v438 = vld [vmem:[%s1 + $0x130] sm:$0xff]
      %v439 = vld [vmem:[%s1 + $0x138] sm:$0xff]
      %v440 = vld [vmem:[%s1 + $0x140] sm:$0xff]
      %v441 = vld [vmem:[%s1 + $0x148] sm:$0xff]
      %v442 = vld [vmem:[%s1 + $0x150] sm:$0xff]
      %v443 = vld [vmem:[%s1 + $0x158] sm:$0xff]
      %v444 = vld [vmem:[%s1 + $0x160] sm:$0xff]
      %v445 = vld [vmem:[%s1 + $0x168] sm:$0xff]
      %v446 = vld [vmem:[%s1 + $0x170] sm:$0xff]
      %v447 = vld [vmem:[%s1 + $0x178] sm:$0xff]
      %v448 = vld [vmem:[%s1 + $0x180] sm:$0xff]
      %v449 = vld [vmem:[%s1 + $0x188] sm:$0xff]
      %v450 = vld [vmem:[%s1 + $0x190] sm:$0xff]
      %v451 = vld [vmem:[%s1 + $0x198] sm:$0xff]
      %v452 = vld [vmem:[%s1 + $0x1a0] sm:$0xff]
      %v453 = vld [vmem:[%s1 + $0x1a8] sm:$0xff]
      %v454 = vld [vmem:[%s1 + $0x1b0] sm:$0xff]
      %v455 = vld [vmem:[%s1 + $0x1b8] sm:$0xff]
      %v456 = vld [vmem:[%s1 + $0x1c0] sm:$0xff]
      %v457 = vld [vmem:[%s1 + $0x1c8] sm:$0xff]
      %v458 = vld [vmem:[%s1 + $0x1d0] sm:$0xff]
      %v459 = vld [vmem:[%s1 + $0x1d8] sm:$0xff]
      %v460 = vld [vmem:[%s1 + $0x1e0] sm:$0xff]
      %v461 = vld [vmem:[%s1 + $0x1e8] sm:$0xff]
      %v462 = vld [vmem:[%s1 + $0x1f0] sm:$0xff]
      %v463 = vld [vmem:[%s1 + $0x1f8] sm:$0xff]
      %v464 = vld [vmem:[%s1 + $0x200] sm:$0xff]
      %v465 = vld [vmem:[%s1 + $0x208] sm:$0xff]
      %v466 = vld [vmem:[%s1 + $0x210] sm:$0xff]
      %v467 = vld [vmem:[%s1 + $0x218] sm:$0xff]
      %v468 = vld [vmem:[%s1 + $0x220] sm:$0xff]
      %v469 = vld [vmem:[%s1 + $0x228] sm:$0xff]
      %v470 = vld [vmem:[%s1 + $0x230] sm:$0xff]
      %v471 = vld [vmem:[%s1 + $0x238] sm:$0xff]
      %v472 = vld [vmem:[%s1 + $0x240] sm:$0xff]
      %v473 = vld [vmem:[%s1 + $0x248] sm:$0xff]
      %v474 = vld [vmem:[%s1 + $0x250] sm:$0xff]
      %v475 = vld [vmem:[%s1 + $0x258] sm:$0xff]
      %v476 = vld [vmem:[%s1 + $0x260] sm:$0xff]
      %v477 = vld [vmem:[%s1 + $0x268] sm:$0xff]
      %v478 = vld [vmem:[%s1 + $0x270] sm:$0xff]
      %v479 = vld [vmem:[%s1 + $0x278] sm:$0xff]
      %v480 = vld [vmem:[%s1 + $0x280] sm:$0xff]
      %v481 = vld [vmem:[%s1 + $0x288] sm:$0xff]
      %v482 = vld [vmem:[%s1 + $0x290] sm:$0xff]
      %v483 = vld [vmem:[%s1 + $0x298] sm:$0xff]
      %v484 = vld [vmem:[%s1 + $0x2a0] sm:$0xff]
      %v485 = vld [vmem:[%s1 + $0x2a8] sm:$0xff]
      %v486 = vld [vmem:[%s1 + $0x2b0] sm:$0xff]
      %v487 = vld [vmem:[%s1 + $0x2b8] sm:$0xff]
      %v488 = vld [vmem:[%s1 + $0x2c0] sm:$0xff]
      %v489 = vld [vmem:[%s1 + $0x2c8] sm:$0xff]
      %v490 = vld [vmem:[%s1 + $0x2d0] sm:$0xff]
      %v491 = vld [vmem:[%s1 + $0x2d8] sm:$0xff]
      %v492 = vld [vmem:[%s1 + $0x2e0] sm:$0xff]
      %v493 = vld [vmem:[%s1 + $0x2e8] sm:$0xff]
      %v494 = vld [vmem:[%s1 + $0x2f0] sm:$0xff]
      %v495 = vld [vmem:[%s1 + $0x2f8] sm:$0xff]
      %v496 = vld [vmem:[%s1 + $0x300] sm:$0xff]
      %v497 = vld [vmem:[%s1 + $0x308] sm:$0xff]
      %v498 = vld [vmem:[%s1 + $0x310] sm:$0xff]
      %v499 = vld [vmem:[%s1 + $0x318] sm:$0xff]
      %v500 = vld [vmem:[%s1 + $0x320] sm:$0xff]
      %v501 = vld [vmem:[%s1 + $0x328] sm:$0xff]
      %v502 = vld [vmem:[%s1 + $0x330] sm:$0xff]
      %v503 = vld [vmem:[%s1 + $0x338] sm:$0xff]
      %v504 = vld [vmem:[%s1 + $0x340] sm:$0xff]
      %v505 = vld [vmem:[%s1 + $0x348] sm:$0xff]
      %v506 = vld [vmem:[%s1 + $0x350] sm:$0xff]
      %v507 = vld [vmem:[%s1 + $0x358] sm:$0xff]
      %v508 = vld [vmem:[%s1 + $0x360] sm:$0xff]
      %v509 = vld [vmem:[%s1 + $0x368] sm:$0xff]
      %v510 = vld [vmem:[%s1 + $0x370] sm:$0xff]
      %v511 = vld [vmem:[%s1 + $0x378] sm:$0xff]
      %v512 = vld [vmem:[%s1 + $0x380] sm:$0xff]
      %v513 = vld [vmem:[%s1 + $0x388] sm:$0xff]
      %v514 = vld [vmem:[%s1 + $0x390] sm:$0xff]
      %v515 = vld [vmem:[%s1 + $0x398] sm:$0xff]
      %v516 = vld [vmem:[%s1 + $0x3a0] sm:$0xff]
      %v517 = vld [vmem:[%s1 + $0x3a8] sm:$0xff]
      %v518 = vld [vmem:[%s1 + $0x3b0] sm:$0xff]
      %v519 = vld [vmem:[%s1 + $0x3b8] sm:$0xff]
      %v520 = vld [vmem:[%s1 + $0x3c0] sm:$0xff]
      %v521 = vld [vmem:[%s1 + $0x3c8] sm:$0xff]
      %v522 = vld [vmem:[%s1 + $0x3d0] sm:$0xff]
      %v523 = vld [vmem:[%s1 + $0x3d8] sm:$0xff]
      %v524 = vld [vmem:[%s1 + $0x3e0] sm:$0xff]
      %v525 = vld [vmem:[%s1 + $0x3e8] sm:$0xff]
      %v526 = vld [vmem:[%s1 + $0x3f0] sm:$0xff]
      %v527 = vld [vmem:[%s1 + $0x3f8] sm:$0xff]
      %v528 = vld [vmem:[%s1 + $0x400] sm:$0xff]
      %v529 = vld [vmem:[%s1 + $0x408] sm:$0xff]
      %v530 = vld [vmem:[%s1 + $0x410] sm:$0xff]
      %v531 = vld [vmem:[%s1 + $0x418] sm:$0xff]
      %v532 = vld [vmem:[%s1 + $0x420] sm:$0xff]
      %v533 = vld [vmem:[%s1 + $0x428] sm:$0xff]
      %v534 = vld [vmem:[%s1 + $0x430] sm:$0xff]
      %v535 = vld [vmem:[%s1 + $0x438] sm:$0xff]
      %v536 = vld [vmem:[%s1 + $0x440] sm:$0xff]
      %v537 = vld [vmem:[%s1 + $0x448] sm:$0xff]
      %v538 = vld [vmem:[%s1 + $0x450] sm:$0xff]
      %v539 = vld [vmem:[%s1 + $0x458] sm:$0xff]
      %v540 = vld [vmem:[%s1 + $0x460] sm:$0xff]
      %v541 = vld [vmem:[%s1 + $0x468] sm:$0xff]
      %v542 = vld [vmem:[%s1 + $0x470] sm:$0xff]
      %v543 = vld [vmem:[%s1 + $0x478] sm:$0xff]
      %v544 = vld [vmem:[%s1 + $0x480] sm:$0xff]
      %v545 = vld [vmem:[%s1 + $0x488] sm:$0xff]
      %v546 = vld [vmem:[%s1 + $0x490] sm:$0xff]
      %v547 = vld [vmem:[%s1 + $0x498] sm:$0xff]
      %v548 = vld [vmem:[%s1 + $0x4a0] sm:$0xff]
      %v549 = vld [vmem:[%s1 + $0x4a8] sm:$0xff]
      %v550 = vld [vmem:[%s1 + $0x4b0] sm:$0xff]
      %v551 = vld [vmem:[%s1 + $0x4b8] sm:$0xff]
      %v552 = vld [vmem:[%s1 + $0x4c0] sm:$0xff]
      %v553 = vld [vmem:[%s1 + $0x4c8] sm:$0xff]
      %v554 = vld [vmem:[%s1 + $0x4d0] sm:$0xff]
      %v555 = vld [vmem:[%s1 + $0x4d8] sm:$0xff]
      %v556 = vld [vmem:[%s1 + $0x4e0] sm:$0xff]
      %v557 = vld [vmem:[%s1 + $0x4e8] sm:$0xff]
      %v558 = vld [vmem:[%s1 + $0x4f0] sm:$0xff]
      %v559 = vld [vmem:[%s1 + $0x4f8] sm:$0xff]
      %v560 = vld [vmem:[%s1 + $0x500] sm:$0xff]
      %v561 = vld [vmem:[%s1 + $0x508] sm:$0xff]
      %v562 = vld [vmem:[%s1 + $0x510] sm:$0xff]
      %v563 = vld [vmem:[%s1 + $0x518] sm:$0xff]
      %v564 = vld [vmem:[%s1 + $0x520] sm:$0xff]
      %v565 = vld [vmem:[%s1 + $0x528] sm:$0xff]
      %v566 = vld [vmem:[%s1 + $0x530] sm:$0xff]
      %v567 = vld [vmem:[%s1 + $0x538] sm:$0xff]
      %v568 = vld [vmem:[%s1 + $0x540] sm:$0xff]
      %v569 = vld [vmem:[%s1 + $0x548] sm:$0xff]
      %v570 = vld [vmem:[%s1 + $0x550] sm:$0xff]
      %v571 = vld [vmem:[%s1 + $0x558] sm:$0xff]
      %v572 = vld [vmem:[%s1 + $0x560] sm:$0xff]
      %v573 = vld [vmem:[%s1 + $0x568] sm:$0xff]
      %v574 = vld [vmem:[%s1 + $0x570] sm:$0xff]
      %v575 = vld [vmem:[%s1 + $0x578] sm:$0xff]
      %v576 = vld [vmem:[%s1 + $0x580] sm:$0xff]
      %v577 = vld [vmem:[%s1 + $0x588] sm:$0xff]
      %v578 = vld [vmem:[%s1 + $0x590] sm:$0xff]
      %v579 = vld [vmem:[%s1 + $0x598] sm:$0xff]
      %v580 = vld [vmem:[%s1 + $0x5a0] sm:$0xff]
      %v581 = vld [vmem:[%s1 + $0x5a8] sm:$0xff]
      %v582 = vld [vmem:[%s1 + $0x5b0] sm:$0xff]
      %v583 = vld [vmem:[%s1 + $0x5b8] sm:$0xff]
      %v584 = vld [vmem:[%s1 + $0x5c0] sm:$0xff]
      %v585 = vld [vmem:[%s1 + $0x5c8] sm:$0xff]
      %v586 = vld [vmem:[%s1 + $0x5d0] sm:$0xff]
      %v587 = vld [vmem:[%s1 + $0x5d8] sm:$0xff]
      %v588 = vld [vmem:[%s1 + $0x5e0] sm:$0xff]
      %v589 = vld [vmem:[%s1 + $0x5e8] sm:$0xff]
      %v590 = vld [vmem:[%s1 + $0x5f0] sm:$0xff]
      %v591 = vld [vmem:[%s1 + $0x5f8] sm:$0xff]
      %v592 = vld [vmem:[%s1 + $0x600] sm:$0xff]
      %v593 = vld [vmem:[%s1 + $0x608] sm:$0xff]
      %v594 = vld [vmem:[%s1 + $0x610] sm:$0xff]
      %v595 = vld [vmem:[%s1 + $0x618] sm:$0xff]
      %v596 = vld [vmem:[%s2] sm:$0xf]
      %v598 = vperm.slane %v596, 0
      %v599 = vperm.slane %v596, 1
      %v600 = vperm.slane %v596, 2
      %v601 = vperm.slane %v596, 3
      %v802 = vunpack.c.l.b16 %v400
      %v803 = vunpack.c.h.b16 %v400
      %v804 = vunpack.c.l.b16 %v401
      %v805 = vunpack.c.h.b16 %v401
      %v806 = vunpack.c.l.b16 %v402
      %v807 = vunpack.c.h.b16 %v402
      %v808 = vunpack.c.l.b16 %v403
      %v809 = vunpack.c.h.b16 %v403
      %v810 = vunpack.c.l.b16 %v404
      %v811 = vunpack.c.h.b16 %v404
      %v812 = vunpack.c.l.b16 %v405
      %v813 = vunpack.c.h.b16 %v405
      %v814 = vunpack.c.l.b16 %v406
      %v815 = vunpack.c.h.b16 %v406
      %v816 = vunpack.c.l.b16 %v407
      %v817 = vunpack.c.h.b16 %v407
      %v818 = vunpack.c.l.b16 %v408
      %v819 = vunpack.c.h.b16 %v408
      %v820 = vunpack.c.l.b16 %v409
      %v821 = vunpack.c.h.b16 %v409
      %v822 = vunpack.c.l.b16 %v410
      %v823 = vunpack.c.h.b16 %v410
      %v824 = vunpack.c.l.b16 %v411
      %v825 = vunpack.c.h.b16 %v411
      %v826 = vunpack.c.l.b16 %v412
      %v827 = vunpack.c.h.b16 %v412
      %v828 = vunpack.c.l.b16 %v413
      %v829 = vunpack.c.h.b16 %v413
      %v830 = vunpack.c.l.b16 %v414
      %v831 = vunpack.c.h.b16 %v414
      %v832 = vunpack.c.l.b16 %v415
      %v833 = vunpack.c.h.b16 %v415
      %v834 = vunpack.c.l.b16 %v416
      %v835 = vunpack.c.h.b16 %v416
      %v836 = vunpack.c.l.b16 %v417
      %v837 = vunpack.c.h.b16 %v417
      %v838 = vunpack.c.l.b16 %v418
      %v839 = vunpack.c.h.b16 %v418
      %v840 = vunpack.c.l.b16 %v419
      %v841 = vunpack.c.h.b16 %v419
      %v842 = vunpack.c.l.b16 %v420
      %v843 = vunpack.c.h.b16 %v420
      %v844 = vunpack.c.l.b16 %v421
      %v845 = vunpack.c.h.b16 %v421
      %v846 = vunpack.c.l.b16 %v422
      %v847 = vunpack.c.h.b16 %v422
      %v848 = vunpack.c.l.b16 %v423
      %v849 = vunpack.c.h.b16 %v423
      %v850 = vunpack.c.l.b16 %v424
      %v851 = vunpack.c.h.b16 %v424
      %v852 = vunpack.c.l.b16 %v425
      %v853 = vunpack.c.h.b16 %v425
      %v854 = vunpack.c.l.b16 %v426
      %v855 = vunpack.c.h.b16 %v426
      %v856 = vunpack.c.l.b16 %v427
      %v857 = vunpack.c.h.b16 %v427
      %v858 = vunpack.c.l.b16 %v428
      %v859 = vunpack.c.h.b16 %v428
      %v860 = vunpack.c.l.b16 %v429
      %v861 = vunpack.c.h.b16 %v429
      %v862 = vunpack.c.l.b16 %v430
      %v863 = vunpack.c.h.b16 %v430
      %v864 = vunpack.c.l.b16 %v431
      %v865 = vunpack.c.h.b16 %v431
      %v866 = vunpack.c.l.b16 %v432
      %v867 = vunpack.c.h.b16 %v432
      %v868 = vunpack.c.l.b16 %v433
      %v869 = vunpack.c.h.b16 %v433
      %v870 = vunpack.c.l.b16 %v434
      %v871 = vunpack.c.h.b16 %v434
      %v872 = vunpack.c.l.b16 %v435
      %v873 = vunpack.c.h.b16 %v435
      %v874 = vunpack.c.l.b16 %v436
      %v875 = vunpack.c.h.b16 %v436
      %v876 = vunpack.c.l.b16 %v437
      %v877 = vunpack.c.h.b16 %v437
      %v878 = vunpack.c.l.b16 %v438
      %v879 = vunpack.c.h.b16 %v438
      %v880 = vunpack.c.l.b16 %v439
      %v881 = vunpack.c.h.b16 %v439
      %v882 = vunpack.c.l.b16 %v440
      %v883 = vunpack.c.h.b16 %v440
      %v884 = vunpack.c.l.b16 %v441
      %v885 = vunpack.c.h.b16 %v441
      %v886 = vunpack.c.l.b16 %v442
      %v887 = vunpack.c.h.b16 %v442
      %v888 = vunpack.c.l.b16 %v443
      %v889 = vunpack.c.h.b16 %v443
      %v890 = vunpack.c.l.b16 %v444
      %v891 = vunpack.c.h.b16 %v444
      %v892 = vunpack.c.l.b16 %v445
      %v893 = vunpack.c.h.b16 %v445
      %v894 = vunpack.c.l.b16 %v446
      %v895 = vunpack.c.h.b16 %v446
      %v896 = vunpack.c.l.b16 %v447
      %v897 = vunpack.c.h.b16 %v447
      %v898 = vunpack.c.l.b16 %v448
      %v899 = vunpack.c.h.b16 %v448
      %v900 = vunpack.c.l.b16 %v449
      %v901 = vunpack.c.h.b16 %v449
      %v902 = vunpack.c.l.b16 %v450
      %v903 = vunpack.c.h.b16 %v450
      %v904 = vunpack.c.l.b16 %v451
      %v905 = vunpack.c.h.b16 %v451
      %v906 = vunpack.c.l.b16 %v452
      %v907 = vunpack.c.h.b16 %v452
      %v908 = vunpack.c.l.b16 %v453
      %v909 = vunpack.c.h.b16 %v453
      %v910 = vunpack.c.l.b16 %v454
      %v911 = vunpack.c.h.b16 %v454
      %v912 = vunpack.c.l.b16 %v455
      %v913 = vunpack.c.h.b16 %v455
      %v914 = vunpack.c.l.b16 %v456
      %v915 = vunpack.c.h.b16 %v456
      %v916 = vunpack.c.l.b16 %v457
      %v917 = vunpack.c.h.b16 %v457
      %v918 = vunpack.c.l.b16 %v458
      %v919 = vunpack.c.h.b16 %v458
      %v920 = vunpack.c.l.b16 %v459
      %v921 = vunpack.c.h.b16 %v459
      %v922 = vunpack.c.l.b16 %v460
      %v923 = vunpack.c.h.b16 %v460
      %v924 = vunpack.c.l.b16 %v461
      %v925 = vunpack.c.h.b16 %v461
      %v926 = vunpack.c.l.b16 %v462
      %v927 = vunpack.c.h.b16 %v462
      %v928 = vunpack.c.l.b16 %v463
      %v929 = vunpack.c.h.b16 %v463
      %v930 = vunpack.c.l.b16 %v464
      %v931 = vunpack.c.h.b16 %v464
      %v932 = vunpack.c.l.b16 %v465
      %v933 = vunpack.c.h.b16 %v465
      %v934 = vunpack.c.l.b16 %v466
      %v935 = vunpack.c.h.b16 %v466
      %v936 = vunpack.c.l.b16 %v467
      %v937 = vunpack.c.h.b16 %v467
      %v938 = vunpack.c.l.b16 %v468
      %v939 = vunpack.c.h.b16 %v468
      %v940 = vunpack.c.l.b16 %v469
      %v941 = vunpack.c.h.b16 %v469
      %v942 = vunpack.c.l.b16 %v470
      %v943 = vunpack.c.h.b16 %v470
      %v944 = vunpack.c.l.b16 %v471
      %v945 = vunpack.c.h.b16 %v471
      %v946 = vunpack.c.l.b16 %v472
      %v947 = vunpack.c.h.b16 %v472
      %v948 = vunpack.c.l.b16 %v473
      %v949 = vunpack.c.h.b16 %v473
      %v950 = vunpack.c.l.b16 %v474
      %v951 = vunpack.c.h.b16 %v474
      %v952 = vunpack.c.l.b16 %v475
      %v953 = vunpack.c.h.b16 %v475
      %v954 = vunpack.c.l.b16 %v476
      %v955 = vunpack.c.h.b16 %v476
      %v956 = vunpack.c.l.b16 %v477
      %v957 = vunpack.c.h.b16 %v477
      %v958 = vunpack.c.l.b16 %v478
      %v959 = vunpack.c.h.b16 %v478
      %v960 = vunpack.c.l.b16 %v479
      %v961 = vunpack.c.h.b16 %v479
      %v962 = vunpack.c.l.b16 %v480
      %v963 = vunpack.c.h.b16 %v480
      %v964 = vunpack.c.l.b16 %v481
      %v965 = vunpack.c.h.b16 %v481
      %v966 = vunpack.c.l.b16 %v482
      %v967 = vunpack.c.h.b16 %v482
      %v968 = vunpack.c.l.b16 %v483
      %v969 = vunpack.c.h.b16 %v483
      %v970 = vunpack.c.l.b16 %v484
      %v971 = vunpack.c.h.b16 %v484
      %v972 = vunpack.c.l.b16 %v485
      %v973 = vunpack.c.h.b16 %v485
      %v974 = vunpack.c.l.b16 %v486
      %v975 = vunpack.c.h.b16 %v486
      %v976 = vunpack.c.l.b16 %v487
      %v977 = vunpack.c.h.b16 %v487
      %v978 = vunpack.c.l.b16 %v488
      %v979 = vunpack.c.h.b16 %v488
      %v980 = vunpack.c.l.b16 %v489
      %v981 = vunpack.c.h.b16 %v489
      %v982 = vunpack.c.l.b16 %v490
      %v983 = vunpack.c.h.b16 %v490
      %v984 = vunpack.c.l.b16 %v491
      %v985 = vunpack.c.h.b16 %v491
      %v986 = vunpack.c.l.b16 %v492
      %v987 = vunpack.c.h.b16 %v492
      %v988 = vunpack.c.l.b16 %v493
      %v989 = vunpack.c.h.b16 %v493
      %v990 = vunpack.c.l.b16 %v494
      %v991 = vunpack.c.h.b16 %v494
      %v992 = vunpack.c.l.b16 %v495
      %v993 = vunpack.c.h.b16 %v495
      %v994 = vunpack.c.l.b16 %v496
      %v995 = vunpack.c.h.b16 %v496
      %v996 = vunpack.c.l.b16 %v497
      %v997 = vunpack.c.h.b16 %v497
      %v998 = vunpack.c.l.b16 %v498
      %v999 = vunpack.c.h.b16 %v498
      %v1000 = vunpack.c.l.b16 %v499
      %v1001 = vunpack.c.h.b16 %v499
      %v1002 = vunpack.c.l.b16 %v500
      %v1003 = vunpack.c.h.b16 %v500
      %v1004 = vunpack.c.l.b16 %v501
      %v1005 = vunpack.c.h.b16 %v501
      %v1006 = vunpack.c.l.b16 %v502
      %v1007 = vunpack.c.h.b16 %v502
      %v1008 = vunpack.c.l.b16 %v503
      %v1009 = vunpack.c.h.b16 %v503
      %v1010 = vunpack.c.l.b16 %v504
      %v1011 = vunpack.c.h.b16 %v504
      %v1012 = vunpack.c.l.b16 %v505
      %v1013 = vunpack.c.h.b16 %v505
      %v1014 = vunpack.c.l.b16 %v506
      %v1015 = vunpack.c.h.b16 %v506
      %v1016 = vunpack.c.l.b16 %v507
      %v1017 = vunpack.c.h.b16 %v507
      %v1018 = vunpack.c.l.b16 %v508
      %v1019 = vunpack.c.h.b16 %v508
      %v1020 = vunpack.c.l.b16 %v509
      %v1021 = vunpack.c.h.b16 %v509
      %v1022 = vunpack.c.l.b16 %v510
      %v1023 = vunpack.c.h.b16 %v510
      %v1024 = vunpack.c.l.b16 %v511
      %v1025 = vunpack.c.h.b16 %v511
      %v1026 = vunpack.c.l.b16 %v512
      %v1027 = vunpack.c.h.b16 %v512
      %v1028 = vunpack.c.l.b16 %v513
      %v1029 = vunpack.c.h.b16 %v513
      %v1030 = vunpack.c.l.b16 %v514
      %v1031 = vunpack.c.h.b16 %v514
      %v1032 = vunpack.c.l.b16 %v515
      %v1033 = vunpack.c.h.b16 %v515
      %v1034 = vunpack.c.l.b16 %v516
      %v1035 = vunpack.c.h.b16 %v516
      %v1036 = vunpack.c.l.b16 %v517
      %v1037 = vunpack.c.h.b16 %v517
      %v1038 = vunpack.c.l.b16 %v518
      %v1039 = vunpack.c.h.b16 %v518
      %v1040 = vunpack.c.l.b16 %v519
      %v1041 = vunpack.c.h.b16 %v519
      %v1042 = vunpack.c.l.b16 %v520
      %v1043 = vunpack.c.h.b16 %v520
      %v1044 = vunpack.c.l.b16 %v521
      %v1045 = vunpack.c.h.b16 %v521
      %v1046 = vunpack.c.l.b16 %v522
      %v1047 = vunpack.c.h.b16 %v522
      %v1048 = vunpack.c.l.b16 %v523
      %v1049 = vunpack.c.h.b16 %v523
      %v1050 = vunpack.c.l.b16 %v524
      %v1051 = vunpack.c.h.b16 %v524
      %v1052 = vunpack.c.l.b16 %v525
      %v1053 = vunpack.c.h.b16 %v525
      %v1054 = vunpack.c.l.b16 %v526
      %v1055 = vunpack.c.h.b16 %v526
      %v1056 = vunpack.c.l.b16 %v527
      %v1057 = vunpack.c.h.b16 %v527
      %v1058 = vunpack.c.l.b16 %v528
      %v1059 = vunpack.c.h.b16 %v528
      %v1060 = vunpack.c.l.b16 %v529
      %v1061 = vunpack.c.h.b16 %v529
      %v1062 = vunpack.c.l.b16 %v530
      %v1063 = vunpack.c.h.b16 %v530
      %v1064 = vunpack.c.l.b16 %v531
      %v1065 = vunpack.c.h.b16 %v531
      %v1066 = vunpack.c.l.b16 %v532
      %v1067 = vunpack.c.h.b16 %v532
      %v1068 = vunpack.c.l.b16 %v533
      %v1069 = vunpack.c.h.b16 %v533
      %v1070 = vunpack.c.l.b16 %v534
      %v1071 = vunpack.c.h.b16 %v534
      %v1072 = vunpack.c.l.b16 %v535
      %v1073 = vunpack.c.h.b16 %v535
      %v1074 = vunpack.c.l.b16 %v536
      %v1075 = vunpack.c.h.b16 %v536
      %v1076 = vunpack.c.l.b16 %v537
      %v1077 = vunpack.c.h.b16 %v537
      %v1078 = vunpack.c.l.b16 %v538
      %v1079 = vunpack.c.h.b16 %v538
      %v1080 = vunpack.c.l.b16 %v539
      %v1081 = vunpack.c.h.b16 %v539
      %v1082 = vunpack.c.l.b16 %v540
      %v1083 = vunpack.c.h.b16 %v540
      %v1084 = vunpack.c.l.b16 %v541
      %v1085 = vunpack.c.h.b16 %v541
      %v1086 = vunpack.c.l.b16 %v542
      %v1087 = vunpack.c.h.b16 %v542
      %v1088 = vunpack.c.l.b16 %v543
      %v1089 = vunpack.c.h.b16 %v543
      %v1090 = vunpack.c.l.b16 %v544
      %v1091 = vunpack.c.h.b16 %v544
      %v1092 = vunpack.c.l.b16 %v545
      %v1093 = vunpack.c.h.b16 %v545
      %v1094 = vunpack.c.l.b16 %v546
      %v1095 = vunpack.c.h.b16 %v546
      %v1096 = vunpack.c.l.b16 %v547
      %v1097 = vunpack.c.h.b16 %v547
      %v1098 = vunpack.c.l.b16 %v548
      %v1099 = vunpack.c.h.b16 %v548
      %v1100 = vunpack.c.l.b16 %v549
      %v1101 = vunpack.c.h.b16 %v549
      %v1102 = vunpack.c.l.b16 %v550
      %v1103 = vunpack.c.h.b16 %v550
      %v1104 = vunpack.c.l.b16 %v551
      %v1105 = vunpack.c.h.b16 %v551
      %v1106 = vunpack.c.l.b16 %v552
      %v1107 = vunpack.c.h.b16 %v552
      %v1108 = vunpack.c.l.b16 %v553
      %v1109 = vunpack.c.h.b16 %v553
      %v1110 = vunpack.c.l.b16 %v554
      %v1111 = vunpack.c.h.b16 %v554
      %v1112 = vunpack.c.l.b16 %v555
      %v1113 = vunpack.c.h.b16 %v555
      %v1114 = vunpack.c.l.b16 %v556
      %v1115 = vunpack.c.h.b16 %v556
      %v1116 = vunpack.c.l.b16 %v557
      %v1117 = vunpack.c.h.b16 %v557
      %v1118 = vunpack.c.l.b16 %v558
      %v1119 = vunpack.c.h.b16 %v558
      %v1120 = vunpack.c.l.b16 %v559
      %v1121 = vunpack.c.h.b16 %v559
      %v1122 = vunpack.c.l.b16 %v560
      %v1123 = vunpack.c.h.b16 %v560
      %v1124 = vunpack.c.l.b16 %v561
      %v1125 = vunpack.c.h.b16 %v561
      %v1126 = vunpack.c.l.b16 %v562
      %v1127 = vunpack.c.h.b16 %v562
      %v1128 = vunpack.c.l.b16 %v563
      %v1129 = vunpack.c.h.b16 %v563
      %v1130 = vunpack.c.l.b16 %v564
      %v1131 = vunpack.c.h.b16 %v564
      %v1132 = vunpack.c.l.b16 %v565
      %v1133 = vunpack.c.h.b16 %v565
      %v1134 = vunpack.c.l.b16 %v566
      %v1135 = vunpack.c.h.b16 %v566
      %v1136 = vunpack.c.l.b16 %v567
      %v1137 = vunpack.c.h.b16 %v567
      %v1138 = vunpack.c.l.b16 %v568
      %v1139 = vunpack.c.h.b16 %v568
      %v1140 = vunpack.c.l.b16 %v569
      %v1141 = vunpack.c.h.b16 %v569
      %v1142 = vunpack.c.l.b16 %v570
      %v1143 = vunpack.c.h.b16 %v570
      %v1144 = vunpack.c.l.b16 %v571
      %v1145 = vunpack.c.h.b16 %v571
      %v1146 = vunpack.c.l.b16 %v572
      %v1147 = vunpack.c.h.b16 %v572
      %v1148 = vunpack.c.l.b16 %v573
      %v1149 = vunpack.c.h.b16 %v573
      %v1150 = vunpack.c.l.b16 %v574
      %v1151 = vunpack.c.h.b16 %v574
      %v1152 = vunpack.c.l.b16 %v575
      %v1153 = vunpack.c.h.b16 %v575
      %v1154 = vunpack.c.l.b16 %v576
      %v1155 = vunpack.c.h.b16 %v576
      %v1156 = vunpack.c.l.b16 %v577
      %v1157 = vunpack.c.h.b16 %v577
      %v1158 = vunpack.c.l.b16 %v578
      %v1159 = vunpack.c.h.b16 %v578
      %v1160 = vunpack.c.l.b16 %v579
      %v1161 = vunpack.c.h.b16 %v579
      %v1162 = vunpack.c.l.b16 %v580
      %v1163 = vunpack.c.h.b16 %v580
      %v1164 = vunpack.c.l.b16 %v581
      %v1165 = vunpack.c.h.b16 %v581
      %v1166 = vunpack.c.l.b16 %v582
      %v1167 = vunpack.c.h.b16 %v582
      %v1168 = vunpack.c.l.b16 %v583
      %v1169 = vunpack.c.h.b16 %v583
      %v1170 = vunpack.c.l.b16 %v584
      %v1171 = vunpack.c.h.b16 %v584
      %v1172 = vunpack.c.l.b16 %v585
      %v1173 = vunpack.c.h.b16 %v585
      %v1174 = vunpack.c.l.b16 %v586
      %v1175 = vunpack.c.h.b16 %v586
      %v1176 = vunpack.c.l.b16 %v587
      %v1177 = vunpack.c.h.b16 %v587
      %v1178 = vunpack.c.l.b16 %v588
      %v1179 = vunpack.c.h.b16 %v588
      %v1180 = vunpack.c.l.b16 %v589
      %v1181 = vunpack.c.h.b16 %v589
      %v1182 = vunpack.c.l.b16 %v590
      %v1183 = vunpack.c.h.b16 %v590
      %v1184 = vunpack.c.l.b16 %v591
      %v1185 = vunpack.c.h.b16 %v591
      %v1186 = vunpack.c.l.b16 %v592
      %v1187 = vunpack.c.h.b16 %v592
      %v1188 = vunpack.c.l.b16 %v593
      %v1189 = vunpack.c.h.b16 %v593
      %v1190 = vunpack.c.l.b16 %v594
      %v1191 = vunpack.c.h.b16 %v594
      %v1192 = vunpack.c.l.b16 %v595
      %v1193 = vunpack.c.h.b16 %v595
      %v1194 = vpack.c.b16 %v806, %v802
      %v1195 = vpack.c.b16 %v807, %v803
      %v1196 = vpack.c.b16 %v808, %v804
      %v1197 = vpack.c.b16 %v809, %v805
      %v1198 = vpack.c.b16 %v814, %v810
      %v1199 = vpack.c.b16 %v815, %v811
      %v1200 = vpack.c.b16 %v816, %v812
      %v1201 = vpack.c.b16 %v817, %v813
      %v1202 = vpack.c.b16 %v822, %v818
      %v1203 = vpack.c.b16 %v823, %v819
      %v1204 = vpack.c.b16 %v824, %v820
      %v1205 = vpack.c.b16 %v825, %v821
      %v1206 = vpack.c.b16 %v830, %v826
      %v1207 = vpack.c.b16 %v831, %v827
      %v1208 = vpack.c.b16 %v832, %v828
      %v1209 = vpack.c.b16 %v833, %v829
      %v1210 = vpack.c.b16 %v838, %v834
      %v1211 = vpack.c.b16 %v839, %v835
      %v1212 = vpack.c.b16 %v840, %v836
      %v1213 = vpack.c.b16 %v841, %v837
      %v1214 = vpack.c.b16 %v846, %v842
      %v1215 = vpack.c.b16 %v847, %v843
      %v1216 = vpack.c.b16 %v848, %v844
      %v1217 = vpack.c.b16 %v849, %v845
      %v1218 = vpack.c.b16 %v854, %v850
      %v1219 = vpack.c.b16 %v855, %v851
      %v1220 = vpack.c.b16 %v856, %v852
      %v1221 = vpack.c.b16 %v857, %v853
      %v1222 = vpack.c.b16 %v862, %v858
      %v1223 = vpack.c.b16 %v863, %v859
      %v1224 = vpack.c.b16 %v864, %v860
      %v1225 = vpack.c.b16 %v865, %v861
      %v1226 = vpack.c.b16 %v870, %v866
      %v1227 = vpack.c.b16 %v871, %v867
      %v1228 = vpack.c.b16 %v872, %v868
      %v1229 = vpack.c.b16 %v873, %v869
      %v1230 = vpack.c.b16 %v878, %v874
      %v1231 = vpack.c.b16 %v879, %v875
      %v1232 = vpack.c.b16 %v880, %v876
      %v1233 = vpack.c.b16 %v881, %v877
      %v1234 = vpack.c.b16 %v886, %v882
      %v1235 = vpack.c.b16 %v887, %v883
      %v1236 = vpack.c.b16 %v888, %v884
      %v1237 = vpack.c.b16 %v889, %v885
      %v1238 = vpack.c.b16 %v894, %v890
      %v1239 = vpack.c.b16 %v895, %v891
      %v1240 = vpack.c.b16 %v896, %v892
      %v1241 = vpack.c.b16 %v897, %v893
      %v1242 = vpack.c.b16 %v902, %v898
      %v1243 = vpack.c.b16 %v903, %v899
      %v1244 = vpack.c.b16 %v904, %v900
      %v1245 = vpack.c.b16 %v905, %v901
      %v1246 = vpack.c.b16 %v910, %v906
      %v1247 = vpack.c.b16 %v911, %v907
      %v1248 = vpack.c.b16 %v912, %v908
      %v1249 = vpack.c.b16 %v913, %v909
      %v1250 = vpack.c.b16 %v918, %v914
      %v1251 = vpack.c.b16 %v919, %v915
      %v1252 = vpack.c.b16 %v920, %v916
      %v1253 = vpack.c.b16 %v921, %v917
      %v1254 = vpack.c.b16 %v926, %v922
      %v1255 = vpack.c.b16 %v927, %v923
      %v1256 = vpack.c.b16 %v928, %v924
      %v1257 = vpack.c.b16 %v929, %v925
      %v1258 = vpack.c.b16 %v934, %v930
      %v1259 = vpack.c.b16 %v935, %v931
      %v1260 = vpack.c.b16 %v936, %v932
      %v1261 = vpack.c.b16 %v937, %v933
      %v1262 = vpack.c.b16 %v942, %v938
      %v1263 = vpack.c.b16 %v943, %v939
      %v1264 = vpack.c.b16 %v944, %v940
      %v1265 = vpack.c.b16 %v945, %v941
      %v1266 = vpack.c.b16 %v950, %v946
      %v1267 = vpack.c.b16 %v951, %v947
      %v1268 = vpack.c.b16 %v952, %v948
      %v1269 = vpack.c.b16 %v953, %v949
      %v1270 = vpack.c.b16 %v958, %v954
      %v1271 = vpack.c.b16 %v959, %v955
      %v1272 = vpack.c.b16 %v960, %v956
      %v1273 = vpack.c.b16 %v961, %v957
      %v1274 = vpack.c.b16 %v966, %v962
      %v1275 = vpack.c.b16 %v967, %v963
      %v1276 = vpack.c.b16 %v968, %v964
      %v1277 = vpack.c.b16 %v969, %v965
      %v1278 = vpack.c.b16 %v974, %v970
      %v1279 = vpack.c.b16 %v975, %v971
      %v1280 = vpack.c.b16 %v976, %v972
      %v1281 = vpack.c.b16 %v977, %v973
      %v1282 = vpack.c.b16 %v982, %v978
      %v1283 = vpack.c.b16 %v983, %v979
      %v1284 = vpack.c.b16 %v984, %v980
      %v1285 = vpack.c.b16 %v985, %v981
      %v1286 = vpack.c.b16 %v990, %v986
      %v1287 = vpack.c.b16 %v991, %v987
      %v1288 = vpack.c.b16 %v992, %v988
      %v1289 = vpack.c.b16 %v993, %v989
      %v1290 = vpack.c.b16 %v998, %v994
      %v1291 = vpack.c.b16 %v999, %v995
      %v1292 = vpack.c.b16 %v1000, %v996
      %v1293 = vpack.c.b16 %v1001, %v997
      %v1294 = vpack.c.b16 %v1006, %v1002
      %v1295 = vpack.c.b16 %v1007, %v1003
      %v1296 = vpack.c.b16 %v1008, %v1004
      %v1297 = vpack.c.b16 %v1009, %v1005
      %v1298 = vpack.c.b16 %v1014, %v1010
      %v1299 = vpack.c.b16 %v1015, %v1011
      %v1300 = vpack.c.b16 %v1016, %v1012
      %v1301 = vpack.c.b16 %v1017, %v1013
      %v1302 = vpack.c.b16 %v1022, %v1018
      %v1303 = vpack.c.b16 %v1023, %v1019
      %v1304 = vpack.c.b16 %v1024, %v1020
      %v1305 = vpack.c.b16 %v1025, %v1021
      %v1306 = vpack.c.b16 %v1030, %v1026
      %v1307 = vpack.c.b16 %v1031, %v1027
      %v1308 = vpack.c.b16 %v1032, %v1028
      %v1309 = vpack.c.b16 %v1033, %v1029
      %v1310 = vpack.c.b16 %v1038, %v1034
      %v1311 = vpack.c.b16 %v1039, %v1035
      %v1312 = vpack.c.b16 %v1040, %v1036
      %v1313 = vpack.c.b16 %v1041, %v1037
      %v1314 = vpack.c.b16 %v1046, %v1042
      %v1315 = vpack.c.b16 %v1047, %v1043
      %v1316 = vpack.c.b16 %v1048, %v1044
      %v1317 = vpack.c.b16 %v1049, %v1045
      %v1318 = vpack.c.b16 %v1054, %v1050
      %v1319 = vpack.c.b16 %v1055, %v1051
      %v1320 = vpack.c.b16 %v1056, %v1052
      %v1321 = vpack.c.b16 %v1057, %v1053
      %v1322 = vpack.c.b16 %v1062, %v1058
      %v1323 = vpack.c.b16 %v1063, %v1059
      %v1324 = vpack.c.b16 %v1064, %v1060
      %v1325 = vpack.c.b16 %v1065, %v1061
      %v1326 = vpack.c.b16 %v1070, %v1066
      %v1327 = vpack.c.b16 %v1071, %v1067
      %v1328 = vpack.c.b16 %v1072, %v1068
      %v1329 = vpack.c.b16 %v1073, %v1069
      %v1330 = vpack.c.b16 %v1078, %v1074
      %v1331 = vpack.c.b16 %v1079, %v1075
      %v1332 = vpack.c.b16 %v1080, %v1076
      %v1333 = vpack.c.b16 %v1081, %v1077
      %v1334 = vpack.c.b16 %v1086, %v1082
      %v1335 = vpack.c.b16 %v1087, %v1083
      %v1336 = vpack.c.b16 %v1088, %v1084
      %v1337 = vpack.c.b16 %v1089, %v1085
      %v1338 = vpack.c.b16 %v1094, %v1090
      %v1339 = vpack.c.b16 %v1095, %v1091
      %v1340 = vpack.c.b16 %v1096, %v1092
      %v1341 = vpack.c.b16 %v1097, %v1093
      %v1342 = vpack.c.b16 %v1102, %v1098
      %v1343 = vpack.c.b16 %v1103, %v1099
      %v1344 = vpack.c.b16 %v1104, %v1100
      %v1345 = vpack.c.b16 %v1105, %v1101
      %v1346 = vpack.c.b16 %v1110, %v1106
      %v1347 = vpack.c.b16 %v1111, %v1107
      %v1348 = vpack.c.b16 %v1112, %v1108
      %v1349 = vpack.c.b16 %v1113, %v1109
      %v1350 = vpack.c.b16 %v1118, %v1114
      %v1351 = vpack.c.b16 %v1119, %v1115
      %v1352 = vpack.c.b16 %v1120, %v1116
      %v1353 = vpack.c.b16 %v1121, %v1117
      %v1354 = vpack.c.b16 %v1126, %v1122
      %v1355 = vpack.c.b16 %v1127, %v1123
      %v1356 = vpack.c.b16 %v1128, %v1124
      %v1357 = vpack.c.b16 %v1129, %v1125
      %v1358 = vpack.c.b16 %v1134, %v1130
      %v1359 = vpack.c.b16 %v1135, %v1131
      %v1360 = vpack.c.b16 %v1136, %v1132
      %v1361 = vpack.c.b16 %v1137, %v1133
      %v1362 = vpack.c.b16 %v1142, %v1138
      %v1363 = vpack.c.b16 %v1143, %v1139
      %v1364 = vpack.c.b16 %v1144, %v1140
      %v1365 = vpack.c.b16 %v1145, %v1141
      %v1366 = vpack.c.b16 %v1150, %v1146
      %v1367 = vpack.c.b16 %v1151, %v1147
      %v1368 = vpack.c.b16 %v1152, %v1148
      %v1369 = vpack.c.b16 %v1153, %v1149
      %v1370 = vpack.c.b16 %v1158, %v1154
      %v1371 = vpack.c.b16 %v1159, %v1155
      %v1372 = vpack.c.b16 %v1160, %v1156
      %v1373 = vpack.c.b16 %v1161, %v1157
      %v1374 = vpack.c.b16 %v1166, %v1162
      %v1375 = vpack.c.b16 %v1167, %v1163
      %v1376 = vpack.c.b16 %v1168, %v1164
      %v1377 = vpack.c.b16 %v1169, %v1165
      %v1378 = vpack.c.b16 %v1174, %v1170
      %v1379 = vpack.c.b16 %v1175, %v1171
      %v1380 = vpack.c.b16 %v1176, %v1172
      %v1381 = vpack.c.b16 %v1177, %v1173
      %v1382 = vpack.c.b16 %v1182, %v1178
      %v1383 = vpack.c.b16 %v1183, %v1179
      %v1384 = vpack.c.b16 %v1184, %v1180
      %v1385 = vpack.c.b16 %v1185, %v1181
      %v1386 = vpack.c.b16 %v1190, %v1186
      %v1387 = vpack.c.b16 %v1191, %v1187
      %v1388 = vpack.c.b16 %v1192, %v1188
      %v1389 = vpack.c.b16 %v1193, %v1189
      %vm1586 = vcmask 130048
      %v1588 = vsel %vm1586, %v350, 0
      %v1591 = vsel %vm1586, %v357, 0
      %v1594 = vsel %vm1586, %v364, 0
      %v1597 = vsel %vm1586, %v371, 0
      %v1600 = vsel %vm1586, %v378, 0
      %v1603 = vsel %vm1586, %v385, 0
      %v1606 = vsel %vm1586, %v392, 0
      %v1609 = vsel %vm1586, %v399, 0
      %1611 = vmatpush.bf16.msra.mxu0 %v1222
      %1612 = vmatpush.bf16.msra.mxu0 %v1218
      %1613 = vmatpush.bf16.msra.mxu0 %v1214
      %1614 = vmatpush.bf16.msra.mxu0 %v1210
      %1615 = vmatpush.bf16.msra.mxu0 %v1206
      %1616 = vmatpush.bf16.msra.mxu0 %v1202
      %1617 = vmatpush.bf16.msra.mxu0 %v1198
      %1618 = vmatpush.bf16.msra.mxu0 %v1194
      %1619 = vmatmul.bf16.gmra.mxu0 %v344
      %v1620 = vpop.f32.mrf.mxu0
      %v1621 = vadd.f32 %v598, %v1620
      %v1622 = vpop.f32.mrf.mxu0
      %v1623 = vadd.f32 %v598, %v1622
      %1624 = vmatmul.bf16.gmra.mxu0 %v351
      %v1625 = vpop.f32.mrf.mxu0
      %v1626 = vadd.f32 %v598, %v1625
      %v1627 = vpop.f32.mrf.mxu0
      %v1628 = vadd.f32 %v598, %v1627
      %1629 = vmatmul.bf16.gmra.mxu0 %v358
      %v1630 = vpop.f32.mrf.mxu0
      %v1631 = vadd.f32 %v598, %v1630
      %v1632 = vpop.f32.mrf.mxu0
      %v1633 = vadd.f32 %v598, %v1632
      %1634 = vmatmul.bf16.gmra.mxu0 %v365
      %v1635 = vpop.f32.mrf.mxu0
      %v1636 = vadd.f32 %v598, %v1635
      %v1637 = vpop.f32.mrf.mxu0
      %v1638 = vadd.f32 %v598, %v1637
      %1639 = vmatmul.bf16.gmra.mxu0 %v372
      %v1640 = vpop.f32.mrf.mxu0
      %v1641 = vadd.f32 %v598, %v1640
      %v1642 = vpop.f32.mrf.mxu0
      %v1643 = vadd.f32 %v598, %v1642
      %1644 = vmatmul.bf16.gmra.mxu0 %v379
      %v1645 = vpop.f32.mrf.mxu0
      %v1646 = vadd.f32 %v598, %v1645
      %v1647 = vpop.f32.mrf.mxu0
      %v1648 = vadd.f32 %v598, %v1647
      %1649 = vmatmul.bf16.gmra.mxu0 %v386
      %v1650 = vpop.f32.mrf.mxu0
      %v1651 = vadd.f32 %v598, %v1650
      %v1652 = vpop.f32.mrf.mxu0
      %v1653 = vadd.f32 %v598, %v1652
      %1654 = vmatmul.bf16.gmra.mxu0 %v393
      %v1655 = vpop.f32.mrf.mxu0
      %v1656 = vadd.f32 %v598, %v1655
      %v1657 = vpop.f32.mrf.mxu0
      %v1658 = vadd.f32 %v598, %v1657
      %1659 = vdwg.mxu0
      %1660 = vmatpush.bf16.msra.mxu0 %v1254
      %1661 = vmatpush.bf16.msra.mxu0 %v1250
      %1662 = vmatpush.bf16.msra.mxu0 %v1246
      %1663 = vmatpush.bf16.msra.mxu0 %v1242
      %1664 = vmatpush.bf16.msra.mxu0 %v1238
      %1665 = vmatpush.bf16.msra.mxu0 %v1234
      %1666 = vmatpush.bf16.msra.mxu0 %v1230
      %1667 = vmatpush.bf16.msra.mxu0 %v1226
      %1668 = vmatmul.bf16.gmra.mxu0 %v345
      %v1669 = vpop.f32.mrf.mxu0
      %v1670 = vadd.f32 %v1621, %v1669
      %v1671 = vpop.f32.mrf.mxu0
      %v1672 = vadd.f32 %v1623, %v1671
      %1673 = vmatmul.bf16.gmra.mxu0 %v352
      %v1674 = vpop.f32.mrf.mxu0
      %v1675 = vadd.f32 %v1626, %v1674
      %v1676 = vpop.f32.mrf.mxu0
      %v1677 = vadd.f32 %v1628, %v1676
      %1678 = vmatmul.bf16.gmra.mxu0 %v359
      %v1679 = vpop.f32.mrf.mxu0
      %v1680 = vadd.f32 %v1631, %v1679
      %v1681 = vpop.f32.mrf.mxu0
      %v1682 = vadd.f32 %v1633, %v1681
      %1683 = vmatmul.bf16.gmra.mxu0 %v366
      %v1684 = vpop.f32.mrf.mxu0
      %v1685 = vadd.f32 %v1636, %v1684
      %v1686 = vpop.f32.mrf.mxu0
      %v1687 = vadd.f32 %v1638, %v1686
      %1688 = vmatmul.bf16.gmra.mxu0 %v373
      %v1689 = vpop.f32.mrf.mxu0
      %v1690 = vadd.f32 %v1641, %v1689
      %v1691 = vpop.f32.mrf.mxu0
      %v1692 = vadd.f32 %v1643, %v1691
      %1693 = vmatmul.bf16.gmra.mxu0 %v380
      %v1694 = vpop.f32.mrf.mxu0
      %v1695 = vadd.f32 %v1646, %v1694
      %v1696 = vpop.f32.mrf.mxu0
      %v1697 = vadd.f32 %v1648, %v1696
      %1698 = vmatmul.bf16.gmra.mxu0 %v387
      %v1699 = vpop.f32.mrf.mxu0
      %v1700 = vadd.f32 %v1651, %v1699
      %v1701 = vpop.f32.mrf.mxu0
      %v1702 = vadd.f32 %v1653, %v1701
      %1703 = vmatmul.bf16.gmra.mxu0 %v394
      %v1704 = vpop.f32.mrf.mxu0
      %v1705 = vadd.f32 %v1656, %v1704
      %v1706 = vpop.f32.mrf.mxu0
      %v1707 = vadd.f32 %v1658, %v1706
      %1708 = vdwg.mxu0
      %1709 = vmatpush.bf16.msra.mxu0 %v1286
      %1710 = vmatpush.bf16.msra.mxu0 %v1282
      %1711 = vmatpush.bf16.msra.mxu0 %v1278
      %1712 = vmatpush.bf16.msra.mxu0 %v1274
      %1713 = vmatpush.bf16.msra.mxu0 %v1270
      %1714 = vmatpush.bf16.msra.mxu0 %v1266
      %1715 = vmatpush.bf16.msra.mxu0 %v1262
      %1716 = vmatpush.bf16.msra.mxu0 %v1258
      %1717 = vmatmul.bf16.gmra.mxu0 %v346
      %v1718 = vpop.f32.mrf.mxu0
      %v1719 = vadd.f32 %v1670, %v1718
      %v1720 = vpop.f32.mrf.mxu0
      %v1721 = vadd.f32 %v1672, %v1720
      %1722 = vmatmul.bf16.gmra.mxu0 %v353
      %v1723 = vpop.f32.mrf.mxu0
      %v1724 = vadd.f32 %v1675, %v1723
      %v1725 = vpop.f32.mrf.mxu0
      %v1726 = vadd.f32 %v1677, %v1725
      %1727 = vmatmul.bf16.gmra.mxu0 %v360
      %v1728 = vpop.f32.mrf.mxu0
      %v1729 = vadd.f32 %v1680, %v1728
      %v1730 = vpop.f32.mrf.mxu0
      %v1731 = vadd.f32 %v1682, %v1730
      %1732 = vmatmul.bf16.gmra.mxu0 %v367
      %v1733 = vpop.f32.mrf.mxu0
      %v1734 = vadd.f32 %v1685, %v1733
      %v1735 = vpop.f32.mrf.mxu0
      %v1736 = vadd.f32 %v1687, %v1735
      %1737 = vmatmul.bf16.gmra.mxu0 %v374
      %v1738 = vpop.f32.mrf.mxu0
      %v1739 = vadd.f32 %v1690, %v1738
      %v1740 = vpop.f32.mrf.mxu0
      %v1741 = vadd.f32 %v1692, %v1740
      %1742 = vmatmul.bf16.gmra.mxu0 %v381
      %v1743 = vpop.f32.mrf.mxu0
      %v1744 = vadd.f32 %v1695, %v1743
      %v1745 = vpop.f32.mrf.mxu0
      %v1746 = vadd.f32 %v1697, %v1745
      %1747 = vmatmul.bf16.gmra.mxu0 %v388
      %v1748 = vpop.f32.mrf.mxu0
      %v1749 = vadd.f32 %v1700, %v1748
      %v1750 = vpop.f32.mrf.mxu0
      %v1751 = vadd.f32 %v1702, %v1750
      %1752 = vmatmul.bf16.gmra.mxu0 %v395
      %v1753 = vpop.f32.mrf.mxu0
      %v1754 = vadd.f32 %v1705, %v1753
      %v1755 = vpop.f32.mrf.mxu0
      %v1756 = vadd.f32 %v1707, %v1755
      %1757 = vdwg.mxu0
      %1758 = vmatpush.bf16.msra.mxu0 %v1318
      %1759 = vmatpush.bf16.msra.mxu0 %v1314
      %1760 = vmatpush.bf16.msra.mxu0 %v1310
      %1761 = vmatpush.bf16.msra.mxu0 %v1306
      %1762 = vmatpush.bf16.msra.mxu0 %v1302
      %1763 = vmatpush.bf16.msra.mxu0 %v1298
      %1764 = vmatpush.bf16.msra.mxu0 %v1294
      %1765 = vmatpush.bf16.msra.mxu0 %v1290
      %1766 = vmatmul.bf16.gmra.mxu0 %v347
      %v1767 = vpop.f32.mrf.mxu0
      %v1768 = vadd.f32 %v1719, %v1767
      %v1769 = vpop.f32.mrf.mxu0
      %v1770 = vadd.f32 %v1721, %v1769
      %1771 = vmatmul.bf16.gmra.mxu0 %v354
      %v1772 = vpop.f32.mrf.mxu0
      %v1773 = vadd.f32 %v1724, %v1772
      %v1774 = vpop.f32.mrf.mxu0
      %v1775 = vadd.f32 %v1726, %v1774
      %1776 = vmatmul.bf16.gmra.mxu0 %v361
      %v1777 = vpop.f32.mrf.mxu0
      %v1778 = vadd.f32 %v1729, %v1777
      %v1779 = vpop.f32.mrf.mxu0
      %v1780 = vadd.f32 %v1731, %v1779
      %1781 = vmatmul.bf16.gmra.mxu0 %v368
      %v1782 = vpop.f32.mrf.mxu0
      %v1783 = vadd.f32 %v1734, %v1782
      %v1784 = vpop.f32.mrf.mxu0
      %v1785 = vadd.f32 %v1736, %v1784
      %1786 = vmatmul.bf16.gmra.mxu0 %v375
      %v1787 = vpop.f32.mrf.mxu0
      %v1788 = vadd.f32 %v1739, %v1787
      %v1789 = vpop.f32.mrf.mxu0
      %v1790 = vadd.f32 %v1741, %v1789
      %1791 = vmatmul.bf16.gmra.mxu0 %v382
      %v1792 = vpop.f32.mrf.mxu0
      %v1793 = vadd.f32 %v1744, %v1792
      %v1794 = vpop.f32.mrf.mxu0
      %v1795 = vadd.f32 %v1746, %v1794
      %1796 = vmatmul.bf16.gmra.mxu0 %v389
      %v1797 = vpop.f32.mrf.mxu0
      %v1798 = vadd.f32 %v1749, %v1797
      %v1799 = vpop.f32.mrf.mxu0
      %v1800 = vadd.f32 %v1751, %v1799
      %1801 = vmatmul.bf16.gmra.mxu0 %v396
      %v1802 = vpop.f32.mrf.mxu0
      %v1803 = vadd.f32 %v1754, %v1802
      %v1804 = vpop.f32.mrf.mxu0
      %v1805 = vadd.f32 %v1756, %v1804
      %1806 = vdwg.mxu0
      %1807 = vmatpush.bf16.msra.mxu0 %v1350
      %1808 = vmatpush.bf16.msra.mxu0 %v1346
      %1809 = vmatpush.bf16.msra.mxu0 %v1342
      %1810 = vmatpush.bf16.msra.mxu0 %v1338
      %1811 = vmatpush.bf16.msra.mxu0 %v1334
      %1812 = vmatpush.bf16.msra.mxu0 %v1330
      %1813 = vmatpush.bf16.msra.mxu0 %v1326
      %1814 = vmatpush.bf16.msra.mxu0 %v1322
      %1815 = vmatmul.bf16.gmra.mxu0 %v348
      %v1816 = vpop.f32.mrf.mxu0
      %v1817 = vadd.f32 %v1768, %v1816
      %v1818 = vpop.f32.mrf.mxu0
      %v1819 = vadd.f32 %v1770, %v1818
      %1820 = vmatmul.bf16.gmra.mxu0 %v355
      %v1821 = vpop.f32.mrf.mxu0
      %v1822 = vadd.f32 %v1773, %v1821
      %v1823 = vpop.f32.mrf.mxu0
      %v1824 = vadd.f32 %v1775, %v1823
      %1825 = vmatmul.bf16.gmra.mxu0 %v362
      %v1826 = vpop.f32.mrf.mxu0
      %v1827 = vadd.f32 %v1778, %v1826
      %v1828 = vpop.f32.mrf.mxu0
      %v1829 = vadd.f32 %v1780, %v1828
      %1830 = vmatmul.bf16.gmra.mxu0 %v369
      %v1831 = vpop.f32.mrf.mxu0
      %v1832 = vadd.f32 %v1783, %v1831
      %v1833 = vpop.f32.mrf.mxu0
      %v1834 = vadd.f32 %v1785, %v1833
      %1835 = vmatmul.bf16.gmra.mxu0 %v376
      %v1836 = vpop.f32.mrf.mxu0
      %v1837 = vadd.f32 %v1788, %v1836
      %v1838 = vpop.f32.mrf.mxu0
      %v1839 = vadd.f32 %v1790, %v1838
      %1840 = vmatmul.bf16.gmra.mxu0 %v383
      %v1841 = vpop.f32.mrf.mxu0
      %v1842 = vadd.f32 %v1793, %v1841
      %v1843 = vpop.f32.mrf.mxu0
      %v1844 = vadd.f32 %v1795, %v1843
      %1845 = vmatmul.bf16.gmra.mxu0 %v390
      %v1846 = vpop.f32.mrf.mxu0
      %v1847 = vadd.f32 %v1798, %v1846
      %v1848 = vpop.f32.mrf.mxu0
      %v1849 = vadd.f32 %v1800, %v1848
      %1850 = vmatmul.bf16.gmra.mxu0 %v397
      %v1851 = vpop.f32.mrf.mxu0
      %v1852 = vadd.f32 %v1803, %v1851
      %v1853 = vpop.f32.mrf.mxu0
      %v1854 = vadd.f32 %v1805, %v1853
      %1855 = vdwg.mxu0
      %1856 = vmatpush.bf16.msra.mxu0 %v1382
      %1857 = vmatpush.bf16.msra.mxu0 %v1378
      %1858 = vmatpush.bf16.msra.mxu0 %v1374
      %1859 = vmatpush.bf16.msra.mxu0 %v1370
      %1860 = vmatpush.bf16.msra.mxu0 %v1366
      %1861 = vmatpush.bf16.msra.mxu0 %v1362
      %1862 = vmatpush.bf16.msra.mxu0 %v1358
      %1863 = vmatpush.bf16.msra.mxu0 %v1354
      %1864 = vmatmul.bf16.gmra.mxu0 %v349
      %v1865 = vpop.f32.mrf.mxu0
      %v1866 = vadd.f32 %v1817, %v1865
      %v1867 = vpop.f32.mrf.mxu0
      %v1868 = vadd.f32 %v1819, %v1867
      %1869 = vmatmul.bf16.gmra.mxu0 %v356
      %v1870 = vpop.f32.mrf.mxu0
      %v1871 = vadd.f32 %v1822, %v1870
      %v1872 = vpop.f32.mrf.mxu0
      %v1873 = vadd.f32 %v1824, %v1872
      %1874 = vmatmul.bf16.gmra.mxu0 %v363
      %v1875 = vpop.f32.mrf.mxu0
      %v1876 = vadd.f32 %v1827, %v1875
      %v1877 = vpop.f32.mrf.mxu0
      %v1878 = vadd.f32 %v1829, %v1877
      %1879 = vmatmul.bf16.gmra.mxu0 %v370
      %v1880 = vpop.f32.mrf.mxu0
      %v1881 = vadd.f32 %v1832, %v1880
      %v1882 = vpop.f32.mrf.mxu0
      %v1883 = vadd.f32 %v1834, %v1882
      %1884 = vmatmul.bf16.gmra.mxu0 %v377
      %v1885 = vpop.f32.mrf.mxu0
      %v1886 = vadd.f32 %v1837, %v1885
      %v1887 = vpop.f32.mrf.mxu0
      %v1888 = vadd.f32 %v1839, %v1887
      %1889 = vmatmul.bf16.gmra.mxu0 %v384
      %v1890 = vpop.f32.mrf.mxu0
      %v1891 = vadd.f32 %v1842, %v1890
      %v1892 = vpop.f32.mrf.mxu0
      %v1893 = vadd.f32 %v1844, %v1892
      %1894 = vmatmul.bf16.gmra.mxu0 %v391
      %v1895 = vpop.f32.mrf.mxu0
      %v1896 = vadd.f32 %v1847, %v1895
      %v1897 = vpop.f32.mrf.mxu0
      %v1898 = vadd.f32 %v1849, %v1897
      %1899 = vmatmul.bf16.gmra.mxu0 %v398
      %v1900 = vpop.f32.mrf.mxu0
      %v1901 = vadd.f32 %v1852, %v1900
      %v1902 = vpop.f32.mrf.mxu0
      %v1903 = vadd.f32 %v1854, %v1902
      %1904 = vdwg.mxu0
      %1905 = vmatpush.bf16.msra.mxu0 0
      %1906 = vmatpush.bf16.msra.mxu0 0
      %1907 = vmatpush.bf16.msra.mxu0 0
      %1908 = vmatpush.bf16.msra.mxu0 0
      %1909 = vmatpush.bf16.msra.mxu0 0
      %1910 = vmatpush.bf16.msra.mxu0 0
      %1911 = vmatpush.bf16.msra.mxu0 0
      %1912 = vmatpush.bf16.msra.mxu0 %v1386
      %1913 = vmatmul.bf16.gmra.mxu0 %v1588
      %v1914 = vpop.f32.mrf.mxu0
      %v1915 = vadd.f32 %v1866, %v1914
      %v1916 = vpop.f32.mrf.mxu0
      %v1917 = vadd.f32 %v1868, %v1916
      %1918 = vmatmul.bf16.gmra.mxu0 %v1591
      %v1919 = vpop.f32.mrf.mxu0
      %v1920 = vadd.f32 %v1871, %v1919
      %v1921 = vpop.f32.mrf.mxu0
      %v1922 = vadd.f32 %v1873, %v1921
      %1923 = vmatmul.bf16.gmra.mxu0 %v1594
      %v1924 = vpop.f32.mrf.mxu0
      %v1925 = vadd.f32 %v1876, %v1924
      %v1926 = vpop.f32.mrf.mxu0
      %v1927 = vadd.f32 %v1878, %v1926
      %1928 = vmatmul.bf16.gmra.mxu0 %v1597
      %v1929 = vpop.f32.mrf.mxu0
      %v1930 = vadd.f32 %v1881, %v1929
      %v1931 = vpop.f32.mrf.mxu0
      %v1932 = vadd.f32 %v1883, %v1931
      %1933 = vmatmul.bf16.gmra.mxu0 %v1600
      %v1934 = vpop.f32.mrf.mxu0
      %v1935 = vadd.f32 %v1886, %v1934
      %v1936 = vpop.f32.mrf.mxu0
      %v1937 = vadd.f32 %v1888, %v1936
      %1938 = vmatmul.bf16.gmra.mxu0 %v1603
      %v1939 = vpop.f32.mrf.mxu0
      %v1940 = vadd.f32 %v1891, %v1939
      %v1941 = vpop.f32.mrf.mxu0
      %v1942 = vadd.f32 %v1893, %v1941
      %1943 = vmatmul.bf16.gmra.mxu0 %v1606
      %v1944 = vpop.f32.mrf.mxu0
      %v1945 = vadd.f32 %v1896, %v1944
      %v1946 = vpop.f32.mrf.mxu0
      %v1947 = vadd.f32 %v1898, %v1946
      %1948 = vmatmul.bf16.gmra.mxu0 %v1609
      %v1949 = vpop.f32.mrf.mxu0
      %v1950 = vadd.f32 %v1901, %v1949
      %v1951 = vpop.f32.mrf.mxu0
      %v1952 = vadd.f32 %v1903, %v1951
      %1953 = vdwg.mxu0
      %1954 = vmatpush.bf16.msra.mxu0 %v1223
      %1955 = vmatpush.bf16.msra.mxu0 %v1219
      %1956 = vmatpush.bf16.msra.mxu0 %v1215
      %1957 = vmatpush.bf16.msra.mxu0 %v1211
      %1958 = vmatpush.bf16.msra.mxu0 %v1207
      %1959 = vmatpush.bf16.msra.mxu0 %v1203
      %1960 = vmatpush.bf16.msra.mxu0 %v1199
      %1961 = vmatpush.bf16.msra.mxu0 %v1195
      %1962 = vmatmul.bf16.gmra.mxu0 %v344
      %v1963 = vpop.f32.mrf.mxu0
      %v1964 = vadd.f32 %v599, %v1963
      %v1965 = vpop.f32.mrf.mxu0
      %v1966 = vadd.f32 %v599, %v1965
      %1967 = vmatmul.bf16.gmra.mxu0 %v351
      %v1968 = vpop.f32.mrf.mxu0
      %v1969 = vadd.f32 %v599, %v1968
      %v1970 = vpop.f32.mrf.mxu0
      %v1971 = vadd.f32 %v599, %v1970
      %1972 = vmatmul.bf16.gmra.mxu0 %v358
      %v1973 = vpop.f32.mrf.mxu0
      %v1974 = vadd.f32 %v599, %v1973
      %v1975 = vpop.f32.mrf.mxu0
      %v1976 = vadd.f32 %v599, %v1975
      %1977 = vmatmul.bf16.gmra.mxu0 %v365
      %v1978 = vpop.f32.mrf.mxu0
      %v1979 = vadd.f32 %v599, %v1978
      %v1980 = vpop.f32.mrf.mxu0
      %v1981 = vadd.f32 %v599, %v1980
      %1982 = vmatmul.bf16.gmra.mxu0 %v372
      %v1983 = vpop.f32.mrf.mxu0
      %v1984 = vadd.f32 %v599, %v1983
      %v1985 = vpop.f32.mrf.mxu0
      %v1986 = vadd.f32 %v599, %v1985
      %1987 = vmatmul.bf16.gmra.mxu0 %v379
      %v1988 = vpop.f32.mrf.mxu0
      %v1989 = vadd.f32 %v599, %v1988
      %v1990 = vpop.f32.mrf.mxu0
      %v1991 = vadd.f32 %v599, %v1990
      %1992 = vmatmul.bf16.gmra.mxu0 %v386
      %v1993 = vpop.f32.mrf.mxu0
      %v1994 = vadd.f32 %v599, %v1993
      %v1995 = vpop.f32.mrf.mxu0
      %v1996 = vadd.f32 %v599, %v1995
      %1997 = vmatmul.bf16.gmra.mxu0 %v393
      %v1998 = vpop.f32.mrf.mxu0
      %v1999 = vadd.f32 %v599, %v1998
      %v2000 = vpop.f32.mrf.mxu0
      %v2001 = vadd.f32 %v599, %v2000
      %2002 = vdwg.mxu0
      %2003 = vmatpush.bf16.msra.mxu0 %v1255
      %2004 = vmatpush.bf16.msra.mxu0 %v1251
      %2005 = vmatpush.bf16.msra.mxu0 %v1247
      %2006 = vmatpush.bf16.msra.mxu0 %v1243
      %2007 = vmatpush.bf16.msra.mxu0 %v1239
      %2008 = vmatpush.bf16.msra.mxu0 %v1235
      %2009 = vmatpush.bf16.msra.mxu0 %v1231
      %2010 = vmatpush.bf16.msra.mxu0 %v1227
      %2011 = vmatmul.bf16.gmra.mxu0 %v345
      %v2012 = vpop.f32.mrf.mxu0
      %v2013 = vadd.f32 %v1964, %v2012
      %v2014 = vpop.f32.mrf.mxu0
      %v2015 = vadd.f32 %v1966, %v2014
      %2016 = vmatmul.bf16.gmra.mxu0 %v352
      %v2017 = vpop.f32.mrf.mxu0
      %v2018 = vadd.f32 %v1969, %v2017
      %v2019 = vpop.f32.mrf.mxu0
      %v2020 = vadd.f32 %v1971, %v2019
      %2021 = vmatmul.bf16.gmra.mxu0 %v359
      %v2022 = vpop.f32.mrf.mxu0
      %v2023 = vadd.f32 %v1974, %v2022
      %v2024 = vpop.f32.mrf.mxu0
      %v2025 = vadd.f32 %v1976, %v2024
      %2026 = vmatmul.bf16.gmra.mxu0 %v366
      %v2027 = vpop.f32.mrf.mxu0
      %v2028 = vadd.f32 %v1979, %v2027
      %v2029 = vpop.f32.mrf.mxu0
      %v2030 = vadd.f32 %v1981, %v2029
      %2031 = vmatmul.bf16.gmra.mxu0 %v373
      %v2032 = vpop.f32.mrf.mxu0
      %v2033 = vadd.f32 %v1984, %v2032
      %v2034 = vpop.f32.mrf.mxu0
      %v2035 = vadd.f32 %v1986, %v2034
      %2036 = vmatmul.bf16.gmra.mxu0 %v380
      %v2037 = vpop.f32.mrf.mxu0
      %v2038 = vadd.f32 %v1989, %v2037
      %v2039 = vpop.f32.mrf.mxu0
      %v2040 = vadd.f32 %v1991, %v2039
      %2041 = vmatmul.bf16.gmra.mxu0 %v387
      %v2042 = vpop.f32.mrf.mxu0
      %v2043 = vadd.f32 %v1994, %v2042
      %v2044 = vpop.f32.mrf.mxu0
      %v2045 = vadd.f32 %v1996, %v2044
      %2046 = vmatmul.bf16.gmra.mxu0 %v394
      %v2047 = vpop.f32.mrf.mxu0
      %v2048 = vadd.f32 %v1999, %v2047
      %v2049 = vpop.f32.mrf.mxu0
      %v2050 = vadd.f32 %v2001, %v2049
      %2051 = vdwg.mxu0
      %2052 = vmatpush.bf16.msra.mxu0 %v1287
      %2053 = vmatpush.bf16.msra.mxu0 %v1283
      %2054 = vmatpush.bf16.msra.mxu0 %v1279
      %2055 = vmatpush.bf16.msra.mxu0 %v1275
      %2056 = vmatpush.bf16.msra.mxu0 %v1271
      %2057 = vmatpush.bf16.msra.mxu0 %v1267
      %2058 = vmatpush.bf16.msra.mxu0 %v1263
      %2059 = vmatpush.bf16.msra.mxu0 %v1259
      %2060 = vmatmul.bf16.gmra.mxu0 %v346
      %v2061 = vpop.f32.mrf.mxu0
      %v2062 = vadd.f32 %v2013, %v2061
      %v2063 = vpop.f32.mrf.mxu0
      %v2064 = vadd.f32 %v2015, %v2063
      %2065 = vmatmul.bf16.gmra.mxu0 %v353
      %v2066 = vpop.f32.mrf.mxu0
      %v2067 = vadd.f32 %v2018, %v2066
      %v2068 = vpop.f32.mrf.mxu0
      %v2069 = vadd.f32 %v2020, %v2068
      %2070 = vmatmul.bf16.gmra.mxu0 %v360
      %v2071 = vpop.f32.mrf.mxu0
      %v2072 = vadd.f32 %v2023, %v2071
      %v2073 = vpop.f32.mrf.mxu0
      %v2074 = vadd.f32 %v2025, %v2073
      %2075 = vmatmul.bf16.gmra.mxu0 %v367
      %v2076 = vpop.f32.mrf.mxu0
      %v2077 = vadd.f32 %v2028, %v2076
      %v2078 = vpop.f32.mrf.mxu0
      %v2079 = vadd.f32 %v2030, %v2078
      %2080 = vmatmul.bf16.gmra.mxu0 %v374
      %v2081 = vpop.f32.mrf.mxu0
      %v2082 = vadd.f32 %v2033, %v2081
      %v2083 = vpop.f32.mrf.mxu0
      %v2084 = vadd.f32 %v2035, %v2083
      %2085 = vmatmul.bf16.gmra.mxu0 %v381
      %v2086 = vpop.f32.mrf.mxu0
      %v2087 = vadd.f32 %v2038, %v2086
      %v2088 = vpop.f32.mrf.mxu0
      %v2089 = vadd.f32 %v2040, %v2088
      %2090 = vmatmul.bf16.gmra.mxu0 %v388
      %v2091 = vpop.f32.mrf.mxu0
      %v2092 = vadd.f32 %v2043, %v2091
      %v2093 = vpop.f32.mrf.mxu0
      %v2094 = vadd.f32 %v2045, %v2093
      %2095 = vmatmul.bf16.gmra.mxu0 %v395
      %v2096 = vpop.f32.mrf.mxu0
      %v2097 = vadd.f32 %v2048, %v2096
      %v2098 = vpop.f32.mrf.mxu0
      %v2099 = vadd.f32 %v2050, %v2098
      %2100 = vdwg.mxu0
      %2101 = vmatpush.bf16.msra.mxu0 %v1319
      %2102 = vmatpush.bf16.msra.mxu0 %v1315
      %2103 = vmatpush.bf16.msra.mxu0 %v1311
      %2104 = vmatpush.bf16.msra.mxu0 %v1307
      %2105 = vmatpush.bf16.msra.mxu0 %v1303
      %2106 = vmatpush.bf16.msra.mxu0 %v1299
      %2107 = vmatpush.bf16.msra.mxu0 %v1295
      %2108 = vmatpush.bf16.msra.mxu0 %v1291
      %2109 = vmatmul.bf16.gmra.mxu0 %v347
      %v2110 = vpop.f32.mrf.mxu0
      %v2111 = vadd.f32 %v2062, %v2110
      %v2112 = vpop.f32.mrf.mxu0
      %v2113 = vadd.f32 %v2064, %v2112
      %2114 = vmatmul.bf16.gmra.mxu0 %v354
      %v2115 = vpop.f32.mrf.mxu0
      %v2116 = vadd.f32 %v2067, %v2115
      %v2117 = vpop.f32.mrf.mxu0
      %v2118 = vadd.f32 %v2069, %v2117
      %2119 = vmatmul.bf16.gmra.mxu0 %v361
      %v2120 = vpop.f32.mrf.mxu0
      %v2121 = vadd.f32 %v2072, %v2120
      %v2122 = vpop.f32.mrf.mxu0
      %v2123 = vadd.f32 %v2074, %v2122
      %2124 = vmatmul.bf16.gmra.mxu0 %v368
      %v2125 = vpop.f32.mrf.mxu0
      %v2126 = vadd.f32 %v2077, %v2125
      %v2127 = vpop.f32.mrf.mxu0
      %v2128 = vadd.f32 %v2079, %v2127
      %2129 = vmatmul.bf16.gmra.mxu0 %v375
      %v2130 = vpop.f32.mrf.mxu0
      %v2131 = vadd.f32 %v2082, %v2130
      %v2132 = vpop.f32.mrf.mxu0
      %v2133 = vadd.f32 %v2084, %v2132
      %2134 = vmatmul.bf16.gmra.mxu0 %v382
      %v2135 = vpop.f32.mrf.mxu0
      %v2136 = vadd.f32 %v2087, %v2135
      %v2137 = vpop.f32.mrf.mxu0
      %v2138 = vadd.f32 %v2089, %v2137
      %2139 = vmatmul.bf16.gmra.mxu0 %v389
      %v2140 = vpop.f32.mrf.mxu0
      %v2141 = vadd.f32 %v2092, %v2140
      %v2142 = vpop.f32.mrf.mxu0
      %v2143 = vadd.f32 %v2094, %v2142
      %2144 = vmatmul.bf16.gmra.mxu0 %v396
      %v2145 = vpop.f32.mrf.mxu0
      %v2146 = vadd.f32 %v2097, %v2145
      %v2147 = vpop.f32.mrf.mxu0
      %v2148 = vadd.f32 %v2099, %v2147
      %2149 = vdwg.mxu0
      %2150 = vmatpush.bf16.msra.mxu0 %v1351
      %2151 = vmatpush.bf16.msra.mxu0 %v1347
      %2152 = vmatpush.bf16.msra.mxu0 %v1343
      %2153 = vmatpush.bf16.msra.mxu0 %v1339
      %2154 = vmatpush.bf16.msra.mxu0 %v1335
      %2155 = vmatpush.bf16.msra.mxu0 %v1331
      %2156 = vmatpush.bf16.msra.mxu0 %v1327
      %2157 = vmatpush.bf16.msra.mxu0 %v1323
      %2158 = vmatmul.bf16.gmra.mxu0 %v348
      %v2159 = vpop.f32.mrf.mxu0
      %v2160 = vadd.f32 %v2111, %v2159
      %v2161 = vpop.f32.mrf.mxu0
      %v2162 = vadd.f32 %v2113, %v2161
      %2163 = vmatmul.bf16.gmra.mxu0 %v355
      %v2164 = vpop.f32.mrf.mxu0
      %v2165 = vadd.f32 %v2116, %v2164
      %v2166 = vpop.f32.mrf.mxu0
      %v2167 = vadd.f32 %v2118, %v2166
      %2168 = vmatmul.bf16.gmra.mxu0 %v362
      %v2169 = vpop.f32.mrf.mxu0
      %v2170 = vadd.f32 %v2121, %v2169
      %v2171 = vpop.f32.mrf.mxu0
      %v2172 = vadd.f32 %v2123, %v2171
      %2173 = vmatmul.bf16.gmra.mxu0 %v369
      %v2174 = vpop.f32.mrf.mxu0
      %v2175 = vadd.f32 %v2126, %v2174
      %v2176 = vpop.f32.mrf.mxu0
      %v2177 = vadd.f32 %v2128, %v2176
      %2178 = vmatmul.bf16.gmra.mxu0 %v376
      %v2179 = vpop.f32.mrf.mxu0
      %v2180 = vadd.f32 %v2131, %v2179
      %v2181 = vpop.f32.mrf.mxu0
      %v2182 = vadd.f32 %v2133, %v2181
      %2183 = vmatmul.bf16.gmra.mxu0 %v383
      %v2184 = vpop.f32.mrf.mxu0
      %v2185 = vadd.f32 %v2136, %v2184
      %v2186 = vpop.f32.mrf.mxu0
      %v2187 = vadd.f32 %v2138, %v2186
      %2188 = vmatmul.bf16.gmra.mxu0 %v390
      %v2189 = vpop.f32.mrf.mxu0
      %v2190 = vadd.f32 %v2141, %v2189
      %v2191 = vpop.f32.mrf.mxu0
      %v2192 = vadd.f32 %v2143, %v2191
      %2193 = vmatmul.bf16.gmra.mxu0 %v397
      %v2194 = vpop.f32.mrf.mxu0
      %v2195 = vadd.f32 %v2146, %v2194
      %v2196 = vpop.f32.mrf.mxu0
      %v2197 = vadd.f32 %v2148, %v2196
      %2198 = vdwg.mxu0
      %2199 = vmatpush.bf16.msra.mxu0 %v1383
      %2200 = vmatpush.bf16.msra.mxu0 %v1379
      %2201 = vmatpush.bf16.msra.mxu0 %v1375
      %2202 = vmatpush.bf16.msra.mxu0 %v1371
      %2203 = vmatpush.bf16.msra.mxu0 %v1367
      %2204 = vmatpush.bf16.msra.mxu0 %v1363
      %2205 = vmatpush.bf16.msra.mxu0 %v1359
      %2206 = vmatpush.bf16.msra.mxu0 %v1355
      %2207 = vmatmul.bf16.gmra.mxu0 %v349
      %v2208 = vpop.f32.mrf.mxu0
      %v2209 = vadd.f32 %v2160, %v2208
      %v2210 = vpop.f32.mrf.mxu0
      %v2211 = vadd.f32 %v2162, %v2210
      %2212 = vmatmul.bf16.gmra.mxu0 %v356
      %v2213 = vpop.f32.mrf.mxu0
      %v2214 = vadd.f32 %v2165, %v2213
      %v2215 = vpop.f32.mrf.mxu0
      %v2216 = vadd.f32 %v2167, %v2215
      %2217 = vmatmul.bf16.gmra.mxu0 %v363
      %v2218 = vpop.f32.mrf.mxu0
      %v2219 = vadd.f32 %v2170, %v2218
      %v2220 = vpop.f32.mrf.mxu0
      %v2221 = vadd.f32 %v2172, %v2220
      %2222 = vmatmul.bf16.gmra.mxu0 %v370
      %v2223 = vpop.f32.mrf.mxu0
      %v2224 = vadd.f32 %v2175, %v2223
      %v2225 = vpop.f32.mrf.mxu0
      %v2226 = vadd.f32 %v2177, %v2225
      %2227 = vmatmul.bf16.gmra.mxu0 %v377
      %v2228 = vpop.f32.mrf.mxu0
      %v2229 = vadd.f32 %v2180, %v2228
      %v2230 = vpop.f32.mrf.mxu0
      %v2231 = vadd.f32 %v2182, %v2230
      %2232 = vmatmul.bf16.gmra.mxu0 %v384
      %v2233 = vpop.f32.mrf.mxu0
      %v2234 = vadd.f32 %v2185, %v2233
      %v2235 = vpop.f32.mrf.mxu0
      %v2236 = vadd.f32 %v2187, %v2235
      %2237 = vmatmul.bf16.gmra.mxu0 %v391
      %v2238 = vpop.f32.mrf.mxu0
      %v2239 = vadd.f32 %v2190, %v2238
      %v2240 = vpop.f32.mrf.mxu0
      %v2241 = vadd.f32 %v2192, %v2240
      %2242 = vmatmul.bf16.gmra.mxu0 %v398
      %v2243 = vpop.f32.mrf.mxu0
      %v2244 = vadd.f32 %v2195, %v2243
      %v2245 = vpop.f32.mrf.mxu0
      %v2246 = vadd.f32 %v2197, %v2245
      %2247 = vdwg.mxu0
      %2248 = vmatpush.bf16.msra.mxu0 0
      %2249 = vmatpush.bf16.msra.mxu0 0
      %2250 = vmatpush.bf16.msra.mxu0 0
      %2251 = vmatpush.bf16.msra.mxu0 0
      %2252 = vmatpush.bf16.msra.mxu0 0
      %2253 = vmatpush.bf16.msra.mxu0 0
      %2254 = vmatpush.bf16.msra.mxu0 0
      %2255 = vmatpush.bf16.msra.mxu0 %v1387
      %2256 = vmatmul.bf16.gmra.mxu0 %v1588
      %v2257 = vpop.f32.mrf.mxu0
      %v2258 = vadd.f32 %v2209, %v2257
      %v2259 = vpop.f32.mrf.mxu0
      %v2260 = vadd.f32 %v2211, %v2259
      %2261 = vmatmul.bf16.gmra.mxu0 %v1591
      %v2262 = vpop.f32.mrf.mxu0
      %v2263 = vadd.f32 %v2214, %v2262
      %v2264 = vpop.f32.mrf.mxu0
      %v2265 = vadd.f32 %v2216, %v2264
      %2266 = vmatmul.bf16.gmra.mxu0 %v1594
      %v2267 = vpop.f32.mrf.mxu0
      %v2268 = vadd.f32 %v2219, %v2267
      %v2269 = vpop.f32.mrf.mxu0
      %v2270 = vadd.f32 %v2221, %v2269
      %2271 = vmatmul.bf16.gmra.mxu0 %v1597
      %v2272 = vpop.f32.mrf.mxu0
      %v2273 = vadd.f32 %v2224, %v2272
      %v2274 = vpop.f32.mrf.mxu0
      %v2275 = vadd.f32 %v2226, %v2274
      %2276 = vmatmul.bf16.gmra.mxu0 %v1600
      %v2277 = vpop.f32.mrf.mxu0
      %v2278 = vadd.f32 %v2229, %v2277
      %v2279 = vpop.f32.mrf.mxu0
      %v2280 = vadd.f32 %v2231, %v2279
      %2281 = vmatmul.bf16.gmra.mxu0 %v1603
      %v2282 = vpop.f32.mrf.mxu0
      %v2283 = vadd.f32 %v2234, %v2282
      %v2284 = vpop.f32.mrf.mxu0
      %v2285 = vadd.f32 %v2236, %v2284
      %2286 = vmatmul.bf16.gmra.mxu0 %v1606
      %v2287 = vpop.f32.mrf.mxu0
      %v2288 = vadd.f32 %v2239, %v2287
      %v2289 = vpop.f32.mrf.mxu0
      %v2290 = vadd.f32 %v2241, %v2289
      %2291 = vmatmul.bf16.gmra.mxu0 %v1609
      %v2292 = vpop.f32.mrf.mxu0
      %v2293 = vadd.f32 %v2244, %v2292
      %v2294 = vpop.f32.mrf.mxu0
      %v2295 = vadd.f32 %v2246, %v2294
      %2296 = vdwg.mxu0
      %2297 = vmatpush.bf16.msra.mxu0 %v1224
      %2298 = vmatpush.bf16.msra.mxu0 %v1220
      %2299 = vmatpush.bf16.msra.mxu0 %v1216
      %2300 = vmatpush.bf16.msra.mxu0 %v1212
      %2301 = vmatpush.bf16.msra.mxu0 %v1208
      %2302 = vmatpush.bf16.msra.mxu0 %v1204
      %2303 = vmatpush.bf16.msra.mxu0 %v1200
      %2304 = vmatpush.bf16.msra.mxu0 %v1196
      %2305 = vmatmul.bf16.gmra.mxu0 %v344
      %v2306 = vpop.f32.mrf.mxu0
      %v2307 = vadd.f32 %v600, %v2306
      %v2308 = vpop.f32.mrf.mxu0
      %v2309 = vadd.f32 %v600, %v2308
      %2310 = vmatmul.bf16.gmra.mxu0 %v351
      %v2311 = vpop.f32.mrf.mxu0
      %v2312 = vadd.f32 %v600, %v2311
      %v2313 = vpop.f32.mrf.mxu0
      %v2314 = vadd.f32 %v600, %v2313
      %2315 = vmatmul.bf16.gmra.mxu0 %v358
      %v2316 = vpop.f32.mrf.mxu0
      %v2317 = vadd.f32 %v600, %v2316
      %v2318 = vpop.f32.mrf.mxu0
      %v2319 = vadd.f32 %v600, %v2318
      %2320 = vmatmul.bf16.gmra.mxu0 %v365
      %v2321 = vpop.f32.mrf.mxu0
      %v2322 = vadd.f32 %v600, %v2321
      %v2323 = vpop.f32.mrf.mxu0
      %v2324 = vadd.f32 %v600, %v2323
      %2325 = vmatmul.bf16.gmra.mxu0 %v372
      %v2326 = vpop.f32.mrf.mxu0
      %v2327 = vadd.f32 %v600, %v2326
      %v2328 = vpop.f32.mrf.mxu0
      %v2329 = vadd.f32 %v600, %v2328
      %2330 = vmatmul.bf16.gmra.mxu0 %v379
      %v2331 = vpop.f32.mrf.mxu0
      %v2332 = vadd.f32 %v600, %v2331
      %v2333 = vpop.f32.mrf.mxu0
      %v2334 = vadd.f32 %v600, %v2333
      %2335 = vmatmul.bf16.gmra.mxu0 %v386
      %v2336 = vpop.f32.mrf.mxu0
      %v2337 = vadd.f32 %v600, %v2336
      %v2338 = vpop.f32.mrf.mxu0
      %v2339 = vadd.f32 %v600, %v2338
      %2340 = vmatmul.bf16.gmra.mxu0 %v393
      %v2341 = vpop.f32.mrf.mxu0
      %v2342 = vadd.f32 %v600, %v2341
      %v2343 = vpop.f32.mrf.mxu0
      %v2344 = vadd.f32 %v600, %v2343
      %2345 = vdwg.mxu0
      %2346 = vmatpush.bf16.msra.mxu0 %v1256
      %2347 = vmatpush.bf16.msra.mxu0 %v1252
      %2348 = vmatpush.bf16.msra.mxu0 %v1248
      %2349 = vmatpush.bf16.msra.mxu0 %v1244
      %2350 = vmatpush.bf16.msra.mxu0 %v1240
      %2351 = vmatpush.bf16.msra.mxu0 %v1236
      %2352 = vmatpush.bf16.msra.mxu0 %v1232
      %2353 = vmatpush.bf16.msra.mxu0 %v1228
      %2354 = vmatmul.bf16.gmra.mxu0 %v345
      %v2355 = vpop.f32.mrf.mxu0
      %v2356 = vadd.f32 %v2307, %v2355
      %v2357 = vpop.f32.mrf.mxu0
      %v2358 = vadd.f32 %v2309, %v2357
      %2359 = vmatmul.bf16.gmra.mxu0 %v352
      %v2360 = vpop.f32.mrf.mxu0
      %v2361 = vadd.f32 %v2312, %v2360
      %v2362 = vpop.f32.mrf.mxu0
      %v2363 = vadd.f32 %v2314, %v2362
      %2364 = vmatmul.bf16.gmra.mxu0 %v359
      %v2365 = vpop.f32.mrf.mxu0
      %v2366 = vadd.f32 %v2317, %v2365
      %v2367 = vpop.f32.mrf.mxu0
      %v2368 = vadd.f32 %v2319, %v2367
      %2369 = vmatmul.bf16.gmra.mxu0 %v366
      %v2370 = vpop.f32.mrf.mxu0
      %v2371 = vadd.f32 %v2322, %v2370
      %v2372 = vpop.f32.mrf.mxu0
      %v2373 = vadd.f32 %v2324, %v2372
      %2374 = vmatmul.bf16.gmra.mxu0 %v373
      %v2375 = vpop.f32.mrf.mxu0
      %v2376 = vadd.f32 %v2327, %v2375
      %v2377 = vpop.f32.mrf.mxu0
      %v2378 = vadd.f32 %v2329, %v2377
      %2379 = vmatmul.bf16.gmra.mxu0 %v380
      %v2380 = vpop.f32.mrf.mxu0
      %v2381 = vadd.f32 %v2332, %v2380
      %v2382 = vpop.f32.mrf.mxu0
      %v2383 = vadd.f32 %v2334, %v2382
      %2384 = vmatmul.bf16.gmra.mxu0 %v387
      %v2385 = vpop.f32.mrf.mxu0
      %v2386 = vadd.f32 %v2337, %v2385
      %v2387 = vpop.f32.mrf.mxu0
      %v2388 = vadd.f32 %v2339, %v2387
      %2389 = vmatmul.bf16.gmra.mxu0 %v394
      %v2390 = vpop.f32.mrf.mxu0
      %v2391 = vadd.f32 %v2342, %v2390
      %v2392 = vpop.f32.mrf.mxu0
      %v2393 = vadd.f32 %v2344, %v2392
      %2394 = vdwg.mxu0
      %2395 = vmatpush.bf16.msra.mxu0 %v1288
      %2396 = vmatpush.bf16.msra.mxu0 %v1284
      %2397 = vmatpush.bf16.msra.mxu0 %v1280
      %2398 = vmatpush.bf16.msra.mxu0 %v1276
      %2399 = vmatpush.bf16.msra.mxu0 %v1272
      %2400 = vmatpush.bf16.msra.mxu0 %v1268
      %2401 = vmatpush.bf16.msra.mxu0 %v1264
      %2402 = vmatpush.bf16.msra.mxu0 %v1260
      %2403 = vmatmul.bf16.gmra.mxu0 %v346
      %v2404 = vpop.f32.mrf.mxu0
      %v2405 = vadd.f32 %v2356, %v2404
      %v2406 = vpop.f32.mrf.mxu0
      %v2407 = vadd.f32 %v2358, %v2406
      %2408 = vmatmul.bf16.gmra.mxu0 %v353
      %v2409 = vpop.f32.mrf.mxu0
      %v2410 = vadd.f32 %v2361, %v2409
      %v2411 = vpop.f32.mrf.mxu0
      %v2412 = vadd.f32 %v2363, %v2411
      %2413 = vmatmul.bf16.gmra.mxu0 %v360
      %v2414 = vpop.f32.mrf.mxu0
      %v2415 = vadd.f32 %v2366, %v2414
      %v2416 = vpop.f32.mrf.mxu0
      %v2417 = vadd.f32 %v2368, %v2416
      %2418 = vmatmul.bf16.gmra.mxu0 %v367
      %v2419 = vpop.f32.mrf.mxu0
      %v2420 = vadd.f32 %v2371, %v2419
      %v2421 = vpop.f32.mrf.mxu0
      %v2422 = vadd.f32 %v2373, %v2421
      %2423 = vmatmul.bf16.gmra.mxu0 %v374
      %v2424 = vpop.f32.mrf.mxu0
      %v2425 = vadd.f32 %v2376, %v2424
      %v2426 = vpop.f32.mrf.mxu0
      %v2427 = vadd.f32 %v2378, %v2426
      %2428 = vmatmul.bf16.gmra.mxu0 %v381
      %v2429 = vpop.f32.mrf.mxu0
      %v2430 = vadd.f32 %v2381, %v2429
      %v2431 = vpop.f32.mrf.mxu0
      %v2432 = vadd.f32 %v2383, %v2431
      %2433 = vmatmul.bf16.gmra.mxu0 %v388
      %v2434 = vpop.f32.mrf.mxu0
      %v2435 = vadd.f32 %v2386, %v2434
      %v2436 = vpop.f32.mrf.mxu0
      %v2437 = vadd.f32 %v2388, %v2436
      %2438 = vmatmul.bf16.gmra.mxu0 %v395
      %v2439 = vpop.f32.mrf.mxu0
      %v2440 = vadd.f32 %v2391, %v2439
      %v2441 = vpop.f32.mrf.mxu0
      %v2442 = vadd.f32 %v2393, %v2441
      %2443 = vdwg.mxu0
      %2444 = vmatpush.bf16.msra.mxu0 %v1320
      %2445 = vmatpush.bf16.msra.mxu0 %v1316
      %2446 = vmatpush.bf16.msra.mxu0 %v1312
      %2447 = vmatpush.bf16.msra.mxu0 %v1308
      %2448 = vmatpush.bf16.msra.mxu0 %v1304
      %2449 = vmatpush.bf16.msra.mxu0 %v1300
      %2450 = vmatpush.bf16.msra.mxu0 %v1296
      %2451 = vmatpush.bf16.msra.mxu0 %v1292
      %2452 = vmatmul.bf16.gmra.mxu0 %v347
      %v2453 = vpop.f32.mrf.mxu0
      %v2454 = vadd.f32 %v2405, %v2453
      %v2455 = vpop.f32.mrf.mxu0
      %v2456 = vadd.f32 %v2407, %v2455
      %2457 = vmatmul.bf16.gmra.mxu0 %v354
      %v2458 = vpop.f32.mrf.mxu0
      %v2459 = vadd.f32 %v2410, %v2458
      %v2460 = vpop.f32.mrf.mxu0
      %v2461 = vadd.f32 %v2412, %v2460
      %2462 = vmatmul.bf16.gmra.mxu0 %v361
      %v2463 = vpop.f32.mrf.mxu0
      %v2464 = vadd.f32 %v2415, %v2463
      %v2465 = vpop.f32.mrf.mxu0
      %v2466 = vadd.f32 %v2417, %v2465
      %2467 = vmatmul.bf16.gmra.mxu0 %v368
      %v2468 = vpop.f32.mrf.mxu0
      %v2469 = vadd.f32 %v2420, %v2468
      %v2470 = vpop.f32.mrf.mxu0
      %v2471 = vadd.f32 %v2422, %v2470
      %2472 = vmatmul.bf16.gmra.mxu0 %v375
      %v2473 = vpop.f32.mrf.mxu0
      %v2474 = vadd.f32 %v2425, %v2473
      %v2475 = vpop.f32.mrf.mxu0
      %v2476 = vadd.f32 %v2427, %v2475
      %2477 = vmatmul.bf16.gmra.mxu0 %v382
      %v2478 = vpop.f32.mrf.mxu0
      %v2479 = vadd.f32 %v2430, %v2478
      %v2480 = vpop.f32.mrf.mxu0
      %v2481 = vadd.f32 %v2432, %v2480
      %2482 = vmatmul.bf16.gmra.mxu0 %v389
      %v2483 = vpop.f32.mrf.mxu0
      %v2484 = vadd.f32 %v2435, %v2483
      %v2485 = vpop.f32.mrf.mxu0
      %v2486 = vadd.f32 %v2437, %v2485
      %2487 = vmatmul.bf16.gmra.mxu0 %v396
      %v2488 = vpop.f32.mrf.mxu0
      %v2489 = vadd.f32 %v2440, %v2488
      %v2490 = vpop.f32.mrf.mxu0
      %v2491 = vadd.f32 %v2442, %v2490
      %2492 = vdwg.mxu0
      %2493 = vmatpush.bf16.msra.mxu0 %v1352
      %2494 = vmatpush.bf16.msra.mxu0 %v1348
      %2495 = vmatpush.bf16.msra.mxu0 %v1344
      %2496 = vmatpush.bf16.msra.mxu0 %v1340
      %2497 = vmatpush.bf16.msra.mxu0 %v1336
      %2498 = vmatpush.bf16.msra.mxu0 %v1332
      %2499 = vmatpush.bf16.msra.mxu0 %v1328
      %2500 = vmatpush.bf16.msra.mxu0 %v1324
      %2501 = vmatmul.bf16.gmra.mxu0 %v348
      %v2502 = vpop.f32.mrf.mxu0
      %v2503 = vadd.f32 %v2454, %v2502
      %v2504 = vpop.f32.mrf.mxu0
      %v2505 = vadd.f32 %v2456, %v2504
      %2506 = vmatmul.bf16.gmra.mxu0 %v355
      %v2507 = vpop.f32.mrf.mxu0
      %v2508 = vadd.f32 %v2459, %v2507
      %v2509 = vpop.f32.mrf.mxu0
      %v2510 = vadd.f32 %v2461, %v2509
      %2511 = vmatmul.bf16.gmra.mxu0 %v362
      %v2512 = vpop.f32.mrf.mxu0
      %v2513 = vadd.f32 %v2464, %v2512
      %v2514 = vpop.f32.mrf.mxu0
      %v2515 = vadd.f32 %v2466, %v2514
      %2516 = vmatmul.bf16.gmra.mxu0 %v369
      %v2517 = vpop.f32.mrf.mxu0
      %v2518 = vadd.f32 %v2469, %v2517
      %v2519 = vpop.f32.mrf.mxu0
      %v2520 = vadd.f32 %v2471, %v2519
      %2521 = vmatmul.bf16.gmra.mxu0 %v376
      %v2522 = vpop.f32.mrf.mxu0
      %v2523 = vadd.f32 %v2474, %v2522
      %v2524 = vpop.f32.mrf.mxu0
      %v2525 = vadd.f32 %v2476, %v2524
      %2526 = vmatmul.bf16.gmra.mxu0 %v383
      %v2527 = vpop.f32.mrf.mxu0
      %v2528 = vadd.f32 %v2479, %v2527
      %v2529 = vpop.f32.mrf.mxu0
      %v2530 = vadd.f32 %v2481, %v2529
      %2531 = vmatmul.bf16.gmra.mxu0 %v390
      %v2532 = vpop.f32.mrf.mxu0
      %v2533 = vadd.f32 %v2484, %v2532
      %v2534 = vpop.f32.mrf.mxu0
      %v2535 = vadd.f32 %v2486, %v2534
      %2536 = vmatmul.bf16.gmra.mxu0 %v397
      %v2537 = vpop.f32.mrf.mxu0
      %v2538 = vadd.f32 %v2489, %v2537
      %v2539 = vpop.f32.mrf.mxu0
      %v2540 = vadd.f32 %v2491, %v2539
      %2541 = vdwg.mxu0
      %2542 = vmatpush.bf16.msra.mxu0 %v1384
      %2543 = vmatpush.bf16.msra.mxu0 %v1380
      %2544 = vmatpush.bf16.msra.mxu0 %v1376
      %2545 = vmatpush.bf16.msra.mxu0 %v1372
      %2546 = vmatpush.bf16.msra.mxu0 %v1368
      %2547 = vmatpush.bf16.msra.mxu0 %v1364
      %2548 = vmatpush.bf16.msra.mxu0 %v1360
      %2549 = vmatpush.bf16.msra.mxu0 %v1356
      %2550 = vmatmul.bf16.gmra.mxu0 %v349
      %v2551 = vpop.f32.mrf.mxu0
      %v2552 = vadd.f32 %v2503, %v2551
      %v2553 = vpop.f32.mrf.mxu0
      %v2554 = vadd.f32 %v2505, %v2553
      %2555 = vmatmul.bf16.gmra.mxu0 %v356
      %v2556 = vpop.f32.mrf.mxu0
      %v2557 = vadd.f32 %v2508, %v2556
      %v2558 = vpop.f32.mrf.mxu0
      %v2559 = vadd.f32 %v2510, %v2558
      %2560 = vmatmul.bf16.gmra.mxu0 %v363
      %v2561 = vpop.f32.mrf.mxu0
      %v2562 = vadd.f32 %v2513, %v2561
      %v2563 = vpop.f32.mrf.mxu0
      %v2564 = vadd.f32 %v2515, %v2563
      %2565 = vmatmul.bf16.gmra.mxu0 %v370
      %v2566 = vpop.f32.mrf.mxu0
      %v2567 = vadd.f32 %v2518, %v2566
      %v2568 = vpop.f32.mrf.mxu0
      %v2569 = vadd.f32 %v2520, %v2568
      %2570 = vmatmul.bf16.gmra.mxu0 %v377
      %v2571 = vpop.f32.mrf.mxu0
      %v2572 = vadd.f32 %v2523, %v2571
      %v2573 = vpop.f32.mrf.mxu0
      %v2574 = vadd.f32 %v2525, %v2573
      %2575 = vmatmul.bf16.gmra.mxu0 %v384
      %v2576 = vpop.f32.mrf.mxu0
      %v2577 = vadd.f32 %v2528, %v2576
      %v2578 = vpop.f32.mrf.mxu0
      %v2579 = vadd.f32 %v2530, %v2578
      %2580 = vmatmul.bf16.gmra.mxu0 %v391
      %v2581 = vpop.f32.mrf.mxu0
      %v2582 = vadd.f32 %v2533, %v2581
      %v2583 = vpop.f32.mrf.mxu0
      %v2584 = vadd.f32 %v2535, %v2583
      %2585 = vmatmul.bf16.gmra.mxu0 %v398
      %v2586 = vpop.f32.mrf.mxu0
      %v2587 = vadd.f32 %v2538, %v2586
      %v2588 = vpop.f32.mrf.mxu0
      %v2589 = vadd.f32 %v2540, %v2588
      %2590 = vdwg.mxu0
      %2591 = vmatpush.bf16.msra.mxu0 0
      %2592 = vmatpush.bf16.msra.mxu0 0
      %2593 = vmatpush.bf16.msra.mxu0 0
      %2594 = vmatpush.bf16.msra.mxu0 0
      %2595 = vmatpush.bf16.msra.mxu0 0
      %2596 = vmatpush.bf16.msra.mxu0 0
      %2597 = vmatpush.bf16.msra.mxu0 0
      %2598 = vmatpush.bf16.msra.mxu0 %v1388
      %2599 = vmatmul.bf16.gmra.mxu0 %v1588
      %v2600 = vpop.f32.mrf.mxu0
      %v2601 = vadd.f32 %v2552, %v2600
      %v2602 = vpop.f32.mrf.mxu0
      %v2603 = vadd.f32 %v2554, %v2602
      %2604 = vmatmul.bf16.gmra.mxu0 %v1591
      %v2605 = vpop.f32.mrf.mxu0
      %v2606 = vadd.f32 %v2557, %v2605
      %v2607 = vpop.f32.mrf.mxu0
      %v2608 = vadd.f32 %v2559, %v2607
      %2609 = vmatmul.bf16.gmra.mxu0 %v1594
      %v2610 = vpop.f32.mrf.mxu0
      %v2611 = vadd.f32 %v2562, %v2610
      %v2612 = vpop.f32.mrf.mxu0
      %v2613 = vadd.f32 %v2564, %v2612
      %2614 = vmatmul.bf16.gmra.mxu0 %v1597
      %v2615 = vpop.f32.mrf.mxu0
      %v2616 = vadd.f32 %v2567, %v2615
      %v2617 = vpop.f32.mrf.mxu0
      %v2618 = vadd.f32 %v2569, %v2617
      %2619 = vmatmul.bf16.gmra.mxu0 %v1600
      %v2620 = vpop.f32.mrf.mxu0
      %v2621 = vadd.f32 %v2572, %v2620
      %v2622 = vpop.f32.mrf.mxu0
      %v2623 = vadd.f32 %v2574, %v2622
      %2624 = vmatmul.bf16.gmra.mxu0 %v1603
      %v2625 = vpop.f32.mrf.mxu0
      %v2626 = vadd.f32 %v2577, %v2625
      %v2627 = vpop.f32.mrf.mxu0
      %v2628 = vadd.f32 %v2579, %v2627
      %2629 = vmatmul.bf16.gmra.mxu0 %v1606
      %v2630 = vpop.f32.mrf.mxu0
      %v2631 = vadd.f32 %v2582, %v2630
      %v2632 = vpop.f32.mrf.mxu0
      %v2633 = vadd.f32 %v2584, %v2632
      %2634 = vmatmul.bf16.gmra.mxu0 %v1609
      %v2635 = vpop.f32.mrf.mxu0
      %v2636 = vadd.f32 %v2587, %v2635
      %v2637 = vpop.f32.mrf.mxu0
      %v2638 = vadd.f32 %v2589, %v2637
      %2639 = vdwg.mxu0
      %2640 = vmatpush.bf16.msra.mxu0 %v1225
      %2641 = vmatpush.bf16.msra.mxu0 %v1221
      %2642 = vmatpush.bf16.msra.mxu0 %v1217
      %2643 = vmatpush.bf16.msra.mxu0 %v1213
      %2644 = vmatpush.bf16.msra.mxu0 %v1209
      %2645 = vmatpush.bf16.msra.mxu0 %v1205
      %2646 = vmatpush.bf16.msra.mxu0 %v1201
      %2647 = vmatpush.bf16.msra.mxu0 %v1197
      %2648 = vmatmul.bf16.gmra.mxu0 %v344
      %v2649 = vpop.f32.mrf.mxu0
      %v2650 = vadd.f32 %v601, %v2649
      %v2651 = vpop.f32.mrf.mxu0
      %v2652 = vadd.f32 %v601, %v2651
      %2653 = vmatmul.bf16.gmra.mxu0 %v351
      %v2654 = vpop.f32.mrf.mxu0
      %v2655 = vadd.f32 %v601, %v2654
      %v2656 = vpop.f32.mrf.mxu0
      %v2657 = vadd.f32 %v601, %v2656
      %2658 = vmatmul.bf16.gmra.mxu0 %v358
      %v2659 = vpop.f32.mrf.mxu0
      %v2660 = vadd.f32 %v601, %v2659
      %v2661 = vpop.f32.mrf.mxu0
      %v2662 = vadd.f32 %v601, %v2661
      %2663 = vmatmul.bf16.gmra.mxu0 %v365
      %v2664 = vpop.f32.mrf.mxu0
      %v2665 = vadd.f32 %v601, %v2664
      %v2666 = vpop.f32.mrf.mxu0
      %v2667 = vadd.f32 %v601, %v2666
      %2668 = vmatmul.bf16.gmra.mxu0 %v372
      %v2669 = vpop.f32.mrf.mxu0
      %v2670 = vadd.f32 %v601, %v2669
      %v2671 = vpop.f32.mrf.mxu0
      %v2672 = vadd.f32 %v601, %v2671
      %2673 = vmatmul.bf16.gmra.mxu0 %v379
      %v2674 = vpop.f32.mrf.mxu0
      %v2675 = vadd.f32 %v601, %v2674
      %v2676 = vpop.f32.mrf.mxu0
      %v2677 = vadd.f32 %v601, %v2676
      %2678 = vmatmul.bf16.gmra.mxu0 %v386
      %v2679 = vpop.f32.mrf.mxu0
      %v2680 = vadd.f32 %v601, %v2679
      %v2681 = vpop.f32.mrf.mxu0
      %v2682 = vadd.f32 %v601, %v2681
      %2683 = vmatmul.bf16.gmra.mxu0 %v393
      %v2684 = vpop.f32.mrf.mxu0
      %v2685 = vadd.f32 %v601, %v2684
      %v2686 = vpop.f32.mrf.mxu0
      %v2687 = vadd.f32 %v601, %v2686
      %2688 = vdwg.mxu0
      %2689 = vmatpush.bf16.msra.mxu0 %v1257
      %2690 = vmatpush.bf16.msra.mxu0 %v1253
      %2691 = vmatpush.bf16.msra.mxu0 %v1249
      %2692 = vmatpush.bf16.msra.mxu0 %v1245
      %2693 = vmatpush.bf16.msra.mxu0 %v1241
      %2694 = vmatpush.bf16.msra.mxu0 %v1237
      %2695 = vmatpush.bf16.msra.mxu0 %v1233
      %2696 = vmatpush.bf16.msra.mxu0 %v1229
      %2697 = vmatmul.bf16.gmra.mxu0 %v345
      %v2698 = vpop.f32.mrf.mxu0
      %v2699 = vadd.f32 %v2650, %v2698
      %v2700 = vpop.f32.mrf.mxu0
      %v2701 = vadd.f32 %v2652, %v2700
      %2702 = vmatmul.bf16.gmra.mxu0 %v352
      %v2703 = vpop.f32.mrf.mxu0
      %v2704 = vadd.f32 %v2655, %v2703
      %v2705 = vpop.f32.mrf.mxu0
      %v2706 = vadd.f32 %v2657, %v2705
      %2707 = vmatmul.bf16.gmra.mxu0 %v359
      %v2708 = vpop.f32.mrf.mxu0
      %v2709 = vadd.f32 %v2660, %v2708
      %v2710 = vpop.f32.mrf.mxu0
      %v2711 = vadd.f32 %v2662, %v2710
      %2712 = vmatmul.bf16.gmra.mxu0 %v366
      %v2713 = vpop.f32.mrf.mxu0
      %v2714 = vadd.f32 %v2665, %v2713
      %v2715 = vpop.f32.mrf.mxu0
      %v2716 = vadd.f32 %v2667, %v2715
      %2717 = vmatmul.bf16.gmra.mxu0 %v373
      %v2718 = vpop.f32.mrf.mxu0
      %v2719 = vadd.f32 %v2670, %v2718
      %v2720 = vpop.f32.mrf.mxu0
      %v2721 = vadd.f32 %v2672, %v2720
      %2722 = vmatmul.bf16.gmra.mxu0 %v380
      %v2723 = vpop.f32.mrf.mxu0
      %v2724 = vadd.f32 %v2675, %v2723
      %v2725 = vpop.f32.mrf.mxu0
      %v2726 = vadd.f32 %v2677, %v2725
      %2727 = vmatmul.bf16.gmra.mxu0 %v387
      %v2728 = vpop.f32.mrf.mxu0
      %v2729 = vadd.f32 %v2680, %v2728
      %v2730 = vpop.f32.mrf.mxu0
      %v2731 = vadd.f32 %v2682, %v2730
      %2732 = vmatmul.bf16.gmra.mxu0 %v394
      %v2733 = vpop.f32.mrf.mxu0
      %v2734 = vadd.f32 %v2685, %v2733
      %v2735 = vpop.f32.mrf.mxu0
      %v2736 = vadd.f32 %v2687, %v2735
      %2737 = vdwg.mxu0
      %2738 = vmatpush.bf16.msra.mxu0 %v1289
      %2739 = vmatpush.bf16.msra.mxu0 %v1285
      %2740 = vmatpush.bf16.msra.mxu0 %v1281
      %2741 = vmatpush.bf16.msra.mxu0 %v1277
      %2742 = vmatpush.bf16.msra.mxu0 %v1273
      %2743 = vmatpush.bf16.msra.mxu0 %v1269
      %2744 = vmatpush.bf16.msra.mxu0 %v1265
      %2745 = vmatpush.bf16.msra.mxu0 %v1261
      %2746 = vmatmul.bf16.gmra.mxu0 %v346
      %v2747 = vpop.f32.mrf.mxu0
      %v2748 = vadd.f32 %v2699, %v2747
      %v2749 = vpop.f32.mrf.mxu0
      %v2750 = vadd.f32 %v2701, %v2749
      %2751 = vmatmul.bf16.gmra.mxu0 %v353
      %v2752 = vpop.f32.mrf.mxu0
      %v2753 = vadd.f32 %v2704, %v2752
      %v2754 = vpop.f32.mrf.mxu0
      %v2755 = vadd.f32 %v2706, %v2754
      %2756 = vmatmul.bf16.gmra.mxu0 %v360
      %v2757 = vpop.f32.mrf.mxu0
      %v2758 = vadd.f32 %v2709, %v2757
      %v2759 = vpop.f32.mrf.mxu0
      %v2760 = vadd.f32 %v2711, %v2759
      %2761 = vmatmul.bf16.gmra.mxu0 %v367
      %v2762 = vpop.f32.mrf.mxu0
      %v2763 = vadd.f32 %v2714, %v2762
      %v2764 = vpop.f32.mrf.mxu0
      %v2765 = vadd.f32 %v2716, %v2764
      %2766 = vmatmul.bf16.gmra.mxu0 %v374
      %v2767 = vpop.f32.mrf.mxu0
      %v2768 = vadd.f32 %v2719, %v2767
      %v2769 = vpop.f32.mrf.mxu0
      %v2770 = vadd.f32 %v2721, %v2769
      %2771 = vmatmul.bf16.gmra.mxu0 %v381
      %v2772 = vpop.f32.mrf.mxu0
      %v2773 = vadd.f32 %v2724, %v2772
      %v2774 = vpop.f32.mrf.mxu0
      %v2775 = vadd.f32 %v2726, %v2774
      %2776 = vmatmul.bf16.gmra.mxu0 %v388
      %v2777 = vpop.f32.mrf.mxu0
      %v2778 = vadd.f32 %v2729, %v2777
      %v2779 = vpop.f32.mrf.mxu0
      %v2780 = vadd.f32 %v2731, %v2779
      %2781 = vmatmul.bf16.gmra.mxu0 %v395
      %v2782 = vpop.f32.mrf.mxu0
      %v2783 = vadd.f32 %v2734, %v2782
      %v2784 = vpop.f32.mrf.mxu0
      %v2785 = vadd.f32 %v2736, %v2784
      %2786 = vdwg.mxu0
      %2787 = vmatpush.bf16.msra.mxu0 %v1321
      %2788 = vmatpush.bf16.msra.mxu0 %v1317
      %2789 = vmatpush.bf16.msra.mxu0 %v1313
      %2790 = vmatpush.bf16.msra.mxu0 %v1309
      %2791 = vmatpush.bf16.msra.mxu0 %v1305
      %2792 = vmatpush.bf16.msra.mxu0 %v1301
      %2793 = vmatpush.bf16.msra.mxu0 %v1297
      %2794 = vmatpush.bf16.msra.mxu0 %v1293
      %2795 = vmatmul.bf16.gmra.mxu0 %v347
      %v2796 = vpop.f32.mrf.mxu0
      %v2797 = vadd.f32 %v2748, %v2796
      %v2798 = vpop.f32.mrf.mxu0
      %v2799 = vadd.f32 %v2750, %v2798
      %2800 = vmatmul.bf16.gmra.mxu0 %v354
      %v2801 = vpop.f32.mrf.mxu0
      %v2802 = vadd.f32 %v2753, %v2801
      %v2803 = vpop.f32.mrf.mxu0
      %v2804 = vadd.f32 %v2755, %v2803
      %2805 = vmatmul.bf16.gmra.mxu0 %v361
      %v2806 = vpop.f32.mrf.mxu0
      %v2807 = vadd.f32 %v2758, %v2806
      %v2808 = vpop.f32.mrf.mxu0
      %v2809 = vadd.f32 %v2760, %v2808
      %2810 = vmatmul.bf16.gmra.mxu0 %v368
      %v2811 = vpop.f32.mrf.mxu0
      %v2812 = vadd.f32 %v2763, %v2811
      %v2813 = vpop.f32.mrf.mxu0
      %v2814 = vadd.f32 %v2765, %v2813
      %2815 = vmatmul.bf16.gmra.mxu0 %v375
      %v2816 = vpop.f32.mrf.mxu0
      %v2817 = vadd.f32 %v2768, %v2816
      %v2818 = vpop.f32.mrf.mxu0
      %v2819 = vadd.f32 %v2770, %v2818
      %2820 = vmatmul.bf16.gmra.mxu0 %v382
      %v2821 = vpop.f32.mrf.mxu0
      %v2822 = vadd.f32 %v2773, %v2821
      %v2823 = vpop.f32.mrf.mxu0
      %v2824 = vadd.f32 %v2775, %v2823
      %2825 = vmatmul.bf16.gmra.mxu0 %v389
      %v2826 = vpop.f32.mrf.mxu0
      %v2827 = vadd.f32 %v2778, %v2826
      %v2828 = vpop.f32.mrf.mxu0
      %v2829 = vadd.f32 %v2780, %v2828
      %2830 = vmatmul.bf16.gmra.mxu0 %v396
      %v2831 = vpop.f32.mrf.mxu0
      %v2832 = vadd.f32 %v2783, %v2831
      %v2833 = vpop.f32.mrf.mxu0
      %v2834 = vadd.f32 %v2785, %v2833
      %2835 = vdwg.mxu0
      %2836 = vmatpush.bf16.msra.mxu0 %v1353
      %2837 = vmatpush.bf16.msra.mxu0 %v1349
      %2838 = vmatpush.bf16.msra.mxu0 %v1345
      %2839 = vmatpush.bf16.msra.mxu0 %v1341
      %2840 = vmatpush.bf16.msra.mxu0 %v1337
      %2841 = vmatpush.bf16.msra.mxu0 %v1333
      %2842 = vmatpush.bf16.msra.mxu0 %v1329
      %2843 = vmatpush.bf16.msra.mxu0 %v1325
      %2844 = vmatmul.bf16.gmra.mxu0 %v348
      %v2845 = vpop.f32.mrf.mxu0
      %v2846 = vadd.f32 %v2797, %v2845
      %v2847 = vpop.f32.mrf.mxu0
      %v2848 = vadd.f32 %v2799, %v2847
      %2849 = vmatmul.bf16.gmra.mxu0 %v355
      %v2850 = vpop.f32.mrf.mxu0
      %v2851 = vadd.f32 %v2802, %v2850
      %v2852 = vpop.f32.mrf.mxu0
      %v2853 = vadd.f32 %v2804, %v2852
      %2854 = vmatmul.bf16.gmra.mxu0 %v362
      %v2855 = vpop.f32.mrf.mxu0
      %v2856 = vadd.f32 %v2807, %v2855
      %v2857 = vpop.f32.mrf.mxu0
      %v2858 = vadd.f32 %v2809, %v2857
      %2859 = vmatmul.bf16.gmra.mxu0 %v369
      %v2860 = vpop.f32.mrf.mxu0
      %v2861 = vadd.f32 %v2812, %v2860
      %v2862 = vpop.f32.mrf.mxu0
      %v2863 = vadd.f32 %v2814, %v2862
      %2864 = vmatmul.bf16.gmra.mxu0 %v376
      %v2865 = vpop.f32.mrf.mxu0
      %v2866 = vadd.f32 %v2817, %v2865
      %v2867 = vpop.f32.mrf.mxu0
      %v2868 = vadd.f32 %v2819, %v2867
      %2869 = vmatmul.bf16.gmra.mxu0 %v383
      %v2870 = vpop.f32.mrf.mxu0
      %v2871 = vadd.f32 %v2822, %v2870
      %v2872 = vpop.f32.mrf.mxu0
      %v2873 = vadd.f32 %v2824, %v2872
      %2874 = vmatmul.bf16.gmra.mxu0 %v390
      %v2875 = vpop.f32.mrf.mxu0
      %v2876 = vadd.f32 %v2827, %v2875
      %v2877 = vpop.f32.mrf.mxu0
      %v2878 = vadd.f32 %v2829, %v2877
      %2879 = vmatmul.bf16.gmra.mxu0 %v397
      %v2880 = vpop.f32.mrf.mxu0
      %v2881 = vadd.f32 %v2832, %v2880
      %v2882 = vpop.f32.mrf.mxu0
      %v2883 = vadd.f32 %v2834, %v2882
      %2884 = vdwg.mxu0
      %2885 = vmatpush.bf16.msra.mxu0 %v1385
      %2886 = vmatpush.bf16.msra.mxu0 %v1381
      %2887 = vmatpush.bf16.msra.mxu0 %v1377
      %2888 = vmatpush.bf16.msra.mxu0 %v1373
      %2889 = vmatpush.bf16.msra.mxu0 %v1369
      %2890 = vmatpush.bf16.msra.mxu0 %v1365
      %2891 = vmatpush.bf16.msra.mxu0 %v1361
      %2892 = vmatpush.bf16.msra.mxu0 %v1357
      %2893 = vmatmul.bf16.gmra.mxu0 %v349
      %v2894 = vpop.f32.mrf.mxu0
      %v2895 = vadd.f32 %v2846, %v2894
      %v2896 = vpop.f32.mrf.mxu0
      %v2897 = vadd.f32 %v2848, %v2896
      %2898 = vmatmul.bf16.gmra.mxu0 %v356
      %v2899 = vpop.f32.mrf.mxu0
      %v2900 = vadd.f32 %v2851, %v2899
      %v2901 = vpop.f32.mrf.mxu0
      %v2902 = vadd.f32 %v2853, %v2901
      %2903 = vmatmul.bf16.gmra.mxu0 %v363
      %v2904 = vpop.f32.mrf.mxu0
      %v2905 = vadd.f32 %v2856, %v2904
      %v2906 = vpop.f32.mrf.mxu0
      %v2907 = vadd.f32 %v2858, %v2906
      %2908 = vmatmul.bf16.gmra.mxu0 %v370
      %v2909 = vpop.f32.mrf.mxu0
      %v2910 = vadd.f32 %v2861, %v2909
      %v2911 = vpop.f32.mrf.mxu0
      %v2912 = vadd.f32 %v2863, %v2911
      %2913 = vmatmul.bf16.gmra.mxu0 %v377
      %v2914 = vpop.f32.mrf.mxu0
      %v2915 = vadd.f32 %v2866, %v2914
      %v2916 = vpop.f32.mrf.mxu0
      %v2917 = vadd.f32 %v2868, %v2916
      %2918 = vmatmul.bf16.gmra.mxu0 %v384
      %v2919 = vpop.f32.mrf.mxu0
      %v2920 = vadd.f32 %v2871, %v2919
      %v2921 = vpop.f32.mrf.mxu0
      %v2922 = vadd.f32 %v2873, %v2921
      %2923 = vmatmul.bf16.gmra.mxu0 %v391
      %v2924 = vpop.f32.mrf.mxu0
      %v2925 = vadd.f32 %v2876, %v2924
      %v2926 = vpop.f32.mrf.mxu0
      %v2927 = vadd.f32 %v2878, %v2926
      %2928 = vmatmul.bf16.gmra.mxu0 %v398
      %v2929 = vpop.f32.mrf.mxu0
      %v2930 = vadd.f32 %v2881, %v2929
      %v2931 = vpop.f32.mrf.mxu0
      %v2932 = vadd.f32 %v2883, %v2931
      %2933 = vdwg.mxu0
      %2934 = vmatpush.bf16.msra.mxu0 0
      %2935 = vmatpush.bf16.msra.mxu0 0
      %2936 = vmatpush.bf16.msra.mxu0 0
      %2937 = vmatpush.bf16.msra.mxu0 0
      %2938 = vmatpush.bf16.msra.mxu0 0
      %2939 = vmatpush.bf16.msra.mxu0 0
      %2940 = vmatpush.bf16.msra.mxu0 0
      %2941 = vmatpush.bf16.msra.mxu0 %v1389
      %2942 = vmatmul.bf16.gmra.mxu0 %v1588
      %v2943 = vpop.f32.mrf.mxu0
      %v2944 = vadd.f32 %v2895, %v2943
      %v2945 = vpop.f32.mrf.mxu0
      %v2946 = vadd.f32 %v2897, %v2945
      %2947 = vmatmul.bf16.gmra.mxu0 %v1591
      %v2948 = vpop.f32.mrf.mxu0
      %v2949 = vadd.f32 %v2900, %v2948
      %v2950 = vpop.f32.mrf.mxu0
      %v2951 = vadd.f32 %v2902, %v2950
      %2952 = vmatmul.bf16.gmra.mxu0 %v1594
      %v2953 = vpop.f32.mrf.mxu0
      %v2954 = vadd.f32 %v2905, %v2953
      %v2955 = vpop.f32.mrf.mxu0
      %v2956 = vadd.f32 %v2907, %v2955
      %2957 = vmatmul.bf16.gmra.mxu0 %v1597
      %v2958 = vpop.f32.mrf.mxu0
      %v2959 = vadd.f32 %v2910, %v2958
      %v2960 = vpop.f32.mrf.mxu0
      %v2961 = vadd.f32 %v2912, %v2960
      %2962 = vmatmul.bf16.gmra.mxu0 %v1600
      %v2963 = vpop.f32.mrf.mxu0
      %v2964 = vadd.f32 %v2915, %v2963
      %v2965 = vpop.f32.mrf.mxu0
      %v2966 = vadd.f32 %v2917, %v2965
      %2967 = vmatmul.bf16.gmra.mxu0 %v1603
      %v2968 = vpop.f32.mrf.mxu0
      %v2969 = vadd.f32 %v2920, %v2968
      %v2970 = vpop.f32.mrf.mxu0
      %v2971 = vadd.f32 %v2922, %v2970
      %2972 = vmatmul.bf16.gmra.mxu0 %v1606
      %v2973 = vpop.f32.mrf.mxu0
      %v2974 = vadd.f32 %v2925, %v2973
      %v2975 = vpop.f32.mrf.mxu0
      %v2976 = vadd.f32 %v2927, %v2975
      %2977 = vmatmul.bf16.gmra.mxu0 %v1609
      %v2978 = vpop.f32.mrf.mxu0
      %v2979 = vadd.f32 %v2930, %v2978
      %v2980 = vpop.f32.mrf.mxu0
      %v2981 = vadd.f32 %v2932, %v2980
      %2982 = vdwg.mxu0
      %v2983 = vmax.f32 %v1915, 0.0
      %v2984 = vmax.f32 %v2258, 0.0
      %v2985 = vmax.f32 %v2601, 0.0
      %v2986 = vmax.f32 %v2944, 0.0
      %v2987 = vmax.f32 %v1917, 0.0
      %v2988 = vmax.f32 %v2260, 0.0
      %v2989 = vmax.f32 %v2603, 0.0
      %v2990 = vmax.f32 %v2946, 0.0
      %v2991 = vmax.f32 %v1920, 0.0
      %v2992 = vmax.f32 %v2263, 0.0
      %v2993 = vmax.f32 %v2606, 0.0
      %v2994 = vmax.f32 %v2949, 0.0
      %v2995 = vmax.f32 %v1922, 0.0
      %v2996 = vmax.f32 %v2265, 0.0
      %v2997 = vmax.f32 %v2608, 0.0
      %v2998 = vmax.f32 %v2951, 0.0
      %v2999 = vmax.f32 %v1925, 0.0
      %v3000 = vmax.f32 %v2268, 0.0
      %v3001 = vmax.f32 %v2611, 0.0
      %v3002 = vmax.f32 %v2954, 0.0
      %v3003 = vmax.f32 %v1927, 0.0
      %v3004 = vmax.f32 %v2270, 0.0
      %v3005 = vmax.f32 %v2613, 0.0
      %v3006 = vmax.f32 %v2956, 0.0
      %v3007 = vmax.f32 %v1930, 0.0
      %v3008 = vmax.f32 %v2273, 0.0
      %v3009 = vmax.f32 %v2616, 0.0
      %v3010 = vmax.f32 %v2959, 0.0
      %v3011 = vmax.f32 %v1932, 0.0
      %v3012 = vmax.f32 %v2275, 0.0
      %v3013 = vmax.f32 %v2618, 0.0
      %v3014 = vmax.f32 %v2961, 0.0
      %v3015 = vmax.f32 %v1935, 0.0
      %v3016 = vmax.f32 %v2278, 0.0
      %v3017 = vmax.f32 %v2621, 0.0
      %v3018 = vmax.f32 %v2964, 0.0
      %v3019 = vmax.f32 %v1937, 0.0
      %v3020 = vmax.f32 %v2280, 0.0
      %v3021 = vmax.f32 %v2623, 0.0
      %v3022 = vmax.f32 %v2966, 0.0
      %v3023 = vmax.f32 %v1940, 0.0
      %v3024 = vmax.f32 %v2283, 0.0
      %v3025 = vmax.f32 %v2626, 0.0
      %v3026 = vmax.f32 %v2969, 0.0
      %v3027 = vmax.f32 %v1942, 0.0
      %v3028 = vmax.f32 %v2285, 0.0
      %v3029 = vmax.f32 %v2628, 0.0
      %v3030 = vmax.f32 %v2971, 0.0
      %v3031 = vmax.f32 %v1945, 0.0
      %v3032 = vmax.f32 %v2288, 0.0
      %v3033 = vmax.f32 %v2631, 0.0
      %v3034 = vmax.f32 %v2974, 0.0
      %v3035 = vmax.f32 %v1947, 0.0
      %v3036 = vmax.f32 %v2290, 0.0
      %v3037 = vmax.f32 %v2633, 0.0
      %v3038 = vmax.f32 %v2976, 0.0
      %v3039 = vmax.f32 %v1950, 0.0
      %v3040 = vmax.f32 %v2293, 0.0
      %v3041 = vmax.f32 %v2636, 0.0
      %v3042 = vmax.f32 %v2979, 0.0
      %v3043 = vmax.f32 %v1952, 0.0
      %v3044 = vmax.f32 %v2295, 0.0
      %v3045 = vmax.f32 %v2638, 0.0
      %v3046 = vmax.f32 %v2981, 0.0
      %v3047 = vpack.c.bf16 %v2987, %v2983
      %v3048 = vpack.c.bf16 %v2988, %v2984
      %v3049 = vpack.c.bf16 %v2989, %v2985
      %v3050 = vpack.c.bf16 %v2990, %v2986
      %v3051 = vpack.c.bf16 %v2995, %v2991
      %v3052 = vpack.c.bf16 %v2996, %v2992
      %v3053 = vpack.c.bf16 %v2997, %v2993
      %v3054 = vpack.c.bf16 %v2998, %v2994
      %v3055 = vpack.c.bf16 %v3003, %v2999
      %v3056 = vpack.c.bf16 %v3004, %v3000
      %v3057 = vpack.c.bf16 %v3005, %v3001
      %v3058 = vpack.c.bf16 %v3006, %v3002
      %v3059 = vpack.c.bf16 %v3011, %v3007
      %v3060 = vpack.c.bf16 %v3012, %v3008
      %v3061 = vpack.c.bf16 %v3013, %v3009
      %v3062 = vpack.c.bf16 %v3014, %v3010
      %v3063 = vpack.c.bf16 %v3019, %v3015
      %v3064 = vpack.c.bf16 %v3020, %v3016
      %v3065 = vpack.c.bf16 %v3021, %v3017
      %v3066 = vpack.c.bf16 %v3022, %v3018
      %v3067 = vpack.c.bf16 %v3027, %v3023
      %v3068 = vpack.c.bf16 %v3028, %v3024
      %v3069 = vpack.c.bf16 %v3029, %v3025
      %v3070 = vpack.c.bf16 %v3030, %v3026
      %v3071 = vpack.c.bf16 %v3035, %v3031
      %v3072 = vpack.c.bf16 %v3036, %v3032
      %v3073 = vpack.c.bf16 %v3037, %v3033
      %v3074 = vpack.c.bf16 %v3038, %v3034
      %v3075 = vpack.c.bf16 %v3043, %v3039
      %v3076 = vpack.c.bf16 %v3044, %v3040
      %v3077 = vpack.c.bf16 %v3045, %v3041
      %v3078 = vpack.c.bf16 %v3046, %v3042
      %v3079 = vld [vmem:[%s3] sm:$0xf]
      %v3080 = vld [vmem:[%s3 + $0x4] sm:$0xf]
      %v3081 = vld [vmem:[%s3 + $0x8] sm:$0xf]
      %v3082 = vld [vmem:[%s3 + $0xc] sm:$0xf]
      %v3083 = vld [vmem:[%s3 + $0x10] sm:$0xf]
      %v3084 = vld [vmem:[%s3 + $0x14] sm:$0xf]
      %v3085 = vld [vmem:[%s3 + $0x18] sm:$0xf]
      %v3086 = vld [vmem:[%s3 + $0x1c] sm:$0xf]
      %v3087 = vld [vmem:[%s3 + $0x20] sm:$0xf]
      %v3088 = vld [vmem:[%s3 + $0x24] sm:$0xf]
      %v3089 = vld [vmem:[%s3 + $0x28] sm:$0xf]
      %v3090 = vld [vmem:[%s3 + $0x2c] sm:$0xf]
      %v3091 = vld [vmem:[%s3 + $0x30] sm:$0xf]
      %v3092 = vld [vmem:[%s3 + $0x34] sm:$0xf]
      %v3093 = vld [vmem:[%s3 + $0x38] sm:$0xf]
      %v3094 = vld [vmem:[%s3 + $0x3c] sm:$0xf]
      %v3095 = vld [vmem:[%s3 + $0x40] sm:$0xf]
      %v3096 = vld [vmem:[%s3 + $0x44] sm:$0xf]
      %v3097 = vld [vmem:[%s3 + $0x48] sm:$0xf]
      %v3098 = vld [vmem:[%s3 + $0x4c] sm:$0xf]
      %v3099 = vld [vmem:[%s3 + $0x50] sm:$0xf]
      %v3100 = vld [vmem:[%s3 + $0x54] sm:$0xf]
      %v3101 = vld [vmem:[%s3 + $0x58] sm:$0xf]
      %v3102 = vld [vmem:[%s3 + $0x5c] sm:$0xf]
      %v3103 = vld [vmem:[%s3 + $0x60] sm:$0xf]
      %v3104 = vld [vmem:[%s3 + $0x64] sm:$0xf]
      %v3105 = vld [vmem:[%s3 + $0x68] sm:$0xf]
      %v3106 = vld [vmem:[%s3 + $0x6c] sm:$0xf]
      %v3107 = vld [vmem:[%s3 + $0x70] sm:$0xf]
      %v3108 = vld [vmem:[%s3 + $0x74] sm:$0xf]
      %v3109 = vld [vmem:[%s3 + $0x78] sm:$0xf]
      %v3110 = vld [vmem:[%s3 + $0x7c] sm:$0xf]
      %v3111 = vld [vmem:[%s3 + $0x80] sm:$0xf]
      %v3112 = vld [vmem:[%s3 + $0x84] sm:$0xf]
      %v3113 = vld [vmem:[%s3 + $0x88] sm:$0xf]
      %v3114 = vld [vmem:[%s3 + $0x8c] sm:$0xf]
      %v3115 = vld [vmem:[%s3 + $0x90] sm:$0xf]
      %v3116 = vld [vmem:[%s3 + $0x94] sm:$0xf]
      %v3117 = vld [vmem:[%s3 + $0x98] sm:$0xf]
      %v3118 = vld [vmem:[%s3 + $0x9c] sm:$0xf]
      %v3119 = vld [vmem:[%s3 + $0xa0] sm:$0xf]
      %v3120 = vld [vmem:[%s3 + $0xa4] sm:$0xf]
      %v3121 = vld [vmem:[%s3 + $0xa8] sm:$0xf]
      %v3122 = vld [vmem:[%s3 + $0xac] sm:$0xf]
      %v3123 = vld [vmem:[%s3 + $0xb0] sm:$0xf]
      %v3124 = vld [vmem:[%s3 + $0xb4] sm:$0xf]
      %v3125 = vld [vmem:[%s3 + $0xb8] sm:$0xf]
      %v3126 = vld [vmem:[%s3 + $0xbc] sm:$0xf]
      %v3127 = vld [vmem:[%s3 + $0xc0] sm:$0xf]
      %v3128 = vld [vmem:[%s3 + $0xc4] sm:$0xf]
      %v3129 = vld [vmem:[%s3 + $0xc8] sm:$0xf]
      %v3130 = vld [vmem:[%s3 + $0xcc] sm:$0xf]
      %v3131 = vld [vmem:[%s3 + $0xd0] sm:$0xf]
      %v3132 = vld [vmem:[%s3 + $0xd4] sm:$0xf]
      %v3133 = vld [vmem:[%s3 + $0xd8] sm:$0xf]
      %v3134 = vld [vmem:[%s3 + $0xdc] sm:$0xf]
      %v3135 = vld [vmem:[%s3 + $0xe0] sm:$0xf]
      %v3136 = vld [vmem:[%s3 + $0xe4] sm:$0xf]
      %v3137 = vld [vmem:[%s3 + $0xe8] sm:$0xf]
      %v3138 = vld [vmem:[%s3 + $0xec] sm:$0xf]
      %v3139 = vld [vmem:[%s3 + $0xf0] sm:$0xf]
      %v3140 = vld [vmem:[%s3 + $0xf4] sm:$0xf]
      %v3141 = vld [vmem:[%s3 + $0xf8] sm:$0xf]
      %v3142 = vld [vmem:[%s3 + $0xfc] sm:$0xf]
      %v3143 = vld [vmem:[%s4] sm:$0x1]
      %v3145 = vperm.slane %v3143, 0
      %v3211 = vunpack.c.l.b16 %v3079
      %v3212 = vunpack.c.l.b16 %v3080
      %v3213 = vunpack.c.l.b16 %v3081
      %v3214 = vunpack.c.l.b16 %v3082
      %v3215 = vunpack.c.l.b16 %v3083
      %v3216 = vunpack.c.l.b16 %v3084
      %v3217 = vunpack.c.l.b16 %v3085
      %v3218 = vunpack.c.l.b16 %v3086
      %v3219 = vunpack.c.l.b16 %v3087
      %v3220 = vunpack.c.l.b16 %v3088
      %v3221 = vunpack.c.l.b16 %v3089
      %v3222 = vunpack.c.l.b16 %v3090
      %v3223 = vunpack.c.l.b16 %v3091
      %v3224 = vunpack.c.l.b16 %v3092
      %v3225 = vunpack.c.l.b16 %v3093
      %v3226 = vunpack.c.l.b16 %v3094
      %v3227 = vunpack.c.l.b16 %v3095
      %v3228 = vunpack.c.l.b16 %v3096
      %v3229 = vunpack.c.l.b16 %v3097
      %v3230 = vunpack.c.l.b16 %v3098
      %v3231 = vunpack.c.l.b16 %v3099
      %v3232 = vunpack.c.l.b16 %v3100
      %v3233 = vunpack.c.l.b16 %v3101
      %v3234 = vunpack.c.l.b16 %v3102
      %v3235 = vunpack.c.l.b16 %v3103
      %v3236 = vunpack.c.l.b16 %v3104
      %v3237 = vunpack.c.l.b16 %v3105
      %v3238 = vunpack.c.l.b16 %v3106
      %v3239 = vunpack.c.l.b16 %v3107
      %v3240 = vunpack.c.l.b16 %v3108
      %v3241 = vunpack.c.l.b16 %v3109
      %v3242 = vunpack.c.l.b16 %v3110
      %v3243 = vunpack.c.l.b16 %v3111
      %v3244 = vunpack.c.l.b16 %v3112
      %v3245 = vunpack.c.l.b16 %v3113
      %v3246 = vunpack.c.l.b16 %v3114
      %v3247 = vunpack.c.l.b16 %v3115
      %v3248 = vunpack.c.l.b16 %v3116
      %v3249 = vunpack.c.l.b16 %v3117
      %v3250 = vunpack.c.l.b16 %v3118
      %v3251 = vunpack.c.l.b16 %v3119
      %v3252 = vunpack.c.l.b16 %v3120
      %v3253 = vunpack.c.l.b16 %v3121
      %v3254 = vunpack.c.l.b16 %v3122
      %v3255 = vunpack.c.l.b16 %v3123
      %v3256 = vunpack.c.l.b16 %v3124
      %v3257 = vunpack.c.l.b16 %v3125
      %v3258 = vunpack.c.l.b16 %v3126
      %v3259 = vunpack.c.l.b16 %v3127
      %v3260 = vunpack.c.l.b16 %v3128
      %v3261 = vunpack.c.l.b16 %v3129
      %v3262 = vunpack.c.l.b16 %v3130
      %v3263 = vunpack.c.l.b16 %v3131
      %v3264 = vunpack.c.l.b16 %v3132
      %v3265 = vunpack.c.l.b16 %v3133
      %v3266 = vunpack.c.l.b16 %v3134
      %v3267 = vunpack.c.l.b16 %v3135
      %v3268 = vunpack.c.l.b16 %v3136
      %v3269 = vunpack.c.l.b16 %v3137
      %v3270 = vunpack.c.l.b16 %v3138
      %v3271 = vunpack.c.l.b16 %v3139
      %v3272 = vunpack.c.l.b16 %v3140
      %v3273 = vunpack.c.l.b16 %v3141
      %v3274 = vunpack.c.l.b16 %v3142
      %v3275 = vpack.c.b16 %v3212, %v3211
      %v3276 = vpack.c.b16 %v3214, %v3213
      %v3277 = vpack.c.b16 %v3216, %v3215
      %v3278 = vpack.c.b16 %v3218, %v3217
      %v3279 = vpack.c.b16 %v3220, %v3219
      %v3280 = vpack.c.b16 %v3222, %v3221
      %v3281 = vpack.c.b16 %v3224, %v3223
      %v3282 = vpack.c.b16 %v3226, %v3225
      %v3283 = vpack.c.b16 %v3228, %v3227
      %v3284 = vpack.c.b16 %v3230, %v3229
      %v3285 = vpack.c.b16 %v3232, %v3231
      %v3286 = vpack.c.b16 %v3234, %v3233
      %v3287 = vpack.c.b16 %v3236, %v3235
      %v3288 = vpack.c.b16 %v3238, %v3237
      %v3289 = vpack.c.b16 %v3240, %v3239
      %v3290 = vpack.c.b16 %v3242, %v3241
      %v3291 = vpack.c.b16 %v3244, %v3243
      %v3292 = vpack.c.b16 %v3246, %v3245
      %v3293 = vpack.c.b16 %v3248, %v3247
      %v3294 = vpack.c.b16 %v3250, %v3249
      %v3295 = vpack.c.b16 %v3252, %v3251
      %v3296 = vpack.c.b16 %v3254, %v3253
      %v3297 = vpack.c.b16 %v3256, %v3255
      %v3298 = vpack.c.b16 %v3258, %v3257
      %v3299 = vpack.c.b16 %v3260, %v3259
      %v3300 = vpack.c.b16 %v3262, %v3261
      %v3301 = vpack.c.b16 %v3264, %v3263
      %v3302 = vpack.c.b16 %v3266, %v3265
      %v3303 = vpack.c.b16 %v3268, %v3267
      %v3304 = vpack.c.b16 %v3270, %v3269
      %v3305 = vpack.c.b16 %v3272, %v3271
      %v3306 = vpack.c.b16 %v3274, %v3273
      %3339 = vmatpush.bf16.msra.mxu0 %v3282
      %3340 = vmatpush.bf16.msra.mxu0 %v3281
      %3341 = vmatpush.bf16.msra.mxu0 %v3280
      %3342 = vmatpush.bf16.msra.mxu0 %v3279
      %3343 = vmatpush.bf16.msra.mxu0 %v3278
      %3344 = vmatpush.bf16.msra.mxu0 %v3277
      %3345 = vmatpush.bf16.msra.mxu0 %v3276
      %3346 = vmatpush.bf16.msra.mxu0 %v3275
      %3347 = vmatmul.bf16.gmra.mxu0 %v3047
      %v3348 = vpop.f32.mrf.mxu0
      %v3349 = vadd.f32 %v3145, %v3348
      %v3350 = vpop.f32.mrf.mxu0
      %v3351 = vadd.f32 %v3145, %v3350
      %3352 = vmatmul.bf16.gmra.mxu0 %v3051
      %v3353 = vpop.f32.mrf.mxu0
      %v3354 = vadd.f32 %v3145, %v3353
      %v3355 = vpop.f32.mrf.mxu0
      %v3356 = vadd.f32 %v3145, %v3355
      %3357 = vmatmul.bf16.gmra.mxu0 %v3055
      %v3358 = vpop.f32.mrf.mxu0
      %v3359 = vadd.f32 %v3145, %v3358
      %v3360 = vpop.f32.mrf.mxu0
      %v3361 = vadd.f32 %v3145, %v3360
      %3362 = vmatmul.bf16.gmra.mxu0 %v3059
      %v3363 = vpop.f32.mrf.mxu0
      %v3364 = vadd.f32 %v3145, %v3363
      %v3365 = vpop.f32.mrf.mxu0
      %v3366 = vadd.f32 %v3145, %v3365
      %3367 = vmatmul.bf16.gmra.mxu0 %v3063
      %v3368 = vpop.f32.mrf.mxu0
      %v3369 = vadd.f32 %v3145, %v3368
      %v3370 = vpop.f32.mrf.mxu0
      %v3371 = vadd.f32 %v3145, %v3370
      %3372 = vmatmul.bf16.gmra.mxu0 %v3067
      %v3373 = vpop.f32.mrf.mxu0
      %v3374 = vadd.f32 %v3145, %v3373
      %v3375 = vpop.f32.mrf.mxu0
      %v3376 = vadd.f32 %v3145, %v3375
      %3377 = vmatmul.bf16.gmra.mxu0 %v3071
      %v3378 = vpop.f32.mrf.mxu0
      %v3379 = vadd.f32 %v3145, %v3378
      %v3380 = vpop.f32.mrf.mxu0
      %v3381 = vadd.f32 %v3145, %v3380
      %3382 = vmatmul.bf16.gmra.mxu0 %v3075
      %v3383 = vpop.f32.mrf.mxu0
      %v3384 = vadd.f32 %v3145, %v3383
      %v3385 = vpop.f32.mrf.mxu0
      %v3386 = vadd.f32 %v3145, %v3385
      %3387 = vdwg.mxu0
      %3388 = vmatpush.bf16.msra.mxu0 %v3290
      %3389 = vmatpush.bf16.msra.mxu0 %v3289
      %3390 = vmatpush.bf16.msra.mxu0 %v3288
      %3391 = vmatpush.bf16.msra.mxu0 %v3287
      %3392 = vmatpush.bf16.msra.mxu0 %v3286
      %3393 = vmatpush.bf16.msra.mxu0 %v3285
      %3394 = vmatpush.bf16.msra.mxu0 %v3284
      %3395 = vmatpush.bf16.msra.mxu0 %v3283
      %3396 = vmatmul.bf16.gmra.mxu0 %v3048
      %v3397 = vpop.f32.mrf.mxu0
      %v3398 = vadd.f32 %v3349, %v3397
      %v3399 = vpop.f32.mrf.mxu0
      %v3400 = vadd.f32 %v3351, %v3399
      %3401 = vmatmul.bf16.gmra.mxu0 %v3052
      %v3402 = vpop.f32.mrf.mxu0
      %v3403 = vadd.f32 %v3354, %v3402
      %v3404 = vpop.f32.mrf.mxu0
      %v3405 = vadd.f32 %v3356, %v3404
      %3406 = vmatmul.bf16.gmra.mxu0 %v3056
      %v3407 = vpop.f32.mrf.mxu0
      %v3408 = vadd.f32 %v3359, %v3407
      %v3409 = vpop.f32.mrf.mxu0
      %v3410 = vadd.f32 %v3361, %v3409
      %3411 = vmatmul.bf16.gmra.mxu0 %v3060
      %v3412 = vpop.f32.mrf.mxu0
      %v3413 = vadd.f32 %v3364, %v3412
      %v3414 = vpop.f32.mrf.mxu0
      %v3415 = vadd.f32 %v3366, %v3414
      %3416 = vmatmul.bf16.gmra.mxu0 %v3064
      %v3417 = vpop.f32.mrf.mxu0
      %v3418 = vadd.f32 %v3369, %v3417
      %v3419 = vpop.f32.mrf.mxu0
      %v3420 = vadd.f32 %v3371, %v3419
      %3421 = vmatmul.bf16.gmra.mxu0 %v3068
      %v3422 = vpop.f32.mrf.mxu0
      %v3423 = vadd.f32 %v3374, %v3422
      %v3424 = vpop.f32.mrf.mxu0
      %v3425 = vadd.f32 %v3376, %v3424
      %3426 = vmatmul.bf16.gmra.mxu0 %v3072
      %v3427 = vpop.f32.mrf.mxu0
      %v3428 = vadd.f32 %v3379, %v3427
      %v3429 = vpop.f32.mrf.mxu0
      %v3430 = vadd.f32 %v3381, %v3429
      %3431 = vmatmul.bf16.gmra.mxu0 %v3076
      %v3432 = vpop.f32.mrf.mxu0
      %v3433 = vadd.f32 %v3384, %v3432
      %v3434 = vpop.f32.mrf.mxu0
      %v3435 = vadd.f32 %v3386, %v3434
      %3436 = vdwg.mxu0
      %3437 = vmatpush.bf16.msra.mxu0 %v3298
      %3438 = vmatpush.bf16.msra.mxu0 %v3297
      %3439 = vmatpush.bf16.msra.mxu0 %v3296
      %3440 = vmatpush.bf16.msra.mxu0 %v3295
      %3441 = vmatpush.bf16.msra.mxu0 %v3294
      %3442 = vmatpush.bf16.msra.mxu0 %v3293
      %3443 = vmatpush.bf16.msra.mxu0 %v3292
      %3444 = vmatpush.bf16.msra.mxu0 %v3291
      %3445 = vmatmul.bf16.gmra.mxu0 %v3049
      %v3446 = vpop.f32.mrf.mxu0
      %v3447 = vadd.f32 %v3398, %v3446
      %v3448 = vpop.f32.mrf.mxu0
      %v3449 = vadd.f32 %v3400, %v3448
      %3450 = vmatmul.bf16.gmra.mxu0 %v3053
      %v3451 = vpop.f32.mrf.mxu0
      %v3452 = vadd.f32 %v3403, %v3451
      %v3453 = vpop.f32.mrf.mxu0
      %v3454 = vadd.f32 %v3405, %v3453
      %3455 = vmatmul.bf16.gmra.mxu0 %v3057
      %v3456 = vpop.f32.mrf.mxu0
      %v3457 = vadd.f32 %v3408, %v3456
      %v3458 = vpop.f32.mrf.mxu0
      %v3459 = vadd.f32 %v3410, %v3458
      %3460 = vmatmul.bf16.gmra.mxu0 %v3061
      %v3461 = vpop.f32.mrf.mxu0
      %v3462 = vadd.f32 %v3413, %v3461
      %v3463 = vpop.f32.mrf.mxu0
      %v3464 = vadd.f32 %v3415, %v3463
      %3465 = vmatmul.bf16.gmra.mxu0 %v3065
      %v3466 = vpop.f32.mrf.mxu0
      %v3467 = vadd.f32 %v3418, %v3466
      %v3468 = vpop.f32.mrf.mxu0
      %v3469 = vadd.f32 %v3420, %v3468
      %3470 = vmatmul.bf16.gmra.mxu0 %v3069
      %v3471 = vpop.f32.mrf.mxu0
      %v3472 = vadd.f32 %v3423, %v3471
      %v3473 = vpop.f32.mrf.mxu0
      %v3474 = vadd.f32 %v3425, %v3473
      %3475 = vmatmul.bf16.gmra.mxu0 %v3073
      %v3476 = vpop.f32.mrf.mxu0
      %v3477 = vadd.f32 %v3428, %v3476
      %v3478 = vpop.f32.mrf.mxu0
      %v3479 = vadd.f32 %v3430, %v3478
      %3480 = vmatmul.bf16.gmra.mxu0 %v3077
      %v3481 = vpop.f32.mrf.mxu0
      %v3482 = vadd.f32 %v3433, %v3481
      %v3483 = vpop.f32.mrf.mxu0
      %v3484 = vadd.f32 %v3435, %v3483
      %3485 = vdwg.mxu0
      %3486 = vmatpush.bf16.msra.mxu0 %v3306
      %3487 = vmatpush.bf16.msra.mxu0 %v3305
      %3488 = vmatpush.bf16.msra.mxu0 %v3304
      %3489 = vmatpush.bf16.msra.mxu0 %v3303
      %3490 = vmatpush.bf16.msra.mxu0 %v3302
      %3491 = vmatpush.bf16.msra.mxu0 %v3301
      %3492 = vmatpush.bf16.msra.mxu0 %v3300
      %3493 = vmatpush.bf16.msra.mxu0 %v3299
      %3494 = vmatmul.bf16.gmra.mxu0 %v3050
      %v3495 = vpop.f32.mrf.mxu0
      %v3496 = vadd.f32 %v3447, %v3495
      %v3497 = vpop.f32.mrf.mxu0
      %v3498 = vadd.f32 %v3449, %v3497
      %3499 = vmatmul.bf16.gmra.mxu0 %v3054
      %v3500 = vpop.f32.mrf.mxu0
      %v3501 = vadd.f32 %v3452, %v3500
      %v3502 = vpop.f32.mrf.mxu0
      %v3503 = vadd.f32 %v3454, %v3502
      %3504 = vmatmul.bf16.gmra.mxu0 %v3058
      %v3505 = vpop.f32.mrf.mxu0
      %v3506 = vadd.f32 %v3457, %v3505
      %v3507 = vpop.f32.mrf.mxu0
      %v3508 = vadd.f32 %v3459, %v3507
      %3509 = vmatmul.bf16.gmra.mxu0 %v3062
      %v3510 = vpop.f32.mrf.mxu0
      %v3511 = vadd.f32 %v3462, %v3510
      %v3512 = vpop.f32.mrf.mxu0
      %v3513 = vadd.f32 %v3464, %v3512
      %3514 = vmatmul.bf16.gmra.mxu0 %v3066
      %v3515 = vpop.f32.mrf.mxu0
      %v3516 = vadd.f32 %v3467, %v3515
      %v3517 = vpop.f32.mrf.mxu0
      %v3518 = vadd.f32 %v3469, %v3517
      %3519 = vmatmul.bf16.gmra.mxu0 %v3070
      %v3520 = vpop.f32.mrf.mxu0
      %v3521 = vadd.f32 %v3472, %v3520
      %v3522 = vpop.f32.mrf.mxu0
      %v3523 = vadd.f32 %v3474, %v3522
      %3524 = vmatmul.bf16.gmra.mxu0 %v3074
      %v3525 = vpop.f32.mrf.mxu0
      %v3526 = vadd.f32 %v3477, %v3525
      %v3527 = vpop.f32.mrf.mxu0
      %v3528 = vadd.f32 %v3479, %v3527
      %3529 = vmatmul.bf16.gmra.mxu0 %v3078
      %v3530 = vpop.f32.mrf.mxu0
      %v3531 = vadd.f32 %v3482, %v3530
      %v3532 = vpop.f32.mrf.mxu0
      %v3533 = vadd.f32 %v3484, %v3532
      %3534 = vdwg.mxu0
      %3535 = vst [vmem:[%s229] sm:$0xff] %v3496
      %3536 = vst [vmem:[%s229 + $0x8] sm:$0xff] %v3498
      %3537 = vst [vmem:[%s229 + $0x10] sm:$0xff] %v3501
      %3538 = vst [vmem:[%s229 + $0x18] sm:$0xff] %v3503
      %3539 = vst [vmem:[%s229 + $0x20] sm:$0xff] %v3506
      %3540 = vst [vmem:[%s229 + $0x28] sm:$0xff] %v3508
      %3541 = vst [vmem:[%s229 + $0x30] sm:$0xff] %v3511
      %3542 = vst [vmem:[%s229 + $0x38] sm:$0xff] %v3513
      %3543 = vst [vmem:[%s229 + $0x40] sm:$0xff] %v3516
      %3544 = vst [vmem:[%s229 + $0x48] sm:$0xff] %v3518
      %3545 = vst [vmem:[%s229 + $0x50] sm:$0xff] %v3521
      %3546 = vst [vmem:[%s229 + $0x58] sm:$0xff] %v3523
      %3547 = vst [vmem:[%s229 + $0x60] sm:$0xff] %v3526
      %3548 = vst [vmem:[%s229 + $0x68] sm:$0xff] %v3528
      %3549 = vst [vmem:[%s229 + $0x70] sm:$0xff] %v3531
      %3550 = vst [vmem:[%s229 + $0x78] sm:$0xff] %v3533
      %s3551 = smul.u32 16, %s16
      %p3552 = scmp.lt.s32.totalorder %s3551, 31
      %s3553 = scalar_select %p3552, %s3551, 31
      %s3554 = smul.addr %s3553, 8
      %s3555 = scalar_lea.vmem %s5, %s3554
      // Predicated region
      $region41: #{encoder_forward.1} parent=39 // pred_check
        %p3556 = pneg %p144
      $region42: #{encoder_forward.1} parent=39 // pred_check_branch
        %3558 = sbr.rel (%p3556) target = $region44
      $region43: #{encoder_forward.1} parent=39 // pred_region
        %s3559 = smul.u32 16, %s16
      $region44: #{encoder_forward.1} parent=39 // pred_fallthru
        _
    $region40: #{encoder_forward.1} parent=5 // pred_fallthru
      _
    %p3560 = scmp.le.s32.totalorder 2, %s11
    // Predicated region
    $region45: #{encoder_forward.1} parent=5 // pred_check
      %p3561 = pneg %p3560
    $region46: #{encoder_forward.1} parent=5 // pred_check_branch
      %3563 = sbr.rel (%p3561) target = $region48
    $region47: #{encoder_forward.1} parent=5 // pred_region
      %s3564 = ssub.s32 %s11, 2
      // Predicated region
      $region49: #{encoder_forward.1} parent=47 // pred_check
        %p3565 = pneg %p150
      $region50: #{encoder_forward.1} parent=47 // pred_check_branch
        %3567 = sbr.rel (%p3565) target = $region52
      $region51: #{encoder_forward.1} parent=47 // pred_region
        %s3568 = smul.u32 16, %s17
        %p3569 = scmp.lt.s32.totalorder %s3568, 31
        %s3570 = scalar_select %p3569, %s3568, 31
        %s3571 = smul.addr %s3570, 8
        %s3572 = scalar_lea.vmem %s5, %s3571
      $region52: #{encoder_forward.1} parent=47 // pred_fallthru
        _
    $region48: #{encoder_forward.1} parent=5 // pred_fallthru
      _
  $region6: #{encoder_forward.1} parent=0 // loop_footer
    %s15 = sadd.s32 1, %s11
  $region7: #{encoder_forward.1} parent=0 // loop_footer_branch
    %10 = sbr.rel target = $region3
  $region8: #{encoder_forward.1} parent=0 // loop_exit
    _

</llo_original>
